<compile_context>
chip_gen: v6e
topology: v6e:2x2x1
jax: 0.10.0
libtpu: 0.0.40
codegen_flags: <defaults>
</compile_context>

<pallas_src>
import jax
import jax.numpy as jnp
from jax.experimental import pallas as pl
from jax.experimental.pallas import tpu as pltpu


def _layernorm(x, gamma, beta, eps=1e-5):
    # Fused single-pass LayerNorm over the last axis (f32 math, PyTorch eps).
    inv_d = 1.0 / x.shape[-1]
    s = jnp.sum(x, axis=-1, keepdims=True)
    ss = jnp.sum(x * x, axis=-1, keepdims=True)
    mean = s * inv_d
    var = jnp.maximum(ss * inv_d - mean * mean, 0.0)
    return (x - mean) * jax.lax.rsqrt(var + eps) * gamma + beta


def text_encoder_kernel(x_ref,
                        w1_ref, b1_ref, g1_ref, be1_ref,   # aspect_projection
                        w2_ref, b2_ref,                    # mlp fc1
                        w3_ref, b3_ref, g2_ref, be2_ref,   # mlp fc2 + LN
                        o_ref):
    # In-kernel bf16 cast of the f32 input tile (free VPU filler under the MXU).
    x = x_ref[...].astype(jnp.bfloat16)

    # --- aspect_projection: Linear -> LayerNorm -> Dropout(eval = identity) ---
    h = jnp.dot(x, w1_ref[...], preferred_element_type=jnp.float32)
    h = _layernorm(h + b1_ref[...], g1_ref[...], be1_ref[...])

    # --- mlp_projection: Linear -> ReLU -> Linear -> LayerNorm -> Dropout(id) ---
    m = jnp.dot(h.astype(jnp.bfloat16), w2_ref[...],
                preferred_element_type=jnp.float32)
    m = jnp.maximum(m + b2_ref[...], 0.0)    # bias + ReLU in f32 on the VPU

    y = jnp.dot(m.astype(jnp.bfloat16), w3_ref[...],
                preferred_element_type=jnp.float32)
    y = _layernorm(y + b3_ref[...], g2_ref[...], be2_ref[...])

    o_ref[...] = y.astype(o_ref.dtype)


def _round_up(x, m):
    return pl.cdiv(x, m) * m


def _vmem_cap_bytes():
    # Physical VMEM per core, minus ~20% headroom for compiler scratch /
    # semaphores; never ask for more than ~100 MiB even on 128 MiB parts.
    try:
        phys = int(pltpu.get_tpu_info().vmem_capacity_bytes)
    except Exception:
        phys = 64 << 20   # conservative fallback (v7x-sized)
    return int(min(phys - phys // 5, 100 << 20))


def _vmem_budget_bytes(bb, H, D, D2):
    # Explicit accounting (no blanket multiplier):
    weights = (H * D + D * D2 + D2 * D) * 2      # bf16, single-buffered residents
    small = (6 * D + D2) * 4 * 2                 # biases / gamma / beta (f32)
    x_tiles = bb * H * 4 * 2                     # f32 input tile, double-buffered
    o_tiles = bb * D * 4 * 2                     # f32 output tile, double-buffered
    inter = bb * (2 * D + D2) * 4                # h, m, y f32 intermediates
    recast = bb * (H + D + D2) * 2               # bf16 copies fed to the MXU
    total = weights + small + x_tiles + o_tiles + inter + recast
    return int(total * 1.25) + (2 << 20)         # modest headroom + fixed scratch


def _pick_block_b(B, H, D, D2, cap):
    # Biggest MXU-shaped batch tile whose budget fits the per-generation VMEM
    # cap, while keeping >= 2 grid steps (v7x's two TCs split the batch grid).
    for bb in (512, 256, 128):
        if B >= 2 * bb and _vmem_budget_bytes(bb, H, D, D2) <= cap:
            return bb
    return int(_round_up(min(B, 128), 16))   # small batch: one (padded) tile


def _call_kernel(x, params, bb, Bp, H, D, D2, vmem_limit, single_buffer_consts):
    # Resident operands: full-array blocks with a constant index map — the
    # pipeline fetches each weight HBM->VMEM once per core and keeps it
    # resident.  Buffered(1) drops the (never-used) second pipeline buffer.
    if single_buffer_consts:
        const = lambda shape: pl.BlockSpec(shape, lambda i: (0, 0),
                                           pipeline_mode=pl.Buffered(1))
    else:
        const = lambda shape: pl.BlockSpec(shape, lambda i: (0, 0))

    flops = 2 * Bp * (H * D + D * D2 + D2 * D)
    bytes_accessed = (Bp * H * 4 + Bp * D * 4
                      + (H * D + D * D2 + D2 * D) * 2
                      + (6 * D + D2) * 4)

    return pl.pallas_call(
        text_encoder_kernel,
        out_shape=jax.ShapeDtypeStruct((Bp, D), jnp.float32),
        grid_spec=pltpu.PrefetchScalarGridSpec(
            num_scalar_prefetch=0,
            grid=(Bp // bb,),
            in_specs=[
                pl.BlockSpec((bb, H), lambda i: (i, 0)),   # x tile over batch
                const((H, D)),  const((1, D)),  const((1, D)),  const((1, D)),
                const((D, D2)), const((1, D2)),
                const((D2, D)), const((1, D)),  const((1, D)),  const((1, D)),
            ],
            out_specs=pl.BlockSpec((bb, D), lambda i: (i, 0)),
        ),
        compiler_params=pltpu.CompilerParams(
            dimension_semantics=("parallel",),
            vmem_limit_bytes=vmem_limit),
        cost_estimate=pl.CostEstimate(
            flops=flops,
            transcendentals=2 * Bp * D,
            bytes_accessed=bytes_accessed),
    )(x,
      params["w1"], params["b1"], params["g1"], params["be1"],
      params["w2"], params["b2"],
      params["w3"], params["b3"], params["g2"], params["be2"])


def text_encoder_forward(text_features, params, *, block_b=None):
    """text_features: (B, H) pooled BERT output. Returns (B, D) f32 embeddings."""
    B, H = text_features.shape
    D = params["w1"].shape[1]
    D2 = params["w2"].shape[1]

    cap = _vmem_cap_bytes()
    bb = block_b if block_b is not None else _pick_block_b(B, H, D, D2, cap)
    Bp = int(_round_up(B, bb))

    # f32 goes straight into the kernel (bf16 cast happens in-kernel); pad
    # the batch only when it isn't a multiple of the tile.
    x = text_features.astype(jnp.float32)
    if Bp != B:
        x = jnp.pad(x, ((0, Bp - B), (0, 0)))

    vmem_limit = int(min(max(_vmem_budget_bytes(bb, H, D, D2), 32 << 20), cap))

    try:
        out = _call_kernel(x, params, bb, Bp, H, D, D2, vmem_limit, True)
    except Exception:
        # Fallback for builds that reject single-buffered (Buffered(1)) specs.
        out = _call_kernel(x, params, bb, Bp, H, D, D2, vmem_limit, False)

    return out[:B]


def init_params(key, hidden_dim, output_dim):
    """Deterministic synthetic parameters (shapes match the nn.Module).
    Weights are stored bf16 (MXU operands); biases / LayerNorm params are f32."""
    ks = jax.random.split(key, 3)

    def lin(k, fan_in, fan_out):
        bound = 1.0 / jnp.sqrt(fan_in)
        kw, kb = jax.random.split(k)
        w = jax.random.uniform(kw, (fan_in, fan_out), jnp.float32, -bound, bound)
        b = jax.random.uniform(kb, (1, fan_out), jnp.float32, -bound, bound)
        return w.astype(jnp.bfloat16), b

    w1, b1 = lin(ks[0], hidden_dim, output_dim)
    w2, b2 = lin(ks[1], output_dim, output_dim * 2)
    w3, b3 = lin(ks[2], output_dim * 2, output_dim)
    ones = lambda n: jnp.ones((1, n), jnp.float32)
    zeros = lambda n: jnp.zeros((1, n), jnp.float32)
    return {
        "w1": w1, "b1": b1, "g1": ones(output_dim), "be1": zeros(output_dim),
        "w2": w2, "b2": b2,
        "w3": w3, "b3": b3, "g2": ones(output_dim), "be2": zeros(output_dim),
    }


def _reference(x, p):
    # Pure-JAX reference of the same math (mirrors the kernel's bf16 operand
    # quantization; f32 accumulation via HIGHEST-precision dots).
    hi = jax.lax.Precision.HIGHEST
    f32 = jnp.float32
    xb = x.astype(jnp.bfloat16).astype(f32)
    h = jnp.dot(xb, p["w1"].astype(f32), precision=hi) + p["b1"]
    h = _layernorm(h, p["g1"], p["be1"])
    hb = h.astype(jnp.bfloat16).astype(f32)
    m = jnp.maximum(jnp.dot(hb, p["w2"].astype(f32), precision=hi) + p["b2"], 0.0)
    mb = m.astype(jnp.bfloat16).astype(f32)
    y = jnp.dot(mb, p["w3"].astype(f32), precision=hi) + p["b3"]
    return _layernorm(y, p["g2"], p["be2"])


if __name__ == "__main__":
    # Small stand-ins for hidden_dim=768, output_dim=1024.
    HIDDEN, OUT = 128, 256

    key = jax.random.PRNGKey(0)
    k_feat, k_param = jax.random.split(key)
    params = init_params(k_param, HIDDEN, OUT)

    # TODO(synk): BERT tokenizer + Bio_ClinicalBERT transformer backbone are an
    # external pretrained model; `text_features` stands in for the pooled BERT
    # output (B, hidden_dim).
    for B in (256, 8):   # 256 -> 2 MXU-shaped grid steps; 8 -> padded single step
        x = jax.random.normal(jax.random.fold_in(k_feat, B), (B, HIDDEN),
                              dtype=jnp.float32)
        out = jax.block_until_ready(text_encoder_forward(x, params))
        ref = _reference(x, params)
        assert out.shape == (B, OUT)
        err = float(jnp.max(jnp.abs(out - ref)))
        assert jnp.allclose(out, ref, atol=1e-2, rtol=1e-2), f"max_abs_err={err}"

    print("KERNEL_OK")
</pallas_src>

<mosaic_0001>
module attributes {stable_mosaic.version = 11 : i64} {
  func.func @text_encoder_kernel(%arg0: i32, %arg1: memref<128x128xf32, #tpu.memory_space<vmem>>, %arg2: memref<128x256xbf16, #tpu.memory_space<vmem>>, %arg3: memref<1x256xf32, #tpu.memory_space<vmem>>, %arg4: memref<1x256xf32, #tpu.memory_space<vmem>>, %arg5: memref<1x256xf32, #tpu.memory_space<vmem>>, %arg6: memref<256x512xbf16, #tpu.memory_space<vmem>>, %arg7: memref<1x512xf32, #tpu.memory_space<vmem>>, %arg8: memref<512x256xbf16, #tpu.memory_space<vmem>>, %arg9: memref<1x256xf32, #tpu.memory_space<vmem>>, %arg10: memref<1x256xf32, #tpu.memory_space<vmem>>, %arg11: memref<1x256xf32, #tpu.memory_space<vmem>>, %arg12: memref<128x256xf32, #tpu.memory_space<vmem>>) attributes {dimension_semantics = [#tpu.dimension_semantics<parallel>], iteration_bounds = array<i64: 2>, scalar_prefetch = 0 : i64, scratch_operands = 0 : i64, tpu.core_type = #tpu.core_type<tc>, window_params = [{transform_indices = @transform_0, window_bounds = array<i64: 128, 128>}, {pipeline_mode = #tpu.pipeline_mode<synchronous>, transform_indices = @transform_1, window_bounds = array<i64: 128, 256>}, {pipeline_mode = #tpu.pipeline_mode<synchronous>, transform_indices = @transform_2, window_bounds = array<i64: 1, 256>}, {pipeline_mode = #tpu.pipeline_mode<synchronous>, transform_indices = @transform_3, window_bounds = array<i64: 1, 256>}, {pipeline_mode = #tpu.pipeline_mode<synchronous>, transform_indices = @transform_4, window_bounds = array<i64: 1, 256>}, {pipeline_mode = #tpu.pipeline_mode<synchronous>, transform_indices = @transform_5, window_bounds = array<i64: 256, 512>}, {pipeline_mode = #tpu.pipeline_mode<synchronous>, transform_indices = @transform_6, window_bounds = array<i64: 1, 512>}, {pipeline_mode = #tpu.pipeline_mode<synchronous>, transform_indices = @transform_7, window_bounds = array<i64: 512, 256>}, {pipeline_mode = #tpu.pipeline_mode<synchronous>, transform_indices = @transform_8, window_bounds = array<i64: 1, 256>}, {pipeline_mode = #tpu.pipeline_mode<synchronous>, transform_indices = @transform_9, window_bounds = array<i64: 1, 256>}, {pipeline_mode = #tpu.pipeline_mode<synchronous>, transform_indices = @transform_10, window_bounds = array<i64: 1, 256>}, {transform_indices = @transform_11, window_bounds = array<i64: 128, 256>}]} {
    %c0 = arith.constant 0 : index
    %c0_0 = arith.constant 0 : index
    %0 = vector.load %arg1[%c0, %c0_0] : memref<128x128xf32, #tpu.memory_space<vmem>>, vector<128x128xf32>
    %1 = arith.truncf %0 : vector<128x128xf32> to vector<128x128xbf16>
    %c0_1 = arith.constant 0 : index
    %c0_2 = arith.constant 0 : index
    %2 = vector.load %arg2[%c0_1, %c0_2] : memref<128x256xbf16, #tpu.memory_space<vmem>>, vector<128x256xbf16>
    %cst = arith.constant dense<0.000000e+00> : vector<128x256xf32>
    %3 = tpu.matmul %1, %2, %cst {dimension_numbers = #tpu.dot_dimension_numbers<[1], [0], [0], [1], [0, 0, 1, 1], [], []>} : vector<128x128xbf16>, vector<128x256xbf16>, vector<128x256xf32> -> vector<128x256xf32>
    %c0_3 = arith.constant 0 : index
    %c0_4 = arith.constant 0 : index
    %4 = vector.load %arg3[%c0_3, %c0_4] : memref<1x256xf32, #tpu.memory_space<vmem>>, vector<1x256xf32>
    %5 = vector.broadcast %4 : vector<1x256xf32> to vector<128x256xf32>
    %6 = arith.addf %3, %5 : vector<128x256xf32>
    %c0_5 = arith.constant 0 : index
    %c0_6 = arith.constant 0 : index
    %7 = vector.load %arg4[%c0_5, %c0_6] : memref<1x256xf32, #tpu.memory_space<vmem>>, vector<1x256xf32>
    %c0_7 = arith.constant 0 : index
    %c0_8 = arith.constant 0 : index
    %8 = vector.load %arg5[%c0_7, %c0_8] : memref<1x256xf32, #tpu.memory_space<vmem>>, vector<1x256xf32>
    %cst_9 = arith.constant dense<0.000000e+00> : vector<128xf32>
    %9 = vector.multi_reduction <add>, %6, %cst_9 [1] : vector<128x256xf32> to vector<128xf32>
    %10 = vector.shape_cast %9 : vector<128xf32> to vector<128x1xf32>
    %11 = arith.mulf %6, %6 : vector<128x256xf32>
    %cst_10 = arith.constant dense<0.000000e+00> : vector<128xf32>
    %12 = vector.multi_reduction <add>, %11, %cst_10 [1] : vector<128x256xf32> to vector<128xf32>
    %13 = vector.shape_cast %12 : vector<128xf32> to vector<128x1xf32>
    %cst_11 = arith.constant 3.906250e-03 : f32
    %14 = vector.broadcast %cst_11 : f32 to vector<128x1xf32>
    %15 = arith.mulf %10, %14 : vector<128x1xf32>
    %cst_12 = arith.constant 3.906250e-03 : f32
    %16 = vector.broadcast %cst_12 : f32 to vector<128x1xf32>
    %17 = arith.mulf %13, %16 : vector<128x1xf32>
    %18 = arith.mulf %15, %15 : vector<128x1xf32>
    %19 = arith.subf %17, %18 : vector<128x1xf32>
    %cst_13 = arith.constant 0.000000e+00 : f32
    %20 = vector.broadcast %cst_13 : f32 to vector<128x1xf32>
    %21 = arith.maximumf %19, %20 : vector<128x1xf32>
    %22 = vector.broadcast %15 : vector<128x1xf32> to vector<128x256xf32>
    %23 = arith.subf %6, %22 : vector<128x256xf32>
    %cst_14 = arith.constant 9.99999974E-6 : f32
    %24 = vector.broadcast %cst_14 : f32 to vector<128x1xf32>
    %25 = arith.addf %21, %24 : vector<128x1xf32>
    %26 = math.rsqrt %25 : vector<128x1xf32>
    %27 = vector.broadcast %26 : vector<128x1xf32> to vector<128x256xf32>
    %28 = arith.mulf %23, %27 : vector<128x256xf32>
    %29 = vector.broadcast %7 : vector<1x256xf32> to vector<128x256xf32>
    %30 = arith.mulf %28, %29 : vector<128x256xf32>
    %31 = vector.broadcast %8 : vector<1x256xf32> to vector<128x256xf32>
    %32 = arith.addf %30, %31 : vector<128x256xf32>
    %33 = arith.truncf %32 : vector<128x256xf32> to vector<128x256xbf16>
    %c0_15 = arith.constant 0 : index
    %c0_16 = arith.constant 0 : index
    %34 = vector.load %arg6[%c0_15, %c0_16] : memref<256x512xbf16, #tpu.memory_space<vmem>>, vector<256x512xbf16>
    %cst_17 = arith.constant dense<0.000000e+00> : vector<128x512xf32>
    %35 = tpu.matmul %33, %34, %cst_17 {dimension_numbers = #tpu.dot_dimension_numbers<[1], [0], [0], [1], [0, 0, 1, 1], [], []>} : vector<128x256xbf16>, vector<256x512xbf16>, vector<128x512xf32> -> vector<128x512xf32>
    %c0_18 = arith.constant 0 : index
    %c0_19 = arith.constant 0 : index
    %36 = vector.load %arg7[%c0_18, %c0_19] : memref<1x512xf32, #tpu.memory_space<vmem>>, vector<1x512xf32>
    %37 = vector.broadcast %36 : vector<1x512xf32> to vector<128x512xf32>
    %38 = arith.addf %35, %37 : vector<128x512xf32>
    %cst_20 = arith.constant 0.000000e+00 : f32
    %39 = vector.broadcast %cst_20 : f32 to vector<128x512xf32>
    %40 = arith.maximumf %38, %39 : vector<128x512xf32>
    %41 = arith.truncf %40 : vector<128x512xf32> to vector<128x512xbf16>
    %c0_21 = arith.constant 0 : index
    %c0_22 = arith.constant 0 : index
    %42 = vector.load %arg8[%c0_21, %c0_22] : memref<512x256xbf16, #tpu.memory_space<vmem>>, vector<512x256xbf16>
    %cst_23 = arith.constant dense<0.000000e+00> : vector<128x256xf32>
    %43 = tpu.matmul %41, %42, %cst_23 {dimension_numbers = #tpu.dot_dimension_numbers<[1], [0], [0], [1], [0, 0, 1, 1], [], []>} : vector<128x512xbf16>, vector<512x256xbf16>, vector<128x256xf32> -> vector<128x256xf32>
    %c0_24 = arith.constant 0 : index
    %c0_25 = arith.constant 0 : index
    %44 = vector.load %arg9[%c0_24, %c0_25] : memref<1x256xf32, #tpu.memory_space<vmem>>, vector<1x256xf32>
    %45 = vector.broadcast %44 : vector<1x256xf32> to vector<128x256xf32>
    %46 = arith.addf %43, %45 : vector<128x256xf32>
    %c0_26 = arith.constant 0 : index
    %c0_27 = arith.constant 0 : index
    %47 = vector.load %arg10[%c0_26, %c0_27] : memref<1x256xf32, #tpu.memory_space<vmem>>, vector<1x256xf32>
    %c0_28 = arith.constant 0 : index
    %c0_29 = arith.constant 0 : index
    %48 = vector.load %arg11[%c0_28, %c0_29] : memref<1x256xf32, #tpu.memory_space<vmem>>, vector<1x256xf32>
    %cst_30 = arith.constant dense<0.000000e+00> : vector<128xf32>
    %49 = vector.multi_reduction <add>, %46, %cst_30 [1] : vector<128x256xf32> to vector<128xf32>
    %50 = vector.shape_cast %49 : vector<128xf32> to vector<128x1xf32>
    %51 = arith.mulf %46, %46 : vector<128x256xf32>
    %cst_31 = arith.constant dense<0.000000e+00> : vector<128xf32>
    %52 = vector.multi_reduction <add>, %51, %cst_31 [1] : vector<128x256xf32> to vector<128xf32>
    %53 = vector.shape_cast %52 : vector<128xf32> to vector<128x1xf32>
    %cst_32 = arith.constant 3.906250e-03 : f32
    %54 = vector.broadcast %cst_32 : f32 to vector<128x1xf32>
    %55 = arith.mulf %50, %54 : vector<128x1xf32>
    %cst_33 = arith.constant 3.906250e-03 : f32
    %56 = vector.broadcast %cst_33 : f32 to vector<128x1xf32>
    %57 = arith.mulf %53, %56 : vector<128x1xf32>
    %58 = arith.mulf %55, %55 : vector<128x1xf32>
    %59 = arith.subf %57, %58 : vector<128x1xf32>
    %cst_34 = arith.constant 0.000000e+00 : f32
    %60 = vector.broadcast %cst_34 : f32 to vector<128x1xf32>
    %61 = arith.maximumf %59, %60 : vector<128x1xf32>
    %62 = vector.broadcast %55 : vector<128x1xf32> to vector<128x256xf32>
    %63 = arith.subf %46, %62 : vector<128x256xf32>
    %cst_35 = arith.constant 9.99999974E-6 : f32
    %64 = vector.broadcast %cst_35 : f32 to vector<128x1xf32>
    %65 = arith.addf %61, %64 : vector<128x1xf32>
    %66 = math.rsqrt %65 : vector<128x1xf32>
    %67 = vector.broadcast %66 : vector<128x1xf32> to vector<128x256xf32>
    %68 = arith.mulf %63, %67 : vector<128x256xf32>
    %69 = vector.broadcast %47 : vector<1x256xf32> to vector<128x256xf32>
    %70 = arith.mulf %68, %69 : vector<128x256xf32>
    %71 = vector.broadcast %48 : vector<1x256xf32> to vector<128x256xf32>
    %72 = arith.addf %70, %71 : vector<128x256xf32>
    %c0_36 = arith.constant 0 : index
    %c0_37 = arith.constant 0 : index
    %73 = vector.load %arg12[%c0_36, %c0_37] : memref<128x256xf32, #tpu.memory_space<vmem>>, vector<128x256xf32>
    tpu.vector_store %arg12[%c0_36, %c0_37], %72 {strides = array<i32>} : memref<128x256xf32, #tpu.memory_space<vmem>>, vector<128x256xf32>,
    return
  }
  func.func @transform_0(%arg0: i32) -> (i32, i32) {
    %c0_i32 = arith.constant 0 : i32
    %c0_i32_0 = arith.constant 0 : i32
    return %arg0, %c0_i32 : i32, i32
  }
  func.func @transform_1(%arg0: i32) -> (i32, i32) {
    %c0_i32 = arith.constant 0 : i32
    %c0_i32_0 = arith.constant 0 : i32
    %c0_i32_1 = arith.constant 0 : i32
    return %c0_i32, %c0_i32_0 : i32, i32
  }
  func.func @transform_2(%arg0: i32) -> (i32, i32) {
    %c0_i32 = arith.constant 0 : i32
    %c0_i32_0 = arith.constant 0 : i32
    %c0_i32_1 = arith.constant 0 : i32
    return %c0_i32, %c0_i32_0 : i32, i32
  }
  func.func @transform_3(%arg0: i32) -> (i32, i32) {
    %c0_i32 = arith.constant 0 : i32
    %c0_i32_0 = arith.constant 0 : i32
    %c0_i32_1 = arith.constant 0 : i32
    return %c0_i32, %c0_i32_0 : i32, i32
  }
  func.func @transform_4(%arg0: i32) -> (i32, i32) {
    %c0_i32 = arith.constant 0 : i32
    %c0_i32_0 = arith.constant 0 : i32
    %c0_i32_1 = arith.constant 0 : i32
    return %c0_i32, %c0_i32_0 : i32, i32
  }
  func.func @transform_5(%arg0: i32) -> (i32, i32) {
    %c0_i32 = arith.constant 0 : i32
    %c0_i32_0 = arith.constant 0 : i32
    %c0_i32_1 = arith.constant 0 : i32
    return %c0_i32, %c0_i32_0 : i32, i32
  }
  func.func @transform_6(%arg0: i32) -> (i32, i32) {
    %c0_i32 = arith.constant 0 : i32
    %c0_i32_0 = arith.constant 0 : i32
    %c0_i32_1 = arith.constant 0 : i32
    return %c0_i32, %c0_i32_0 : i32, i32
  }
  func.func @transform_7(%arg0: i32) -> (i32, i32) {
    %c0_i32 = arith.constant 0 : i32
    %c0_i32_0 = arith.constant 0 : i32
    %c0_i32_1 = arith.constant 0 : i32
    return %c0_i32, %c0_i32_0 : i32, i32
  }
  func.func @transform_8(%arg0: i32) -> (i32, i32) {
    %c0_i32 = arith.constant 0 : i32
    %c0_i32_0 = arith.constant 0 : i32
    %c0_i32_1 = arith.constant 0 : i32
    return %c0_i32, %c0_i32_0 : i32, i32
  }
  func.func @transform_9(%arg0: i32) -> (i32, i32) {
    %c0_i32 = arith.constant 0 : i32
    %c0_i32_0 = arith.constant 0 : i32
    %c0_i32_1 = arith.constant 0 : i32
    return %c0_i32, %c0_i32_0 : i32, i32
  }
  func.func @transform_10(%arg0: i32) -> (i32, i32) {
    %c0_i32 = arith.constant 0 : i32
    %c0_i32_0 = arith.constant 0 : i32
    %c0_i32_1 = arith.constant 0 : i32
    return %c0_i32, %c0_i32_0 : i32, i32
  }
  func.func @transform_11(%arg0: i32) -> (i32, i32) {
    %c0_i32 = arith.constant 0 : i32
    %c0_i32_0 = arith.constant 0 : i32
    return %arg0, %c0_i32 : i32, i32
  }
}

module attributes {stable_mosaic.version = 11 : i64} {
  func.func @text_encoder_kernel(%arg0: i32, %arg1: memref<128x128xf32, #tpu.memory_space<vmem>>, %arg2: memref<128x256xbf16, #tpu.memory_space<vmem>>, %arg3: memref<1x256xf32, #tpu.memory_space<vmem>>, %arg4: memref<1x256xf32, #tpu.memory_space<vmem>>, %arg5: memref<1x256xf32, #tpu.memory_space<vmem>>, %arg6: memref<256x512xbf16, #tpu.memory_space<vmem>>, %arg7: memref<1x512xf32, #tpu.memory_space<vmem>>, %arg8: memref<512x256xbf16, #tpu.memory_space<vmem>>, %arg9: memref<1x256xf32, #tpu.memory_space<vmem>>, %arg10: memref<1x256xf32, #tpu.memory_space<vmem>>, %arg11: memref<1x256xf32, #tpu.memory_space<vmem>>, %arg12: memref<128x256xf32, #tpu.memory_space<vmem>>) attributes {dimension_semantics = [#tpu.dimension_semantics<parallel>], iteration_bounds = array<i64: 2>, scalar_prefetch = 0 : i64, scratch_operands = 0 : i64, tpu.core_type = #tpu.core_type<tc>, window_params = [{transform_indices = @transform_0, window_bounds = array<i64: 128, 128>}, {pipeline_mode = #tpu.pipeline_mode<synchronous>, transform_indices = @transform_1, window_bounds = array<i64: 128, 256>}, {pipeline_mode = #tpu.pipeline_mode<synchronous>, transform_indices = @transform_2, window_bounds = array<i64: 1, 256>}, {pipeline_mode = #tpu.pipeline_mode<synchronous>, transform_indices = @transform_3, window_bounds = array<i64: 1, 256>}, {pipeline_mode = #tpu.pipeline_mode<synchronous>, transform_indices = @transform_4, window_bounds = array<i64: 1, 256>}, {pipeline_mode = #tpu.pipeline_mode<synchronous>, transform_indices = @transform_5, window_bounds = array<i64: 256, 512>}, {pipeline_mode = #tpu.pipeline_mode<synchronous>, transform_indices = @transform_6, window_bounds = array<i64: 1, 512>}, {pipeline_mode = #tpu.pipeline_mode<synchronous>, transform_indices = @transform_7, window_bounds = array<i64: 512, 256>}, {pipeline_mode = #tpu.pipeline_mode<synchronous>, transform_indices = @transform_8, window_bounds = array<i64: 1, 256>}, {pipeline_mode = #tpu.pipeline_mode<synchronous>, transform_indices = @transform_9, window_bounds = array<i64: 1, 256>}, {pipeline_mode = #tpu.pipeline_mode<synchronous>, transform_indices = @transform_10, window_bounds = array<i64: 1, 256>}, {transform_indices = @transform_11, window_bounds = array<i64: 128, 256>}]} {
    %c0 = arith.constant 0 : index
    %c0_0 = arith.constant 0 : index
    %0 = vector.load %arg1[%c0, %c0_0] : memref<128x128xf32, #tpu.memory_space<vmem>>, vector<128x128xf32>
    %1 = arith.truncf %0 : vector<128x128xf32> to vector<128x128xbf16>
    %c0_1 = arith.constant 0 : index
    %c0_2 = arith.constant 0 : index
    %2 = vector.load %arg2[%c0_1, %c0_2] : memref<128x256xbf16, #tpu.memory_space<vmem>>, vector<128x256xbf16>
    %cst = arith.constant dense<0.000000e+00> : vector<128x256xf32>
    %3 = tpu.matmul %1, %2, %cst {dimension_numbers = #tpu.dot_dimension_numbers<[1], [0], [0], [1], [0, 0, 1, 1], [], []>} : vector<128x128xbf16>, vector<128x256xbf16>, vector<128x256xf32> -> vector<128x256xf32>
    %c0_3 = arith.constant 0 : index
    %c0_4 = arith.constant 0 : index
    %4 = vector.load %arg3[%c0_3, %c0_4] : memref<1x256xf32, #tpu.memory_space<vmem>>, vector<1x256xf32>
    %5 = vector.broadcast %4 : vector<1x256xf32> to vector<128x256xf32>
    %6 = arith.addf %3, %5 : vector<128x256xf32>
    %c0_5 = arith.constant 0 : index
    %c0_6 = arith.constant 0 : index
    %7 = vector.load %arg4[%c0_5, %c0_6] : memref<1x256xf32, #tpu.memory_space<vmem>>, vector<1x256xf32>
    %c0_7 = arith.constant 0 : index
    %c0_8 = arith.constant 0 : index
    %8 = vector.load %arg5[%c0_7, %c0_8] : memref<1x256xf32, #tpu.memory_space<vmem>>, vector<1x256xf32>
    %cst_9 = arith.constant dense<0.000000e+00> : vector<128xf32>
    %9 = vector.multi_reduction <add>, %6, %cst_9 [1] : vector<128x256xf32> to vector<128xf32>
    %10 = vector.shape_cast %9 : vector<128xf32> to vector<128x1xf32>
    %11 = arith.mulf %6, %6 : vector<128x256xf32>
    %cst_10 = arith.constant dense<0.000000e+00> : vector<128xf32>
    %12 = vector.multi_reduction <add>, %11, %cst_10 [1] : vector<128x256xf32> to vector<128xf32>
    %13 = vector.shape_cast %12 : vector<128xf32> to vector<128x1xf32>
    %cst_11 = arith.constant 3.906250e-03 : f32
    %14 = vector.broadcast %cst_11 : f32 to vector<128x1xf32>
    %15 = arith.mulf %10, %14 : vector<128x1xf32>
    %cst_12 = arith.constant 3.906250e-03 : f32
    %16 = vector.broadcast %cst_12 : f32 to vector<128x1xf32>
    %17 = arith.mulf %13, %16 : vector<128x1xf32>
    %18 = arith.mulf %15, %15 : vector<128x1xf32>
    %19 = arith.subf %17, %18 : vector<128x1xf32>
    %cst_13 = arith.constant 0.000000e+00 : f32
    %20 = vector.broadcast %cst_13 : f32 to vector<128x1xf32>
    %21 = arith.maximumf %19, %20 : vector<128x1xf32>
    %22 = vector.broadcast %15 : vector<128x1xf32> to vector<128x256xf32>
    %23 = arith.subf %6, %22 : vector<128x256xf32>
    %cst_14 = arith.constant 9.99999974E-6 : f32
    %24 = vector.broadcast %cst_14 : f32 to vector<128x1xf32>
    %25 = arith.addf %21, %24 : vector<128x1xf32>
    %26 = math.rsqrt %25 : vector<128x1xf32>
    %27 = vector.broadcast %26 : vector<128x1xf32> to vector<128x256xf32>
    %28 = arith.mulf %23, %27 : vector<128x256xf32>
    %29 = vector.broadcast %7 : vector<1x256xf32> to vector<128x256xf32>
    %30 = arith.mulf %28, %29 : vector<128x256xf32>
    %31 = vector.broadcast %8 : vector<1x256xf32> to vector<128x256xf32>
    %32 = arith.addf %30, %31 : vector<128x256xf32>
    %33 = arith.truncf %32 : vector<128x256xf32> to vector<128x256xbf16>
    %c0_15 = arith.constant 0 : index
    %c0_16 = arith.constant 0 : index
    %34 = vector.load %arg6[%c0_15, %c0_16] : memref<256x512xbf16, #tpu.memory_space<vmem>>, vector<256x512xbf16>
    %cst_17 = arith.constant dense<0.000000e+00> : vector<128x512xf32>
    %35 = tpu.matmul %33, %34, %cst_17 {dimension_numbers = #tpu.dot_dimension_numbers<[1], [0], [0], [1], [0, 0, 1, 1], [], []>} : vector<128x256xbf16>, vector<256x512xbf16>, vector<128x512xf32> -> vector<128x512xf32>
    %c0_18 = arith.constant 0 : index
    %c0_19 = arith.constant 0 : index
    %36 = vector.load %arg7[%c0_18, %c0_19] : memref<1x512xf32, #tpu.memory_space<vmem>>, vector<1x512xf32>
    %37 = vector.broadcast %36 : vector<1x512xf32> to vector<128x512xf32>
    %38 = arith.addf %35, %37 : vector<128x512xf32>
    %cst_20 = arith.constant 0.000000e+00 : f32
    %39 = vector.broadcast %cst_20 : f32 to vector<128x512xf32>
    %40 = arith.maximumf %38, %39 : vector<128x512xf32>
    %41 = arith.truncf %40 : vector<128x512xf32> to vector<128x512xbf16>
    %c0_21 = arith.constant 0 : index
    %c0_22 = arith.constant 0 : index
    %42 = vector.load %arg8[%c0_21, %c0_22] : memref<512x256xbf16, #tpu.memory_space<vmem>>, vector<512x256xbf16>
    %cst_23 = arith.constant dense<0.000000e+00> : vector<128x256xf32>
    %43 = tpu.matmul %41, %42, %cst_23 {dimension_numbers = #tpu.dot_dimension_numbers<[1], [0], [0], [1], [0, 0, 1, 1], [], []>} : vector<128x512xbf16>, vector<512x256xbf16>, vector<128x256xf32> -> vector<128x256xf32>
    %c0_24 = arith.constant 0 : index
    %c0_25 = arith.constant 0 : index
    %44 = vector.load %arg9[%c0_24, %c0_25] : memref<1x256xf32, #tpu.memory_space<vmem>>, vector<1x256xf32>
    %45 = vector.broadcast %44 : vector<1x256xf32> to vector<128x256xf32>
    %46 = arith.addf %43, %45 : vector<128x256xf32>
    %c0_26 = arith.constant 0 : index
    %c0_27 = arith.constant 0 : index
    %47 = vector.load %arg10[%c0_26, %c0_27] : memref<1x256xf32, #tpu.memory_space<vmem>>, vector<1x256xf32>
    %c0_28 = arith.constant 0 : index
    %c0_29 = arith.constant 0 : index
    %48 = vector.load %arg11[%c0_28, %c0_29] : memref<1x256xf32, #tpu.memory_space<vmem>>, vector<1x256xf32>
    %cst_30 = arith.constant dense<0.000000e+00> : vector<128xf32>
    %49 = vector.multi_reduction <add>, %46, %cst_30 [1] : vector<128x256xf32> to vector<128xf32>
    %50 = vector.shape_cast %49 : vector<128xf32> to vector<128x1xf32>
    %51 = arith.mulf %46, %46 : vector<128x256xf32>
    %cst_31 = arith.constant dense<0.000000e+00> : vector<128xf32>
    %52 = vector.multi_reduction <add>, %51, %cst_31 [1] : vector<128x256xf32> to vector<128xf32>
    %53 = vector.shape_cast %52 : vector<128xf32> to vector<128x1xf32>
    %cst_32 = arith.constant 3.906250e-03 : f32
    %54 = vector.broadcast %cst_32 : f32 to vector<128x1xf32>
    %55 = arith.mulf %50, %54 : vector<128x1xf32>
    %cst_33 = arith.constant 3.906250e-03 : f32
    %56 = vector.broadcast %cst_33 : f32 to vector<128x1xf32>
    %57 = arith.mulf %53, %56 : vector<128x1xf32>
    %58 = arith.mulf %55, %55 : vector<128x1xf32>
    %59 = arith.subf %57, %58 : vector<128x1xf32>
    %cst_34 = arith.constant 0.000000e+00 : f32
    %60 = vector.broadcast %cst_34 : f32 to vector<128x1xf32>
    %61 = arith.maximumf %59, %60 : vector<128x1xf32>
    %62 = vector.broadcast %55 : vector<128x1xf32> to vector<128x256xf32>
    %63 = arith.subf %46, %62 : vector<128x256xf32>
    %cst_35 = arith.constant 9.99999974E-6 : f32
    %64 = vector.broadcast %cst_35 : f32 to vector<128x1xf32>
    %65 = arith.addf %61, %64 : vector<128x1xf32>
    %66 = math.rsqrt %65 : vector<128x1xf32>
    %67 = vector.broadcast %66 : vector<128x1xf32> to vector<128x256xf32>
    %68 = arith.mulf %63, %67 : vector<128x256xf32>
    %69 = vector.broadcast %47 : vector<1x256xf32> to vector<128x256xf32>
    %70 = arith.mulf %68, %69 : vector<128x256xf32>
    %71 = vector.broadcast %48 : vector<1x256xf32> to vector<128x256xf32>
    %72 = arith.addf %70, %71 : vector<128x256xf32>
    %c0_36 = arith.constant 0 : index
    %c0_37 = arith.constant 0 : index
    %73 = vector.load %arg12[%c0_36, %c0_37] : memref<128x256xf32, #tpu.memory_space<vmem>>, vector<128x256xf32>
    tpu.vector_store %arg12[%c0_36, %c0_37], %72 {strides = array<i32>} : memref<128x256xf32, #tpu.memory_space<vmem>>, vector<128x256xf32>,
    return
  }
  func.func @transform_0(%arg0: i32) -> (i32, i32) {
    %c0_i32 = arith.constant 0 : i32
    %c0_i32_0 = arith.constant 0 : i32
    return %arg0, %c0_i32 : i32, i32
  }
  func.func @transform_1(%arg0: i32) -> (i32, i32) {
    %c0_i32 = arith.constant 0 : i32
    %c0_i32_0 = arith.constant 0 : i32
    %c0_i32_1 = arith.constant 0 : i32
    return %c0_i32, %c0_i32_0 : i32, i32
  }
  func.func @transform_2(%arg0: i32) -> (i32, i32) {
    %c0_i32 = arith.constant 0 : i32
    %c0_i32_0 = arith.constant 0 : i32
    %c0_i32_1 = arith.constant 0 : i32
    return %c0_i32, %c0_i32_0 : i32, i32
  }
  func.func @transform_3(%arg0: i32) -> (i32, i32) {
    %c0_i32 = arith.constant 0 : i32
    %c0_i32_0 = arith.constant 0 : i32
    %c0_i32_1 = arith.constant 0 : i32
    return %c0_i32, %c0_i32_0 : i32, i32
  }
  func.func @transform_4(%arg0: i32) -> (i32, i32) {
    %c0_i32 = arith.constant 0 : i32
    %c0_i32_0 = arith.constant 0 : i32
    %c0_i32_1 = arith.constant 0 : i32
    return %c0_i32, %c0_i32_0 : i32, i32
  }
  func.func @transform_5(%arg0: i32) -> (i32, i32) {
    %c0_i32 = arith.constant 0 : i32
    %c0_i32_0 = arith.constant 0 : i32
    %c0_i32_1 = arith.constant 0 : i32
    return %c0_i32, %c0_i32_0 : i32, i32
  }
  func.func @transform_6(%arg0: i32) -> (i32, i32) {
    %c0_i32 = arith.constant 0 : i32
    %c0_i32_0 = arith.constant 0 : i32
    %c0_i32_1 = arith.constant 0 : i32
    return %c0_i32, %c0_i32_0 : i32, i32
  }
  func.func @transform_7(%arg0: i32) -> (i32, i32) {
    %c0_i32 = arith.constant 0 : i32
    %c0_i32_0 = arith.constant 0 : i32
    %c0_i32_1 = arith.constant 0 : i32
    return %c0_i32, %c0_i32_0 : i32, i32
  }
  func.func @transform_8(%arg0: i32) -> (i32, i32) {
    %c0_i32 = arith.constant 0 : i32
    %c0_i32_0 = arith.constant 0 : i32
    %c0_i32_1 = arith.constant 0 : i32
    return %c0_i32, %c0_i32_0 : i32, i32
  }
  func.func @transform_9(%arg0: i32) -> (i32, i32) {
    %c0_i32 = arith.constant 0 : i32
    %c0_i32_0 = arith.constant 0 : i32
    %c0_i32_1 = arith.constant 0 : i32
    return %c0_i32, %c0_i32_0 : i32, i32
  }
  func.func @transform_10(%arg0: i32) -> (i32, i32) {
    %c0_i32 = arith.constant 0 : i32
    %c0_i32_0 = arith.constant 0 : i32
    %c0_i32_1 = arith.constant 0 : i32
    return %c0_i32, %c0_i32_0 : i32, i32
  }
  func.func @transform_11(%arg0: i32) -> (i32, i32) {
    %c0_i32 = arith.constant 0 : i32
    %c0_i32_0 = arith.constant 0 : i32
    return %arg0, %c0_i32 : i32, i32
  }
}

</mosaic_0001>

<llo_original>
// kernel: tpu_custom_call.1
$region0: #{tpu_custom_call.1}
  #allocation0 [shape = 'u32[]', space=smem, size = 0x4, offset = 0x4, fixed_abs, tag = 'smem constant byte address 0x4 - core index']
  #allocation1 [shape = 'u32[144,128]{1,0:T(1,128)}', space=vmem, size = 0x12000, scoped, tag = 'internal scratch']
  %s0 = inlined_call_operand.hbm [shape: f32[256,128], index: 0, kind: input, shape index: {}]
  %s1 = inlined_call_operand.hbm [shape: bf16[128,256], index: 1, kind: input, shape index: {}]
  %s2 = inlined_call_operand.vmem [shape: f32[1,256], index: 2, kind: input, shape index: {}]
  %s3 = inlined_call_operand.hbm [shape: f32[1,256], index: 3, kind: input, shape index: {}]
  %s4 = inlined_call_operand.hbm [shape: f32[1,256], index: 4, kind: input, shape index: {}]
  %s5 = inlined_call_operand.hbm [shape: bf16[256,512], index: 5, kind: input, shape index: {}]
  %s6 = inlined_call_operand.vmem [shape: f32[1,512], index: 6, kind: input, shape index: {}]
  %s7 = inlined_call_operand.hbm [shape: bf16[512,256], index: 7, kind: input, shape index: {}]
  %s8 = inlined_call_operand.vmem [shape: f32[1,256], index: 8, kind: input, shape index: {}]
  %s9 = inlined_call_operand.vmem [shape: f32[1,256], index: 9, kind: input, shape index: {}]
  %s10 = inlined_call_operand.vmem [shape: f32[1,256], index: 10, kind: input, shape index: {}]
  %s11 = inlined_call_operand.hbm [shape: f32[256,256], index: 11, kind: output, shape index: {}]
  %s12 = sld [smem:[#allocation0]]
  $region101: #{tpu_custom_call.1} parent=0
    _
  %s14 = ssub.s32 1, %s12
  %s15 = scalar_select 0, %s14, %s12
  $region1: #{tpu_custom_call.1} parent=0
    #allocation2 [shape = 'u8[131072]{0}', space=vmem, size = 0x20000, scoped, tag = 'input window, operand 0']
    #allocation3 [shape = 's32[2]{0}', space=sflag, size = 0x8, scoped, tag = 'scoped memory for tpu_custom_call.1']
    #allocation4 [shape = 's32[2]{0}', space=sflag, size = 0x8, scoped, tag = 'scoped memory for tpu_custom_call.1']
    #allocation5 [shape = 'u8[65536]{0}', space=vmem, size = 0x10000, scoped, tag = 'input window, operand 1, single buffered']
    #allocation6 [shape = 's32[1]{0}', space=sflag, size = 0x4, scoped, tag = 'scoped memory for tpu_custom_call.1']
    #allocation7 [shape = 'u8[1024]{0}', space=vmem, size = 0x400, scoped, tag = 'input window, operand 3, single buffered']
    #allocation8 [shape = 'u8[1024]{0}', space=vmem, size = 0x400, scoped, tag = 'input window, operand 4, single buffered']
    #allocation9 [shape = 's32[1]{0}', space=sflag, size = 0x4, scoped, tag = 'scoped memory for tpu_custom_call.1']
    #allocation10 [shape = 'u8[262144]{0}', space=vmem, size = 0x40000, scoped, tag = 'input window, operand 5, single buffered']
    #allocation11 [shape = 'u8[262144]{0}', space=vmem, size = 0x40000, scoped, tag = 'input window, operand 7, single buffered']
    #allocation12 [shape = 's32[1]{0}', space=sflag, size = 0x4, scoped, tag = 'scoped memory for tpu_custom_call.1']
    #allocation13 [shape = 'u8[262144]{0}', space=vmem, size = 0x40000, scoped, tag = 'output window, operand 0']
    %16 = vsyncpa [#allocation3], 0
    %s17 = scalar_lea.sflag [#allocation3], 1
    %18 = vsyncpa %s17, 0
    %19 = vsyncpa [#allocation6], 0
    %20 = vsyncpa [#allocation9], 0
    %21 = vsyncpa [#allocation12], 0
    %22 = vsyncpa [#allocation4], 0
    %s23 = scalar_lea.sflag [#allocation4], 1
    %24 = vsyncpa %s23, 0
    loop: start=0, step=1, limit=4
    $region2: #{tpu_custom_call.1} parent=1 // loop_pre_header
      _
    $region3: #{tpu_custom_call.1} parent=1 // loop_header
      %s26 = sphi 0, %s30
      %p27 = scmp.ge.s32.totalorder %s26, 4
      %s36 = sphi 0, %s38
      %s39 = sphi 0, %s36
      %s40 = sphi 0, %s39
      %s56 = sphi 0, %s40
      %s60 = sphi 0, %s60
      %s62 = sphi 0, %s60
      %s63 = sphi 0, %s62
      %s77 = sphi 0, %s63
      %s81 = sphi 0, %s81
      %s83 = sphi 0, %s81
      %s84 = sphi 0, %s83
      %s98 = sphi 0, %s84
      %s102 = sphi 0, %s102
      %s104 = sphi 0, %s102
      %s105 = sphi 0, %s104
      %s119 = sphi 0, %s105
      %s123 = sphi 0, %s123
      %s125 = sphi 0, %s123
      %s126 = sphi 0, %s125
      %s140 = sphi 0, %s126
      %s144 = sphi 0, %s144
      %s146 = sphi 0, %s144
      %s147 = sphi 0, %s146
      %s161 = sphi 0, %s147
      %s165 = sphi 0, %s165
      %s167 = sphi 0, %s165
      %s168 = sphi 0, %s167
      %s182 = sphi 0, %s168
      %s186 = sphi 0, %s186
      %s188 = sphi 0, %s186
      %s189 = sphi 0, %s188
      %s203 = sphi 0, %s189
      %s207 = sphi 0, %s207
      %s209 = sphi 0, %s207
      %s210 = sphi 0, %s209
      %s224 = sphi 0, %s210
      %s228 = sphi 0, %s228
      %s230 = sphi 0, %s228
      %s231 = sphi 0, %s230
      %s245 = sphi 0, %s231
      %s249 = sphi 0, %s249
      %s251 = sphi 0, %s249
      %s252 = sphi 0, %s251
      %s266 = sphi 0, %s252
      %s272 = sphi 0, %s274
      %s275 = sphi 0, %s272
      %s276 = sphi 0, %s275
      %s292 = sphi 0, %s276
    $region4: #{tpu_custom_call.1} parent=1 // loop_header_branch
      %29 = sbr.rel (%p27) target = $region8
    $region5: #{tpu_custom_call.1} parent=1 // loop_body
      %s31 = ssub.s32 %s26, 1
      %s32 = ssub.s32 %s26, 2
      %s33 = sadd.s32 %s26, 1
      %s34 = ssub.s32 %s26, %s33
      %p35 = scmp.eq.s32.totalorder %s34, 0
      %s37 = sadd.s32 %s36, 1
      %s38 = scalar_select %p35, %s36, %s37
      %p41 = pneg %p35
      %p42 = scmp.eq.s32.totalorder %s26, 1
      %p43 = por %p41, %p42
      %p44 = scmp.ne.s32.totalorder %s36, %s39
      %p45 = scmp.eq.s32.totalorder %s26, 0
      %p46 = por %p44, %p45
      %p47 = scmp.ne.s32.totalorder %s36, %s39
      %p48 = scmp.eq.s32.totalorder %s31, 1
      %p49 = por %p47, %p48
      %p50 = scmp.ne.s32.totalorder %s39, %s40
      %p51 = scmp.eq.s32.totalorder %s31, 0
      %p52 = por %p50, %p51
      %p53 = scmp.ne.s32.totalorder %s39, %s40
      %p54 = scmp.eq.s32.totalorder %s32, 1
      %p55 = por %p53, %p54
      %p57 = scmp.ne.s32.totalorder %s40, %s56
      %p58 = scmp.eq.s32.totalorder %s32, 0
      %p59 = por %p57, %p58
      %s61 = sadd.s32 %s60, 1
      %p64 = scmp.eq.s32.totalorder %s26, 1
      %p65 = scmp.ne.s32.totalorder %s60, %s62
      %p66 = scmp.eq.s32.totalorder %s26, 0
      %p67 = por %p65, %p66
      %p68 = scmp.ne.s32.totalorder %s60, %s62
      %p69 = scmp.eq.s32.totalorder %s31, 1
      %p70 = por %p68, %p69
      %p71 = scmp.ne.s32.totalorder %s62, %s63
      %p72 = scmp.eq.s32.totalorder %s31, 0
      %p73 = por %p71, %p72
      %p74 = scmp.ne.s32.totalorder %s62, %s63
      %p75 = scmp.eq.s32.totalorder %s32, 1
      %p76 = por %p74, %p75
      %p78 = scmp.ne.s32.totalorder %s63, %s77
      %p79 = scmp.eq.s32.totalorder %s32, 0
      %p80 = por %p78, %p79
      %s82 = sadd.s32 %s81, 1
      %p85 = scmp.eq.s32.totalorder %s26, 1
      %p86 = scmp.ne.s32.totalorder %s81, %s83
      %p87 = scmp.eq.s32.totalorder %s26, 0
      %p88 = por %p86, %p87
      %p89 = scmp.ne.s32.totalorder %s81, %s83
      %p90 = scmp.eq.s32.totalorder %s31, 1
      %p91 = por %p89, %p90
      %p92 = scmp.ne.s32.totalorder %s83, %s84
      %p93 = scmp.eq.s32.totalorder %s31, 0
      %p94 = por %p92, %p93
      %p95 = scmp.ne.s32.totalorder %s83, %s84
      %p96 = scmp.eq.s32.totalorder %s32, 1
      %p97 = por %p95, %p96
      %p99 = scmp.ne.s32.totalorder %s84, %s98
      %p100 = scmp.eq.s32.totalorder %s32, 0
      %p101 = por %p99, %p100
      %s103 = sadd.s32 %s102, 1
      %p106 = scmp.eq.s32.totalorder %s26, 1
      %p107 = scmp.ne.s32.totalorder %s102, %s104
      %p108 = scmp.eq.s32.totalorder %s26, 0
      %p109 = por %p107, %p108
      %p110 = scmp.ne.s32.totalorder %s102, %s104
      %p111 = scmp.eq.s32.totalorder %s31, 1
      %p112 = por %p110, %p111
      %p113 = scmp.ne.s32.totalorder %s104, %s105
      %p114 = scmp.eq.s32.totalorder %s31, 0
      %p115 = por %p113, %p114
      %p116 = scmp.ne.s32.totalorder %s104, %s105
      %p117 = scmp.eq.s32.totalorder %s32, 1
      %p118 = por %p116, %p117
      %p120 = scmp.ne.s32.totalorder %s105, %s119
      %p121 = scmp.eq.s32.totalorder %s32, 0
      %p122 = por %p120, %p121
      %s124 = sadd.s32 %s123, 1
      %p127 = scmp.eq.s32.totalorder %s26, 1
      %p128 = scmp.ne.s32.totalorder %s123, %s125
      %p129 = scmp.eq.s32.totalorder %s26, 0
      %p130 = por %p128, %p129
      %p131 = scmp.ne.s32.totalorder %s123, %s125
      %p132 = scmp.eq.s32.totalorder %s31, 1
      %p133 = por %p131, %p132
      %p134 = scmp.ne.s32.totalorder %s125, %s126
      %p135 = scmp.eq.s32.totalorder %s31, 0
      %p136 = por %p134, %p135
      %p137 = scmp.ne.s32.totalorder %s125, %s126
      %p138 = scmp.eq.s32.totalorder %s32, 1
      %p139 = por %p137, %p138
      %p141 = scmp.ne.s32.totalorder %s126, %s140
      %p142 = scmp.eq.s32.totalorder %s32, 0
      %p143 = por %p141, %p142
      %s145 = sadd.s32 %s144, 1
      %p148 = scmp.eq.s32.totalorder %s26, 1
      %p149 = scmp.ne.s32.totalorder %s144, %s146
      %p150 = scmp.eq.s32.totalorder %s26, 0
      %p151 = por %p149, %p150
      %p152 = scmp.ne.s32.totalorder %s144, %s146
      %p153 = scmp.eq.s32.totalorder %s31, 1
      %p154 = por %p152, %p153
      %p155 = scmp.ne.s32.totalorder %s146, %s147
      %p156 = scmp.eq.s32.totalorder %s31, 0
      %p157 = por %p155, %p156
      %p158 = scmp.ne.s32.totalorder %s146, %s147
      %p159 = scmp.eq.s32.totalorder %s32, 1
      %p160 = por %p158, %p159
      %p162 = scmp.ne.s32.totalorder %s147, %s161
      %p163 = scmp.eq.s32.totalorder %s32, 0
      %p164 = por %p162, %p163
      %s166 = sadd.s32 %s165, 1
      %p169 = scmp.eq.s32.totalorder %s26, 1
      %p170 = scmp.ne.s32.totalorder %s165, %s167
      %p171 = scmp.eq.s32.totalorder %s26, 0
      %p172 = por %p170, %p171
      %p173 = scmp.ne.s32.totalorder %s165, %s167
      %p174 = scmp.eq.s32.totalorder %s31, 1
      %p175 = por %p173, %p174
      %p176 = scmp.ne.s32.totalorder %s167, %s168
      %p177 = scmp.eq.s32.totalorder %s31, 0
      %p178 = por %p176, %p177
      %p179 = scmp.ne.s32.totalorder %s167, %s168
      %p180 = scmp.eq.s32.totalorder %s32, 1
      %p181 = por %p179, %p180
      %p183 = scmp.ne.s32.totalorder %s168, %s182
      %p184 = scmp.eq.s32.totalorder %s32, 0
      %p185 = por %p183, %p184
      %s187 = sadd.s32 %s186, 1
      %p190 = scmp.eq.s32.totalorder %s26, 1
      %p191 = scmp.ne.s32.totalorder %s186, %s188
      %p192 = scmp.eq.s32.totalorder %s26, 0
      %p193 = por %p191, %p192
      %p194 = scmp.ne.s32.totalorder %s186, %s188
      %p195 = scmp.eq.s32.totalorder %s31, 1
      %p196 = por %p194, %p195
      %p197 = scmp.ne.s32.totalorder %s188, %s189
      %p198 = scmp.eq.s32.totalorder %s31, 0
      %p199 = por %p197, %p198
      %p200 = scmp.ne.s32.totalorder %s188, %s189
      %p201 = scmp.eq.s32.totalorder %s32, 1
      %p202 = por %p200, %p201
      %p204 = scmp.ne.s32.totalorder %s189, %s203
      %p205 = scmp.eq.s32.totalorder %s32, 0
      %p206 = por %p204, %p205
      %s208 = sadd.s32 %s207, 1
      %p211 = scmp.eq.s32.totalorder %s26, 1
      %p212 = scmp.ne.s32.totalorder %s207, %s209
      %p213 = scmp.eq.s32.totalorder %s26, 0
      %p214 = por %p212, %p213
      %p215 = scmp.ne.s32.totalorder %s207, %s209
      %p216 = scmp.eq.s32.totalorder %s31, 1
      %p217 = por %p215, %p216
      %p218 = scmp.ne.s32.totalorder %s209, %s210
      %p219 = scmp.eq.s32.totalorder %s31, 0
      %p220 = por %p218, %p219
      %p221 = scmp.ne.s32.totalorder %s209, %s210
      %p222 = scmp.eq.s32.totalorder %s32, 1
      %p223 = por %p221, %p222
      %p225 = scmp.ne.s32.totalorder %s210, %s224
      %p226 = scmp.eq.s32.totalorder %s32, 0
      %p227 = por %p225, %p226
      %s229 = sadd.s32 %s228, 1
      %p232 = scmp.eq.s32.totalorder %s26, 1
      %p233 = scmp.ne.s32.totalorder %s228, %s230
      %p234 = scmp.eq.s32.totalorder %s26, 0
      %p235 = por %p233, %p234
      %p236 = scmp.ne.s32.totalorder %s228, %s230
      %p237 = scmp.eq.s32.totalorder %s31, 1
      %p238 = por %p236, %p237
      %p239 = scmp.ne.s32.totalorder %s230, %s231
      %p240 = scmp.eq.s32.totalorder %s31, 0
      %p241 = por %p239, %p240
      %p242 = scmp.ne.s32.totalorder %s230, %s231
      %p243 = scmp.eq.s32.totalorder %s32, 1
      %p244 = por %p242, %p243
      %p246 = scmp.ne.s32.totalorder %s231, %s245
      %p247 = scmp.eq.s32.totalorder %s32, 0
      %p248 = por %p246, %p247
      %s250 = sadd.s32 %s249, 1
      %p253 = scmp.eq.s32.totalorder %s26, 1
      %p254 = scmp.ne.s32.totalorder %s249, %s251
      %p255 = scmp.eq.s32.totalorder %s26, 0
      %p256 = por %p254, %p255
      %p257 = scmp.ne.s32.totalorder %s249, %s251
      %p258 = scmp.eq.s32.totalorder %s31, 1
      %p259 = por %p257, %p258
      %p260 = scmp.ne.s32.totalorder %s251, %s252
      %p261 = scmp.eq.s32.totalorder %s31, 0
      %p262 = por %p260, %p261
      %p263 = scmp.ne.s32.totalorder %s251, %s252
      %p264 = scmp.eq.s32.totalorder %s32, 1
      %p265 = por %p263, %p264
      %p267 = scmp.ne.s32.totalorder %s252, %s266
      %p268 = scmp.eq.s32.totalorder %s32, 0
      %p269 = por %p267, %p268
      %s270 = ssub.s32 %s26, %s33
      %p271 = scmp.eq.s32.totalorder %s270, 0
      %s273 = sadd.s32 %s272, 1
      %s274 = scalar_select %p271, %s272, %s273
      %p277 = pneg %p271
      %p278 = scmp.eq.s32.totalorder %s26, 1
      %p279 = por %p277, %p278
      %p280 = scmp.ne.s32.totalorder %s272, %s275
      %p281 = scmp.eq.s32.totalorder %s26, 0
      %p282 = por %p280, %p281
      %p283 = scmp.ne.s32.totalorder %s272, %s275
      %p284 = scmp.eq.s32.totalorder %s31, 1
      %p285 = por %p283, %p284
      %p286 = scmp.ne.s32.totalorder %s275, %s276
      %p287 = scmp.eq.s32.totalorder %s31, 0
      %p288 = por %p286, %p287
      %p289 = scmp.ne.s32.totalorder %s275, %s276
      %p290 = scmp.eq.s32.totalorder %s32, 1
      %p291 = por %p289, %p290
      %p293 = scmp.ne.s32.totalorder %s276, %s292
      %p294 = scmp.eq.s32.totalorder %s32, 0
      %p295 = por %p293, %p294
      %p296 = scmp.le.s32.totalorder 1, %s26
      %p297 = scmp.lt.s32.totalorder %s26, 3
      %p298 = pnand %p296, %p297
      %p299 = pneg %p298
      // Predicated region
      $region9: #{tpu_custom_call.1} parent=5 // pred_check
        _
      $region10: #{tpu_custom_call.1} parent=5 // pred_check_branch
        %301 = sbr.rel (%p298) target = $region12
      $region11: #{tpu_custom_call.1} parent=5 // pred_region
        %s302 = ssub.s32 %s26, 1
        // Predicated region
        $region13: #{tpu_custom_call.1} parent=11 // pred_check
          %p303 = pneg %p73
        $region14: #{tpu_custom_call.1} parent=11 // pred_check_branch
          %305 = sbr.rel (%p303) target = $region16
        $region15: #{tpu_custom_call.1} parent=11 // pred_region
          %s307 = ssub.s32 2048, 2048
          %308 = vsyncadd [#allocation6], %s307
          %s309 = sshll.u32 [#allocation5], 4
          %s310 = int_to_ptr.vmem [resolvable:$true] %s309
          %315 = dma.hbm_to_vmem [thread:$0]  %s1, 2048, %s310, [#allocation6], 128, 128, 8
        $region16: #{tpu_custom_call.1} parent=11 // pred_fallthru
          _
        // Predicated region
        $region17: #{tpu_custom_call.1} parent=11 // pred_check
          %p316 = pneg %p94
        $region18: #{tpu_custom_call.1} parent=11 // pred_check_branch
          %318 = sbr.rel (%p316) target = $region20
        $region19: #{tpu_custom_call.1} parent=11 // pred_region
          _
        $region20: #{tpu_custom_call.1} parent=11 // pred_fallthru
          _
        // Predicated region
        $region21: #{tpu_custom_call.1} parent=11 // pred_check
          %p319 = pneg %p115
        $region22: #{tpu_custom_call.1} parent=11 // pred_check_branch
          %321 = sbr.rel (%p319) target = $region24
        $region23: #{tpu_custom_call.1} parent=11 // pred_region
          %s323 = ssub.s32 32, 32
          %324 = vsyncadd [#allocation6], %s323
          %s326 = sshll.u32 [#allocation7], 4
          %s327 = int_to_ptr.vmem [resolvable:$true] %s326
          %329 = dma.hbm_to_vmem [thread:$0]  %s3, 32, %s327, [#allocation6]
        $region24: #{tpu_custom_call.1} parent=11 // pred_fallthru
          _
        // Predicated region
        $region25: #{tpu_custom_call.1} parent=11 // pred_check
          %p330 = pneg %p136
        $region26: #{tpu_custom_call.1} parent=11 // pred_check_branch
          %332 = sbr.rel (%p330) target = $region28
        $region27: #{tpu_custom_call.1} parent=11 // pred_region
          %s334 = ssub.s32 32, 32
          %335 = vsyncadd [#allocation9], %s334
          %s337 = sshll.u32 [#allocation8], 4
          %s338 = int_to_ptr.vmem [resolvable:$true] %s337
          %340 = dma.hbm_to_vmem [thread:$0]  %s4, 32, %s338, [#allocation9]
        $region28: #{tpu_custom_call.1} parent=11 // pred_fallthru
          _
        // Predicated region
        $region29: #{tpu_custom_call.1} parent=11 // pred_check
          %p341 = pneg %p157
        $region30: #{tpu_custom_call.1} parent=11 // pred_check_branch
          %343 = sbr.rel (%p341) target = $region32
        $region31: #{tpu_custom_call.1} parent=11 // pred_region
          %s345 = ssub.s32 8192, 8192
          %346 = vsyncadd [#allocation9], %s345
          %s347 = sshll.u32 [#allocation10], 4
          %s348 = int_to_ptr.vmem [resolvable:$true] %s347
          %353 = dma.hbm_to_vmem [thread:$0]  %s5, 8192, %s348, [#allocation9], 256, 256, 16
        $region32: #{tpu_custom_call.1} parent=11 // pred_fallthru
          _
        // Predicated region
        $region33: #{tpu_custom_call.1} parent=11 // pred_check
          %p354 = pneg %p178
        $region34: #{tpu_custom_call.1} parent=11 // pred_check_branch
          %356 = sbr.rel (%p354) target = $region36
        $region35: #{tpu_custom_call.1} parent=11 // pred_region
          _
        $region36: #{tpu_custom_call.1} parent=11 // pred_fallthru
          _
        // Predicated region
        $region37: #{tpu_custom_call.1} parent=11 // pred_check
          %p357 = pneg %p199
        $region38: #{tpu_custom_call.1} parent=11 // pred_check_branch
          %359 = sbr.rel (%p357) target = $region40
        $region39: #{tpu_custom_call.1} parent=11 // pred_region
          %s361 = ssub.s32 8192, 8192
          %362 = vsyncadd [#allocation12], %s361
          %s363 = sshll.u32 [#allocation11], 4
          %s364 = int_to_ptr.vmem [resolvable:$true] %s363
          %369 = dma.hbm_to_vmem [thread:$0]  %s7, 8192, %s364, [#allocation12], 128, 128, 8
        $region40: #{tpu_custom_call.1} parent=11 // pred_fallthru
          _
        // Predicated region
        $region41: #{tpu_custom_call.1} parent=11 // pred_check
          %p370 = pneg %p220
        $region42: #{tpu_custom_call.1} parent=11 // pred_check_branch
          %372 = sbr.rel (%p370) target = $region44
        $region43: #{tpu_custom_call.1} parent=11 // pred_region
          _
        $region44: #{tpu_custom_call.1} parent=11 // pred_fallthru
          _
        // Predicated region
        $region45: #{tpu_custom_call.1} parent=11 // pred_check
          %p373 = pneg %p241
        $region46: #{tpu_custom_call.1} parent=11 // pred_check_branch
          %375 = sbr.rel (%p373) target = $region48
        $region47: #{tpu_custom_call.1} parent=11 // pred_region
          _
        $region48: #{tpu_custom_call.1} parent=11 // pred_fallthru
          _
        // Predicated region
        $region49: #{tpu_custom_call.1} parent=11 // pred_check
          %p376 = pneg %p262
        $region50: #{tpu_custom_call.1} parent=11 // pred_check_branch
          %378 = sbr.rel (%p376) target = $region52
        $region51: #{tpu_custom_call.1} parent=11 // pred_region
          _
        $region52: #{tpu_custom_call.1} parent=11 // pred_fallthru
          _
      $region12: #{tpu_custom_call.1} parent=5 // pred_fallthru
        _
      %p379 = scmp.lt.s32.totalorder %s26, 2
      // Predicated region
      $region53: #{tpu_custom_call.1} parent=5 // pred_check
        %p380 = pneg %p379
      $region54: #{tpu_custom_call.1} parent=5 // pred_check_branch
        %382 = sbr.rel (%p380) target = $region56
      $region55: #{tpu_custom_call.1} parent=5 // pred_region
        // Predicated region
        $region57: #{tpu_custom_call.1} parent=55 // pred_check
          %p383 = pneg %p46
        $region58: #{tpu_custom_call.1} parent=55 // pred_check_branch
          %385 = sbr.rel (%p383) target = $region60
        $region59: #{tpu_custom_call.1} parent=55 // pred_region
          %s386 = sand.u32 %s36, 1
          %s387 = scalar_lea.sflag [#allocation3], %s386
          %s388 = sand.u32 %s36, 1
          %s389 = smul.addr %s388, 128
          %s390 = scalar_lea.vmem [#allocation2], %s389
          %s391 = smul.u32 16, %s26
          %s393 = ssub.s32 2048, 2048
          %394 = vsyncadd %s387, %s393
          %s395 = smul.addr %s391, 128
          %s396 = scalar_lea.hbm %s0, %s395
          %s397 = sshll.u32 %s390, 4
          %s398 = int_to_ptr.vmem [resolvable:$true] %s397
          %403 = dma.hbm_to_vmem [thread:$0]  %s396, 2048, %s398, %s387, 128, 128, 8
        $region60: #{tpu_custom_call.1} parent=55 // pred_fallthru
          _
      $region56: #{tpu_custom_call.1} parent=5 // pred_fallthru
        _
      %p404 = scmp.le.s32.totalorder 1, %s26
      %p405 = scmp.lt.s32.totalorder %s26, 3
      %p406 = pnand %p404, %p405
      %p407 = pneg %p406
      // Predicated region
      $region61: #{tpu_custom_call.1} parent=5 // pred_check
        _
      $region62: #{tpu_custom_call.1} parent=5 // pred_check_branch
        %409 = sbr.rel (%p406) target = $region64
      $region63: #{tpu_custom_call.1} parent=5 // pred_region
        %s410 = ssub.s32 %s26, 1
        %s411 = sand.u32 %s39, 1
        %s412 = scalar_lea.sflag [#allocation3], %s411
        %s413 = sand.u32 %s39, 1
        %s414 = smul.addr %s413, 128
        %s415 = scalar_lea.vmem [#allocation2], %s414
        // Predicated region
        $region65: #{tpu_custom_call.1} parent=63 // pred_check
          %p416 = pneg %p52
        $region66: #{tpu_custom_call.1} parent=63 // pred_check_branch
          %418 = sbr.rel (%p416) target = $region68
        $region67: #{tpu_custom_call.1} parent=63 // pred_region
          %419 = dma.done %s412, 2048
        $region68: #{tpu_custom_call.1} parent=63 // pred_fallthru
          _
        // Predicated region
        $region69: #{tpu_custom_call.1} parent=63 // pred_check
          %p420 = pneg %p73
        $region70: #{tpu_custom_call.1} parent=63 // pred_check_branch
          %422 = sbr.rel (%p420) target = $region72
        $region71: #{tpu_custom_call.1} parent=63 // pred_region
          %423 = dma.done [#allocation6], 2048
        $region72: #{tpu_custom_call.1} parent=63 // pred_fallthru
          _
        // Predicated region
        $region73: #{tpu_custom_call.1} parent=63 // pred_check
          %p424 = pneg %p115
        $region74: #{tpu_custom_call.1} parent=63 // pred_check_branch
          %426 = sbr.rel (%p424) target = $region76
        $region75: #{tpu_custom_call.1} parent=63 // pred_region
          %427 = dma.done [#allocation6], 32
        $region76: #{tpu_custom_call.1} parent=63 // pred_fallthru
          _
        // Predicated region
        $region77: #{tpu_custom_call.1} parent=63 // pred_check
          %p428 = pneg %p136
        $region78: #{tpu_custom_call.1} parent=63 // pred_check_branch
          %430 = sbr.rel (%p428) target = $region80
        $region79: #{tpu_custom_call.1} parent=63 // pred_region
          %431 = dma.done [#allocation9], 32
        $region80: #{tpu_custom_call.1} parent=63 // pred_fallthru
          _
        // Predicated region
        $region81: #{tpu_custom_call.1} parent=63 // pred_check
          %p432 = pneg %p157
        $region82: #{tpu_custom_call.1} parent=63 // pred_check_branch
          %434 = sbr.rel (%p432) target = $region84
        $region83: #{tpu_custom_call.1} parent=63 // pred_region
          %435 = dma.done [#allocation9], 8192
        $region84: #{tpu_custom_call.1} parent=63 // pred_fallthru
          _
        // Predicated region
        $region85: #{tpu_custom_call.1} parent=63 // pred_check
          %p436 = pneg %p199
        $region86: #{tpu_custom_call.1} parent=63 // pred_check_branch
          %438 = sbr.rel (%p436) target = $region88
        $region87: #{tpu_custom_call.1} parent=63 // pred_region
          %439 = dma.done [#allocation12], 8192
        $region88: #{tpu_custom_call.1} parent=63 // pred_fallthru
          _
        %s440 = sand.u32 %s39, 1
        %s441 = scalar_lea.sflag [#allocation3], %s440
        %s442 = sand.u32 %s39, 1
        %s443 = smul.addr %s442, 128
        %s444 = scalar_lea.vmem [#allocation2], %s443
        %p445 = pneg %p52
        %p446 = pneg %p49
        %p447 = pneg %p73
        %p448 = pneg %p70
        %p449 = pneg %p94
        %p450 = pneg %p91
        %p451 = pneg %p115
        %p452 = pneg %p112
        %p453 = pneg %p136
        %p454 = pneg %p133
        %p455 = pneg %p157
        %p456 = pneg %p154
        %p457 = pneg %p178
        %p458 = pneg %p175
        %p459 = pneg %p199
        %p460 = pneg %p196
        %p461 = pneg %p220
        %p462 = pneg %p217
        %p463 = pneg %p241
        %p464 = pneg %p238
        %p465 = pneg %p262
        %p466 = pneg %p259
        %p467 = pneg %p288
        %p468 = pneg %p285
        %s469 = sand.u32 %s275, 1
        %s470 = scalar_lea.sflag [#allocation4], %s469
        %s471 = sand.u32 %s275, 1
        %s472 = smul.addr %s471, 256
        %s473 = scalar_lea.vmem [#allocation13], %s472
        %s474 = smul.u32 16, %s31
        %s475 = smul.u32 16, %s31
        %v477 = vld [vmem:[%s415] sm:$0xff]
        %v478 = vld [vmem:[%s415 + $0x8] sm:$0xff]
        %v479 = vld [vmem:[%s415 + $0x10] sm:$0xff]
        %v480 = vld [vmem:[%s415 + $0x18] sm:$0xff]
        %v481 = vld [vmem:[%s415 + $0x20] sm:$0xff]
        %v482 = vld [vmem:[%s415 + $0x28] sm:$0xff]
        %v483 = vld [vmem:[%s415 + $0x30] sm:$0xff]
        %v484 = vld [vmem:[%s415 + $0x38] sm:$0xff]
        %v485 = vld [vmem:[%s415 + $0x40] sm:$0xff]
        %v486 = vld [vmem:[%s415 + $0x48] sm:$0xff]
        %v487 = vld [vmem:[%s415 + $0x50] sm:$0xff]
        %v488 = vld [vmem:[%s415 + $0x58] sm:$0xff]
        %v489 = vld [vmem:[%s415 + $0x60] sm:$0xff]
        %v490 = vld [vmem:[%s415 + $0x68] sm:$0xff]
        %v491 = vld [vmem:[%s415 + $0x70] sm:$0xff]
        %v492 = vld [vmem:[%s415 + $0x78] sm:$0xff]
        %v493 = vpack.c.bf16 %v478, %v477
        %v494 = vpack.c.bf16 %v480, %v479
        %v495 = vpack.c.bf16 %v482, %v481
        %v496 = vpack.c.bf16 %v484, %v483
        %v497 = vpack.c.bf16 %v486, %v485
        %v498 = vpack.c.bf16 %v488, %v487
        %v499 = vpack.c.bf16 %v490, %v489
        %v500 = vpack.c.bf16 %v492, %v491
        %v501 = vld [vmem:[#allocation5] sm:$0xff]
        %v502 = vld [vmem:[#allocation5 + $0x8] sm:$0xff]
        %v503 = vld [vmem:[#allocation5 + $0x10] sm:$0xff]
        %v504 = vld [vmem:[#allocation5 + $0x18] sm:$0xff]
        %v505 = vld [vmem:[#allocation5 + $0x20] sm:$0xff]
        %v506 = vld [vmem:[#allocation5 + $0x28] sm:$0xff]
        %v507 = vld [vmem:[#allocation5 + $0x30] sm:$0xff]
        %v508 = vld [vmem:[#allocation5 + $0x38] sm:$0xff]
        %v509 = vld [vmem:[#allocation5 + $0x40] sm:$0xff]
        %v510 = vld [vmem:[#allocation5 + $0x48] sm:$0xff]
        %v511 = vld [vmem:[#allocation5 + $0x50] sm:$0xff]
        %v512 = vld [vmem:[#allocation5 + $0x58] sm:$0xff]
        %v513 = vld [vmem:[#allocation5 + $0x60] sm:$0xff]
        %v514 = vld [vmem:[#allocation5 + $0x68] sm:$0xff]
        %v515 = vld [vmem:[#allocation5 + $0x70] sm:$0xff]
        %v516 = vld [vmem:[#allocation5 + $0x78] sm:$0xff]
        %v517 = vld [vmem:[%s2] sm:$0x3]
        %v519 = vlaneseq
        %v520 = vshrl.u32 %v519, 7
        %v521 = vsub.s32 0, %v520
        %v522 = vrot.slane %v517, %v521
        %v523 = vlaneseq
        %v524 = vshrl.u32 %v523, 7
        %v525 = vsub.s32 1, %v524
        %v526 = vrot.slane %v517, %v525
        %v545 = vunpack.c.l.b16 %v501
        %v546 = vunpack.c.h.b16 %v501
        %v547 = vunpack.c.l.b16 %v502
        %v548 = vunpack.c.h.b16 %v502
        %v549 = vunpack.c.l.b16 %v503
        %v550 = vunpack.c.h.b16 %v503
        %v551 = vunpack.c.l.b16 %v504
        %v552 = vunpack.c.h.b16 %v504
        %v553 = vunpack.c.l.b16 %v505
        %v554 = vunpack.c.h.b16 %v505
        %v555 = vunpack.c.l.b16 %v506
        %v556 = vunpack.c.h.b16 %v506
        %v557 = vunpack.c.l.b16 %v507
        %v558 = vunpack.c.h.b16 %v507
        %v559 = vunpack.c.l.b16 %v508
        %v560 = vunpack.c.h.b16 %v508
        %v561 = vunpack.c.l.b16 %v509
        %v562 = vunpack.c.h.b16 %v509
        %v563 = vunpack.c.l.b16 %v510
        %v564 = vunpack.c.h.b16 %v510
        %v565 = vunpack.c.l.b16 %v511
        %v566 = vunpack.c.h.b16 %v511
        %v567 = vunpack.c.l.b16 %v512
        %v568 = vunpack.c.h.b16 %v512
        %v569 = vunpack.c.l.b16 %v513
        %v570 = vunpack.c.h.b16 %v513
        %v571 = vunpack.c.l.b16 %v514
        %v572 = vunpack.c.h.b16 %v514
        %v573 = vunpack.c.l.b16 %v515
        %v574 = vunpack.c.h.b16 %v515
        %v575 = vunpack.c.l.b16 %v516
        %v576 = vunpack.c.h.b16 %v516
        %v577 = vpack.c.b16 %v547, %v545
        %v578 = vpack.c.b16 %v548, %v546
        %v579 = vpack.c.b16 %v551, %v549
        %v580 = vpack.c.b16 %v552, %v550
        %v581 = vpack.c.b16 %v555, %v553
        %v582 = vpack.c.b16 %v556, %v554
        %v583 = vpack.c.b16 %v559, %v557
        %v584 = vpack.c.b16 %v560, %v558
        %v585 = vpack.c.b16 %v563, %v561
        %v586 = vpack.c.b16 %v564, %v562
        %v587 = vpack.c.b16 %v567, %v565
        %v588 = vpack.c.b16 %v568, %v566
        %v589 = vpack.c.b16 %v571, %v569
        %v590 = vpack.c.b16 %v572, %v570
        %v591 = vpack.c.b16 %v575, %v573
        %v592 = vpack.c.b16 %v576, %v574
        %609 = vmatprep.subr.bf16.mxu0 %v592
        %610 = vmatpush1.bf16.msra.mxu0 %v591
        %611 = vmatprep.subr.bf16.mxu0 %v590
        %612 = vmatpush1.bf16.msra.mxu0 %v589
        %613 = vmatprep.subr.bf16.mxu0 %v588
        %614 = vmatpush1.bf16.msra.mxu0 %v587
        %615 = vmatprep.subr.bf16.mxu0 %v586
        %616 = vmatpush1.bf16.msra.mxu0 %v585
        %617 = vmatprep.subr.bf16.mxu0 %v584
        %618 = vmatpush1.bf16.msra.mxu0 %v583
        %619 = vmatprep.subr.bf16.mxu0 %v582
        %620 = vmatpush1.bf16.msra.mxu0 %v581
        %621 = vmatprep.subr.bf16.mxu0 %v580
        %622 = vmatpush1.bf16.msra.mxu0 %v579
        %623 = vmatprep.subr.bf16.mxu0 %v578
        %624 = vmatpush1.bf16.msra.mxu0 %v577
        %625 = vmatprep.subr.bf16.mxu0 0
        %626 = vmatpush2.bf16.msra.mxu0 0
        %627 = vmatprep.subr.bf16.mxu0 0
        %628 = vmatpush2.bf16.msra.mxu0 0
        %629 = vmatprep.subr.bf16.mxu0 0
        %630 = vmatpush2.bf16.msra.mxu0 0
        %631 = vmatprep.subr.bf16.mxu0 0
        %632 = vmatpush2.bf16.msra.mxu0 0
        %633 = vmatprep.subr.bf16.mxu0 0
        %634 = vmatpush2.bf16.msra.mxu0 0
        %635 = vmatprep.subr.bf16.mxu0 0
        %636 = vmatpush2.bf16.msra.mxu0 0
        %637 = vmatprep.subr.bf16.mxu0 0
        %638 = vmatpush2.bf16.msra.mxu0 0
        %639 = vmatprep.subr.bf16.mxu0 0
        %640 = vmatpush2.bf16.msra.mxu0 0
        %641 = vmatprep.mubr.bf16.mxu0 0
        %642 = vmatmul.mubr.bf16.gmra.mxu0 %v493
        %v643 = vpop.f32.mrf.mxu0
        %v644 = vadd.f32 %v522, %v643
        %v645 = vpop.f32.mrf.mxu0
        %v646 = vadd.f32 %v526, %v645
        %v647 = vpop.f32.mrf.mxu0
        %v648 = vadd.f32 %v522, %v647
        %v649 = vpop.f32.mrf.mxu0
        %v650 = vadd.f32 %v526, %v649
        %651 = vmatprep.mubr.bf16.mxu0 0
        %652 = vmatmul.mubr.bf16.gmra.mxu0 %v494
        %v653 = vpop.f32.mrf.mxu0
        %v654 = vadd.f32 %v522, %v653
        %v655 = vpop.f32.mrf.mxu0
        %v656 = vadd.f32 %v526, %v655
        %v657 = vpop.f32.mrf.mxu0
        %v658 = vadd.f32 %v522, %v657
        %v659 = vpop.f32.mrf.mxu0
        %v660 = vadd.f32 %v526, %v659
        %661 = vmatprep.mubr.bf16.mxu0 0
        %662 = vmatmul.mubr.bf16.gmra.mxu0 %v495
        %v663 = vpop.f32.mrf.mxu0
        %v664 = vadd.f32 %v522, %v663
        %v665 = vpop.f32.mrf.mxu0
        %v666 = vadd.f32 %v526, %v665
        %v667 = vpop.f32.mrf.mxu0
        %v668 = vadd.f32 %v522, %v667
        %v669 = vpop.f32.mrf.mxu0
        %v670 = vadd.f32 %v526, %v669
        %671 = vmatprep.mubr.bf16.mxu0 0
        %672 = vmatmul.mubr.bf16.gmra.mxu0 %v496
        %v673 = vpop.f32.mrf.mxu0
        %v674 = vadd.f32 %v522, %v673
        %v675 = vpop.f32.mrf.mxu0
        %v676 = vadd.f32 %v526, %v675
        %v677 = vpop.f32.mrf.mxu0
        %v678 = vadd.f32 %v522, %v677
        %v679 = vpop.f32.mrf.mxu0
        %v680 = vadd.f32 %v526, %v679
        %681 = vmatprep.mubr.bf16.mxu0 0
        %682 = vmatmul.mubr.bf16.gmra.mxu0 %v497
        %v683 = vpop.f32.mrf.mxu0
        %v684 = vadd.f32 %v522, %v683
        %v685 = vpop.f32.mrf.mxu0
        %v686 = vadd.f32 %v526, %v685
        %v687 = vpop.f32.mrf.mxu0
        %v688 = vadd.f32 %v522, %v687
        %v689 = vpop.f32.mrf.mxu0
        %v690 = vadd.f32 %v526, %v689
        %691 = vmatprep.mubr.bf16.mxu0 0
        %692 = vmatmul.mubr.bf16.gmra.mxu0 %v498
        %v693 = vpop.f32.mrf.mxu0
        %v694 = vadd.f32 %v522, %v693
        %v695 = vpop.f32.mrf.mxu0
        %v696 = vadd.f32 %v526, %v695
        %v697 = vpop.f32.mrf.mxu0
        %v698 = vadd.f32 %v522, %v697
        %v699 = vpop.f32.mrf.mxu0
        %v700 = vadd.f32 %v526, %v699
        %701 = vmatprep.mubr.bf16.mxu0 0
        %702 = vmatmul.mubr.bf16.gmra.mxu0 %v499
        %v703 = vpop.f32.mrf.mxu0
        %v704 = vadd.f32 %v522, %v703
        %v705 = vpop.f32.mrf.mxu0
        %v706 = vadd.f32 %v526, %v705
        %v707 = vpop.f32.mrf.mxu0
        %v708 = vadd.f32 %v522, %v707
        %v709 = vpop.f32.mrf.mxu0
        %v710 = vadd.f32 %v526, %v709
        %711 = vmatprep.mubr.bf16.mxu0 0
        %712 = vmatmul.mubr.bf16.gmra.mxu0 %v500
        %v713 = vpop.f32.mrf.mxu0
        %v714 = vadd.f32 %v522, %v713
        %v715 = vpop.f32.mrf.mxu0
        %v716 = vadd.f32 %v526, %v715
        %v717 = vpop.f32.mrf.mxu0
        %v718 = vadd.f32 %v522, %v717
        %v719 = vpop.f32.mrf.mxu0
        %v720 = vadd.f32 %v526, %v719
        %721 = vdwg.mxu0
        %v722 = vld [vmem:[#allocation7] sm:$0x3]
        %v723 = vld [vmem:[#allocation8] sm:$0x3]
        %v724 = vadd.f32 %v644, %v646
        %725 = vadd.xlane.f32.xlu0 %v724
        %v726 = vpop.xlane.xlu0 %725
        %v727 = vadd.f32 %v648, %v650
        %728 = vadd.xlane.f32.xlu0 %v727
        %v729 = vpop.xlane.xlu0 %728
        %v730 = vadd.f32 %v654, %v656
        %731 = vadd.xlane.f32.xlu0 %v730
        %v732 = vpop.xlane.xlu0 %731
        %v733 = vadd.f32 %v658, %v660
        %734 = vadd.xlane.f32.xlu0 %v733
        %v735 = vpop.xlane.xlu0 %734
        %v736 = vadd.f32 %v664, %v666
        %737 = vadd.xlane.f32.xlu0 %v736
        %v738 = vpop.xlane.xlu0 %737
        %v739 = vadd.f32 %v668, %v670
        %740 = vadd.xlane.f32.xlu0 %v739
        %v741 = vpop.xlane.xlu0 %740
        %v742 = vadd.f32 %v674, %v676
        %743 = vadd.xlane.f32.xlu0 %v742
        %v744 = vpop.xlane.xlu0 %743
        %v745 = vadd.f32 %v678, %v680
        %746 = vadd.xlane.f32.xlu0 %v745
        %v747 = vpop.xlane.xlu0 %746
        %v748 = vadd.f32 %v684, %v686
        %749 = vadd.xlane.f32.xlu0 %v748
        %v750 = vpop.xlane.xlu0 %749
        %v751 = vadd.f32 %v688, %v690
        %752 = vadd.xlane.f32.xlu0 %v751
        %v753 = vpop.xlane.xlu0 %752
        %v754 = vadd.f32 %v694, %v696
        %755 = vadd.xlane.f32.xlu0 %v754
        %v756 = vpop.xlane.xlu0 %755
        %v757 = vadd.f32 %v698, %v700
        %758 = vadd.xlane.f32.xlu0 %v757
        %v759 = vpop.xlane.xlu0 %758
        %v760 = vadd.f32 %v704, %v706
        %761 = vadd.xlane.f32.xlu0 %v760
        %v762 = vpop.xlane.xlu0 %761
        %v763 = vadd.f32 %v708, %v710
        %764 = vadd.xlane.f32.xlu0 %v763
        %v765 = vpop.xlane.xlu0 %764
        %v766 = vadd.f32 %v714, %v716
        %767 = vadd.xlane.f32.xlu0 %v766
        %v768 = vpop.xlane.xlu0 %767
        %v769 = vadd.f32 %v718, %v720
        %770 = vadd.xlane.f32.xlu0 %v769
        %v771 = vpop.xlane.xlu0 %770
        %v772 = vmul.f32 %v644, %v644
        %v773 = vmul.f32 %v646, %v646
        %v774 = vmul.f32 %v648, %v648
        %v775 = vmul.f32 %v650, %v650
        %v776 = vmul.f32 %v654, %v654
        %v777 = vmul.f32 %v656, %v656
        %v778 = vmul.f32 %v658, %v658
        %v779 = vmul.f32 %v660, %v660
        %v780 = vmul.f32 %v664, %v664
        %v781 = vmul.f32 %v666, %v666
        %v782 = vmul.f32 %v668, %v668
        %v783 = vmul.f32 %v670, %v670
        %v784 = vmul.f32 %v674, %v674
        %v785 = vmul.f32 %v676, %v676
        %v786 = vmul.f32 %v678, %v678
        %v787 = vmul.f32 %v680, %v680
        %v788 = vmul.f32 %v684, %v684
        %v789 = vmul.f32 %v686, %v686
        %v790 = vmul.f32 %v688, %v688
        %v791 = vmul.f32 %v690, %v690
        %v792 = vmul.f32 %v694, %v694
        %v793 = vmul.f32 %v696, %v696
        %v794 = vmul.f32 %v698, %v698
        %v795 = vmul.f32 %v700, %v700
        %v796 = vmul.f32 %v704, %v704
        %v797 = vmul.f32 %v706, %v706
        %v798 = vmul.f32 %v708, %v708
        %v799 = vmul.f32 %v710, %v710
        %v800 = vmul.f32 %v714, %v714
        %v801 = vmul.f32 %v716, %v716
        %v802 = vmul.f32 %v718, %v718
        %v803 = vmul.f32 %v720, %v720
        %v804 = vadd.f32 %v772, %v773
        %805 = vadd.xlane.f32.xlu0 %v804
        %v806 = vpop.xlane.xlu0 %805
        %v807 = vadd.f32 %v774, %v775
        %808 = vadd.xlane.f32.xlu0 %v807
        %v809 = vpop.xlane.xlu0 %808
        %v810 = vadd.f32 %v776, %v777
        %811 = vadd.xlane.f32.xlu0 %v810
        %v812 = vpop.xlane.xlu0 %811
        %v813 = vadd.f32 %v778, %v779
        %814 = vadd.xlane.f32.xlu0 %v813
        %v815 = vpop.xlane.xlu0 %814
        %v816 = vadd.f32 %v780, %v781
        %817 = vadd.xlane.f32.xlu0 %v816
        %v818 = vpop.xlane.xlu0 %817
        %v819 = vadd.f32 %v782, %v783
        %820 = vadd.xlane.f32.xlu0 %v819
        %v821 = vpop.xlane.xlu0 %820
        %v822 = vadd.f32 %v784, %v785
        %823 = vadd.xlane.f32.xlu0 %v822
        %v824 = vpop.xlane.xlu0 %823
        %v825 = vadd.f32 %v786, %v787
        %826 = vadd.xlane.f32.xlu0 %v825
        %v827 = vpop.xlane.xlu0 %826
        %v828 = vadd.f32 %v788, %v789
        %829 = vadd.xlane.f32.xlu0 %v828
        %v830 = vpop.xlane.xlu0 %829
        %v831 = vadd.f32 %v790, %v791
        %832 = vadd.xlane.f32.xlu0 %v831
        %v833 = vpop.xlane.xlu0 %832
        %v834 = vadd.f32 %v792, %v793
        %835 = vadd.xlane.f32.xlu0 %v834
        %v836 = vpop.xlane.xlu0 %835
        %v837 = vadd.f32 %v794, %v795
        %838 = vadd.xlane.f32.xlu0 %v837
        %v839 = vpop.xlane.xlu0 %838
        %v840 = vadd.f32 %v796, %v797
        %841 = vadd.xlane.f32.xlu0 %v840
        %v842 = vpop.xlane.xlu0 %841
        %v843 = vadd.f32 %v798, %v799
        %844 = vadd.xlane.f32.xlu0 %v843
        %v845 = vpop.xlane.xlu0 %844
        %v846 = vadd.f32 %v800, %v801
        %847 = vadd.xlane.f32.xlu0 %v846
        %v848 = vpop.xlane.xlu0 %847
        %v849 = vadd.f32 %v802, %v803
        %850 = vadd.xlane.f32.xlu0 %v849
        %v851 = vpop.xlane.xlu0 %850
        %v852 = vmul.f32 %v726, 0.00390625
        %v853 = vmul.f32 %v729, 0.00390625
        %v854 = vmul.f32 %v732, 0.00390625
        %v855 = vmul.f32 %v735, 0.00390625
        %v856 = vmul.f32 %v738, 0.00390625
        %v857 = vmul.f32 %v741, 0.00390625
        %v858 = vmul.f32 %v744, 0.00390625
        %v859 = vmul.f32 %v747, 0.00390625
        %v860 = vmul.f32 %v750, 0.00390625
        %v861 = vmul.f32 %v753, 0.00390625
        %v862 = vmul.f32 %v756, 0.00390625
        %v863 = vmul.f32 %v759, 0.00390625
        %v864 = vmul.f32 %v762, 0.00390625
        %v865 = vmul.f32 %v765, 0.00390625
        %v866 = vmul.f32 %v768, 0.00390625
        %v867 = vmul.f32 %v771, 0.00390625
        %v868 = vmul.f32 %v806, 0.00390625
        %v869 = vmul.f32 %v809, 0.00390625
        %v870 = vmul.f32 %v812, 0.00390625
        %v871 = vmul.f32 %v815, 0.00390625
        %v872 = vmul.f32 %v818, 0.00390625
        %v873 = vmul.f32 %v821, 0.00390625
        %v874 = vmul.f32 %v824, 0.00390625
        %v875 = vmul.f32 %v827, 0.00390625
        %v876 = vmul.f32 %v830, 0.00390625
        %v877 = vmul.f32 %v833, 0.00390625
        %v878 = vmul.f32 %v836, 0.00390625
        %v879 = vmul.f32 %v839, 0.00390625
        %v880 = vmul.f32 %v842, 0.00390625
        %v881 = vmul.f32 %v845, 0.00390625
        %v882 = vmul.f32 %v848, 0.00390625
        %v883 = vmul.f32 %v851, 0.00390625
        %v884 = vmul.f32 %v852, %v852
        %v885 = vmul.f32 %v853, %v853
        %v886 = vmul.f32 %v854, %v854
        %v887 = vmul.f32 %v855, %v855
        %v888 = vmul.f32 %v856, %v856
        %v889 = vmul.f32 %v857, %v857
        %v890 = vmul.f32 %v858, %v858
        %v891 = vmul.f32 %v859, %v859
        %v892 = vmul.f32 %v860, %v860
        %v893 = vmul.f32 %v861, %v861
        %v894 = vmul.f32 %v862, %v862
        %v895 = vmul.f32 %v863, %v863
        %v896 = vmul.f32 %v864, %v864
        %v897 = vmul.f32 %v865, %v865
        %v898 = vmul.f32 %v866, %v866
        %v899 = vmul.f32 %v867, %v867
        %v900 = vsub.f32 %v868, %v884
        %v901 = vsub.f32 %v869, %v885
        %v902 = vsub.f32 %v870, %v886
        %v903 = vsub.f32 %v871, %v887
        %v904 = vsub.f32 %v872, %v888
        %v905 = vsub.f32 %v873, %v889
        %v906 = vsub.f32 %v874, %v890
        %v907 = vsub.f32 %v875, %v891
        %v908 = vsub.f32 %v876, %v892
        %v909 = vsub.f32 %v877, %v893
        %v910 = vsub.f32 %v878, %v894
        %v911 = vsub.f32 %v879, %v895
        %v912 = vsub.f32 %v880, %v896
        %v913 = vsub.f32 %v881, %v897
        %v914 = vsub.f32 %v882, %v898
        %v915 = vsub.f32 %v883, %v899
        %v916 = vmax.f32 %v900, 0.0
        %v917 = vmax.f32 %v901, 0.0
        %v918 = vmax.f32 %v902, 0.0
        %v919 = vmax.f32 %v903, 0.0
        %v920 = vmax.f32 %v904, 0.0
        %v921 = vmax.f32 %v905, 0.0
        %v922 = vmax.f32 %v906, 0.0
        %v923 = vmax.f32 %v907, 0.0
        %v924 = vmax.f32 %v908, 0.0
        %v925 = vmax.f32 %v909, 0.0
        %v926 = vmax.f32 %v910, 0.0
        %v927 = vmax.f32 %v911, 0.0
        %v928 = vmax.f32 %v912, 0.0
        %v929 = vmax.f32 %v913, 0.0
        %v930 = vmax.f32 %v914, 0.0
        %v931 = vmax.f32 %v915, 0.0
        %v932 = vsub.f32 %v644, %v852
        %v933 = vsub.f32 %v646, %v852
        %v934 = vsub.f32 %v648, %v853
        %v935 = vsub.f32 %v650, %v853
        %v936 = vsub.f32 %v654, %v854
        %v937 = vsub.f32 %v656, %v854
        %v938 = vsub.f32 %v658, %v855
        %v939 = vsub.f32 %v660, %v855
        %v940 = vsub.f32 %v664, %v856
        %v941 = vsub.f32 %v666, %v856
        %v942 = vsub.f32 %v668, %v857
        %v943 = vsub.f32 %v670, %v857
        %v944 = vsub.f32 %v674, %v858
        %v945 = vsub.f32 %v676, %v858
        %v946 = vsub.f32 %v678, %v859
        %v947 = vsub.f32 %v680, %v859
        %v948 = vsub.f32 %v684, %v860
        %v949 = vsub.f32 %v686, %v860
        %v950 = vsub.f32 %v688, %v861
        %v951 = vsub.f32 %v690, %v861
        %v952 = vsub.f32 %v694, %v862
        %v953 = vsub.f32 %v696, %v862
        %v954 = vsub.f32 %v698, %v863
        %v955 = vsub.f32 %v700, %v863
        %v956 = vsub.f32 %v704, %v864
        %v957 = vsub.f32 %v706, %v864
        %v958 = vsub.f32 %v708, %v865
        %v959 = vsub.f32 %v710, %v865
        %v960 = vsub.f32 %v714, %v866
        %v961 = vsub.f32 %v716, %v866
        %v962 = vsub.f32 %v718, %v867
        %v963 = vsub.f32 %v720, %v867
        %v964 = vadd.f32 %v916, 1e-05
        %v965 = vadd.f32 %v917, 1e-05
        %v966 = vadd.f32 %v918, 1e-05
        %v967 = vadd.f32 %v919, 1e-05
        %v968 = vadd.f32 %v920, 1e-05
        %v969 = vadd.f32 %v921, 1e-05
        %v970 = vadd.f32 %v922, 1e-05
        %v971 = vadd.f32 %v923, 1e-05
        %v972 = vadd.f32 %v924, 1e-05
        %v973 = vadd.f32 %v925, 1e-05
        %v974 = vadd.f32 %v926, 1e-05
        %v975 = vadd.f32 %v927, 1e-05
        %v976 = vadd.f32 %v928, 1e-05
        %v977 = vadd.f32 %v929, 1e-05
        %v978 = vadd.f32 %v930, 1e-05
        %v979 = vadd.f32 %v931, 1e-05
        %v980 = vrsqrt.pop %v964
        %v981 = vrsqrt.pop %v965
        %v982 = vrsqrt.pop %v966
        %v983 = vrsqrt.pop %v967
        %v984 = vrsqrt.pop %v968
        %v985 = vrsqrt.pop %v969
        %v986 = vrsqrt.pop %v970
        %v987 = vrsqrt.pop %v971
        %v988 = vrsqrt.pop %v972
        %v989 = vrsqrt.pop %v973
        %v990 = vrsqrt.pop %v974
        %v991 = vrsqrt.pop %v975
        %v992 = vrsqrt.pop %v976
        %v993 = vrsqrt.pop %v977
        %v994 = vrsqrt.pop %v978
        %v995 = vrsqrt.pop %v979
        %v996 = vmul.f32 %v932, %v980
        %v997 = vmul.f32 %v933, %v980
        %v998 = vmul.f32 %v934, %v981
        %v999 = vmul.f32 %v935, %v981
        %v1000 = vmul.f32 %v936, %v982
        %v1001 = vmul.f32 %v937, %v982
        %v1002 = vmul.f32 %v938, %v983
        %v1003 = vmul.f32 %v939, %v983
        %v1004 = vmul.f32 %v940, %v984
        %v1005 = vmul.f32 %v941, %v984
        %v1006 = vmul.f32 %v942, %v985
        %v1007 = vmul.f32 %v943, %v985
        %v1008 = vmul.f32 %v944, %v986
        %v1009 = vmul.f32 %v945, %v986
        %v1010 = vmul.f32 %v946, %v987
        %v1011 = vmul.f32 %v947, %v987
        %v1012 = vmul.f32 %v948, %v988
        %v1013 = vmul.f32 %v949, %v988
        %v1014 = vmul.f32 %v950, %v989
        %v1015 = vmul.f32 %v951, %v989
        %v1016 = vmul.f32 %v952, %v990
        %v1017 = vmul.f32 %v953, %v990
        %v1018 = vmul.f32 %v954, %v991
        %v1019 = vmul.f32 %v955, %v991
        %v1020 = vmul.f32 %v956, %v992
        %v1021 = vmul.f32 %v957, %v992
        %v1022 = vmul.f32 %v958, %v993
        %v1023 = vmul.f32 %v959, %v993
        %v1024 = vmul.f32 %v960, %v994
        %v1025 = vmul.f32 %v961, %v994
        %v1026 = vmul.f32 %v962, %v995
        %v1027 = vmul.f32 %v963, %v995
        %v1029 = vlaneseq
        %v1030 = vshrl.u32 %v1029, 7
        %v1031 = vsub.s32 0, %v1030
        %v1032 = vrot.slane %v722, %v1031
        %v1033 = vlaneseq
        %v1034 = vshrl.u32 %v1033, 7
        %v1035 = vsub.s32 1, %v1034
        %v1036 = vrot.slane %v722, %v1035
        %v1039 = vmul.f32 %v996, %v1032
        %v1040 = vmul.f32 %v997, %v1036
        %v1041 = vmul.f32 %v998, %v1032
        %v1042 = vmul.f32 %v999, %v1036
        %v1043 = vmul.f32 %v1000, %v1032
        %v1044 = vmul.f32 %v1001, %v1036
        %v1045 = vmul.f32 %v1002, %v1032
        %v1046 = vmul.f32 %v1003, %v1036
        %v1047 = vmul.f32 %v1004, %v1032
        %v1048 = vmul.f32 %v1005, %v1036
        %v1049 = vmul.f32 %v1006, %v1032
        %v1050 = vmul.f32 %v1007, %v1036
        %v1051 = vmul.f32 %v1008, %v1032
        %v1052 = vmul.f32 %v1009, %v1036
        %v1053 = vmul.f32 %v1010, %v1032
        %v1054 = vmul.f32 %v1011, %v1036
        %v1055 = vmul.f32 %v1012, %v1032
        %v1056 = vmul.f32 %v1013, %v1036
        %v1057 = vmul.f32 %v1014, %v1032
        %v1058 = vmul.f32 %v1015, %v1036
        %v1059 = vmul.f32 %v1016, %v1032
        %v1060 = vmul.f32 %v1017, %v1036
        %v1061 = vmul.f32 %v1018, %v1032
        %v1062 = vmul.f32 %v1019, %v1036
        %v1063 = vmul.f32 %v1020, %v1032
        %v1064 = vmul.f32 %v1021, %v1036
        %v1065 = vmul.f32 %v1022, %v1032
        %v1066 = vmul.f32 %v1023, %v1036
        %v1067 = vmul.f32 %v1024, %v1032
        %v1068 = vmul.f32 %v1025, %v1036
        %v1069 = vmul.f32 %v1026, %v1032
        %v1070 = vmul.f32 %v1027, %v1036
        %v1072 = vlaneseq
        %v1073 = vshrl.u32 %v1072, 7
        %v1074 = vsub.s32 0, %v1073
        %v1075 = vrot.slane %v723, %v1074
        %v1076 = vlaneseq
        %v1077 = vshrl.u32 %v1076, 7
        %v1078 = vsub.s32 1, %v1077
        %v1079 = vrot.slane %v723, %v1078
        %v1082 = vadd.f32 %v1039, %v1075
        %v1083 = vadd.f32 %v1040, %v1079
        %v1084 = vadd.f32 %v1041, %v1075
        %v1085 = vadd.f32 %v1042, %v1079
        %v1086 = vadd.f32 %v1043, %v1075
        %v1087 = vadd.f32 %v1044, %v1079
        %v1088 = vadd.f32 %v1045, %v1075
        %v1089 = vadd.f32 %v1046, %v1079
        %v1090 = vadd.f32 %v1047, %v1075
        %v1091 = vadd.f32 %v1048, %v1079
        %v1092 = vadd.f32 %v1049, %v1075
        %v1093 = vadd.f32 %v1050, %v1079
        %v1094 = vadd.f32 %v1051, %v1075
        %v1095 = vadd.f32 %v1052, %v1079
        %v1096 = vadd.f32 %v1053, %v1075
        %v1097 = vadd.f32 %v1054, %v1079
        %v1098 = vadd.f32 %v1055, %v1075
        %v1099 = vadd.f32 %v1056, %v1079
        %v1100 = vadd.f32 %v1057, %v1075
        %v1101 = vadd.f32 %v1058, %v1079
        %v1102 = vadd.f32 %v1059, %v1075
        %v1103 = vadd.f32 %v1060, %v1079
        %v1104 = vadd.f32 %v1061, %v1075
        %v1105 = vadd.f32 %v1062, %v1079
        %v1106 = vadd.f32 %v1063, %v1075
        %v1107 = vadd.f32 %v1064, %v1079
        %v1108 = vadd.f32 %v1065, %v1075
        %v1109 = vadd.f32 %v1066, %v1079
        %v1110 = vadd.f32 %v1067, %v1075
        %v1111 = vadd.f32 %v1068, %v1079
        %v1112 = vadd.f32 %v1069, %v1075
        %v1113 = vadd.f32 %v1070, %v1079
        %v1114 = vpack.c.bf16 %v1084, %v1082
        %v1115 = vpack.c.bf16 %v1085, %v1083
        %v1116 = vpack.c.bf16 %v1088, %v1086
        %v1117 = vpack.c.bf16 %v1089, %v1087
        %v1118 = vpack.c.bf16 %v1092, %v1090
        %v1119 = vpack.c.bf16 %v1093, %v1091
        %v1120 = vpack.c.bf16 %v1096, %v1094
        %v1121 = vpack.c.bf16 %v1097, %v1095
        %v1122 = vpack.c.bf16 %v1100, %v1098
        %v1123 = vpack.c.bf16 %v1101, %v1099
        %v1124 = vpack.c.bf16 %v1104, %v1102
        %v1125 = vpack.c.bf16 %v1105, %v1103
        %v1126 = vpack.c.bf16 %v1108, %v1106
        %v1127 = vpack.c.bf16 %v1109, %v1107
        %v1128 = vpack.c.bf16 %v1112, %v1110
        %v1129 = vpack.c.bf16 %v1113, %v1111
        %v1130 = vld [vmem:[#allocation10] sm:$0xff]
        %v1131 = vld [vmem:[#allocation10 + $0x8] sm:$0xff]
        %v1132 = vld [vmem:[#allocation10 + $0x10] sm:$0xff]
        %v1133 = vld [vmem:[#allocation10 + $0x18] sm:$0xff]
        %v1134 = vld [vmem:[#allocation10 + $0x20] sm:$0xff]
        %v1135 = vld [vmem:[#allocation10 + $0x28] sm:$0xff]
        %v1136 = vld [vmem:[#allocation10 + $0x30] sm:$0xff]
        %v1137 = vld [vmem:[#allocation10 + $0x38] sm:$0xff]
        %v1138 = vld [vmem:[#allocation10 + $0x40] sm:$0xff]
        %v1139 = vld [vmem:[#allocation10 + $0x48] sm:$0xff]
        %v1140 = vld [vmem:[#allocation10 + $0x50] sm:$0xff]
        %v1141 = vld [vmem:[#allocation10 + $0x58] sm:$0xff]
        %v1142 = vld [vmem:[#allocation10 + $0x60] sm:$0xff]
        %v1143 = vld [vmem:[#allocation10 + $0x68] sm:$0xff]
        %v1144 = vld [vmem:[#allocation10 + $0x70] sm:$0xff]
        %v1145 = vld [vmem:[#allocation10 + $0x78] sm:$0xff]
        %v1146 = vld [vmem:[#allocation10 + $0x80] sm:$0xff]
        %v1147 = vld [vmem:[#allocation10 + $0x88] sm:$0xff]
        %v1148 = vld [vmem:[#allocation10 + $0x90] sm:$0xff]
        %v1149 = vld [vmem:[#allocation10 + $0x98] sm:$0xff]
        %v1150 = vld [vmem:[#allocation10 + $0xa0] sm:$0xff]
        %v1151 = vld [vmem:[#allocation10 + $0xa8] sm:$0xff]
        %v1152 = vld [vmem:[#allocation10 + $0xb0] sm:$0xff]
        %v1153 = vld [vmem:[#allocation10 + $0xb8] sm:$0xff]
        %v1154 = vld [vmem:[#allocation10 + $0xc0] sm:$0xff]
        %v1155 = vld [vmem:[#allocation10 + $0xc8] sm:$0xff]
        %v1156 = vld [vmem:[#allocation10 + $0xd0] sm:$0xff]
        %v1157 = vld [vmem:[#allocation10 + $0xd8] sm:$0xff]
        %v1158 = vld [vmem:[#allocation10 + $0xe0] sm:$0xff]
        %v1159 = vld [vmem:[#allocation10 + $0xe8] sm:$0xff]
        %v1160 = vld [vmem:[#allocation10 + $0xf0] sm:$0xff]
        %v1161 = vld [vmem:[#allocation10 + $0xf8] sm:$0xff]
        %v1162 = vld [vmem:[#allocation10 + $0x100] sm:$0xff]
        %v1163 = vld [vmem:[#allocation10 + $0x108] sm:$0xff]
        %v1164 = vld [vmem:[#allocation10 + $0x110] sm:$0xff]
        %v1165 = vld [vmem:[#allocation10 + $0x118] sm:$0xff]
        %v1166 = vld [vmem:[#allocation10 + $0x120] sm:$0xff]
        %v1167 = vld [vmem:[#allocation10 + $0x128] sm:$0xff]
        %v1168 = vld [vmem:[#allocation10 + $0x130] sm:$0xff]
        %v1169 = vld [vmem:[#allocation10 + $0x138] sm:$0xff]
        %v1170 = vld [vmem:[#allocation10 + $0x140] sm:$0xff]
        %v1171 = vld [vmem:[#allocation10 + $0x148] sm:$0xff]
        %v1172 = vld [vmem:[#allocation10 + $0x150] sm:$0xff]
        %v1173 = vld [vmem:[#allocation10 + $0x158] sm:$0xff]
        %v1174 = vld [vmem:[#allocation10 + $0x160] sm:$0xff]
        %v1175 = vld [vmem:[#allocation10 + $0x168] sm:$0xff]
        %v1176 = vld [vmem:[#allocation10 + $0x170] sm:$0xff]
        %v1177 = vld [vmem:[#allocation10 + $0x178] sm:$0xff]
        %v1178 = vld [vmem:[#allocation10 + $0x180] sm:$0xff]
        %v1179 = vld [vmem:[#allocation10 + $0x188] sm:$0xff]
        %v1180 = vld [vmem:[#allocation10 + $0x190] sm:$0xff]
        %v1181 = vld [vmem:[#allocation10 + $0x198] sm:$0xff]
        %v1182 = vld [vmem:[#allocation10 + $0x1a0] sm:$0xff]
        %v1183 = vld [vmem:[#allocation10 + $0x1a8] sm:$0xff]
        %v1184 = vld [vmem:[#allocation10 + $0x1b0] sm:$0xff]
        %v1185 = vld [vmem:[#allocation10 + $0x1b8] sm:$0xff]
        %v1186 = vld [vmem:[#allocation10 + $0x1c0] sm:$0xff]
        %v1187 = vld [vmem:[#allocation10 + $0x1c8] sm:$0xff]
        %v1188 = vld [vmem:[#allocation10 + $0x1d0] sm:$0xff]
        %v1189 = vld [vmem:[#allocation10 + $0x1d8] sm:$0xff]
        %v1190 = vld [vmem:[#allocation10 + $0x1e0] sm:$0xff]
        %v1191 = vld [vmem:[#allocation10 + $0x1e8] sm:$0xff]
        %v1192 = vld [vmem:[#allocation10 + $0x1f0] sm:$0xff]
        %v1193 = vld [vmem:[#allocation10 + $0x1f8] sm:$0xff]
        %v1194 = vld [vmem:[%s6] sm:$0xf]
        %v1196 = vlaneseq
        %v1197 = vshrl.u32 %v1196, 7
        %v1198 = vsub.s32 0, %v1197
        %v1199 = vrot.slane %v1194, %v1198
        %v1200 = vlaneseq
        %v1201 = vshrl.u32 %v1200, 7
        %v1202 = vsub.s32 1, %v1201
        %v1203 = vrot.slane %v1194, %v1202
        %v1204 = vlaneseq
        %v1205 = vshrl.u32 %v1204, 7
        %v1206 = vsub.s32 2, %v1205
        %v1207 = vrot.slane %v1194, %v1206
        %v1208 = vlaneseq
        %v1209 = vshrl.u32 %v1208, 7
        %v1210 = vsub.s32 3, %v1209
        %v1211 = vrot.slane %v1194, %v1210
        %v1280 = vunpack.c.l.b16 %v1130
        %v1281 = vunpack.c.h.b16 %v1130
        %v1282 = vunpack.c.l.b16 %v1131
        %v1283 = vunpack.c.h.b16 %v1131
        %v1284 = vunpack.c.l.b16 %v1132
        %v1285 = vunpack.c.h.b16 %v1132
        %v1286 = vunpack.c.l.b16 %v1133
        %v1287 = vunpack.c.h.b16 %v1133
        %v1288 = vunpack.c.l.b16 %v1134
        %v1289 = vunpack.c.h.b16 %v1134
        %v1290 = vunpack.c.l.b16 %v1135
        %v1291 = vunpack.c.h.b16 %v1135
        %v1292 = vunpack.c.l.b16 %v1136
        %v1293 = vunpack.c.h.b16 %v1136
        %v1294 = vunpack.c.l.b16 %v1137
        %v1295 = vunpack.c.h.b16 %v1137
        %v1296 = vunpack.c.l.b16 %v1138
        %v1297 = vunpack.c.h.b16 %v1138
        %v1298 = vunpack.c.l.b16 %v1139
        %v1299 = vunpack.c.h.b16 %v1139
        %v1300 = vunpack.c.l.b16 %v1140
        %v1301 = vunpack.c.h.b16 %v1140
        %v1302 = vunpack.c.l.b16 %v1141
        %v1303 = vunpack.c.h.b16 %v1141
        %v1304 = vunpack.c.l.b16 %v1142
        %v1305 = vunpack.c.h.b16 %v1142
        %v1306 = vunpack.c.l.b16 %v1143
        %v1307 = vunpack.c.h.b16 %v1143
        %v1308 = vunpack.c.l.b16 %v1144
        %v1309 = vunpack.c.h.b16 %v1144
        %v1310 = vunpack.c.l.b16 %v1145
        %v1311 = vunpack.c.h.b16 %v1145
        %v1312 = vunpack.c.l.b16 %v1146
        %v1313 = vunpack.c.h.b16 %v1146
        %v1314 = vunpack.c.l.b16 %v1147
        %v1315 = vunpack.c.h.b16 %v1147
        %v1316 = vunpack.c.l.b16 %v1148
        %v1317 = vunpack.c.h.b16 %v1148
        %v1318 = vunpack.c.l.b16 %v1149
        %v1319 = vunpack.c.h.b16 %v1149
        %v1320 = vunpack.c.l.b16 %v1150
        %v1321 = vunpack.c.h.b16 %v1150
        %v1322 = vunpack.c.l.b16 %v1151
        %v1323 = vunpack.c.h.b16 %v1151
        %v1324 = vunpack.c.l.b16 %v1152
        %v1325 = vunpack.c.h.b16 %v1152
        %v1326 = vunpack.c.l.b16 %v1153
        %v1327 = vunpack.c.h.b16 %v1153
        %v1328 = vunpack.c.l.b16 %v1154
        %v1329 = vunpack.c.h.b16 %v1154
        %v1330 = vunpack.c.l.b16 %v1155
        %v1331 = vunpack.c.h.b16 %v1155
        %v1332 = vunpack.c.l.b16 %v1156
        %v1333 = vunpack.c.h.b16 %v1156
        %v1334 = vunpack.c.l.b16 %v1157
        %v1335 = vunpack.c.h.b16 %v1157
        %v1336 = vunpack.c.l.b16 %v1158
        %v1337 = vunpack.c.h.b16 %v1158
        %v1338 = vunpack.c.l.b16 %v1159
        %v1339 = vunpack.c.h.b16 %v1159
        %v1340 = vunpack.c.l.b16 %v1160
        %v1341 = vunpack.c.h.b16 %v1160
        %v1342 = vunpack.c.l.b16 %v1161
        %v1343 = vunpack.c.h.b16 %v1161
        %v1344 = vunpack.c.l.b16 %v1162
        %v1345 = vunpack.c.h.b16 %v1162
        %v1346 = vunpack.c.l.b16 %v1163
        %v1347 = vunpack.c.h.b16 %v1163
        %v1348 = vunpack.c.l.b16 %v1164
        %v1349 = vunpack.c.h.b16 %v1164
        %v1350 = vunpack.c.l.b16 %v1165
        %v1351 = vunpack.c.h.b16 %v1165
        %v1352 = vunpack.c.l.b16 %v1166
        %v1353 = vunpack.c.h.b16 %v1166
        %v1354 = vunpack.c.l.b16 %v1167
        %v1355 = vunpack.c.h.b16 %v1167
        %v1356 = vunpack.c.l.b16 %v1168
        %v1357 = vunpack.c.h.b16 %v1168
        %v1358 = vunpack.c.l.b16 %v1169
        %v1359 = vunpack.c.h.b16 %v1169
        %v1360 = vunpack.c.l.b16 %v1170
        %v1361 = vunpack.c.h.b16 %v1170
        %v1362 = vunpack.c.l.b16 %v1171
        %v1363 = vunpack.c.h.b16 %v1171
        %v1364 = vunpack.c.l.b16 %v1172
        %v1365 = vunpack.c.h.b16 %v1172
        %v1366 = vunpack.c.l.b16 %v1173
        %v1367 = vunpack.c.h.b16 %v1173
        %v1368 = vunpack.c.l.b16 %v1174
        %v1369 = vunpack.c.h.b16 %v1174
        %v1370 = vunpack.c.l.b16 %v1175
        %v1371 = vunpack.c.h.b16 %v1175
        %v1372 = vunpack.c.l.b16 %v1176
        %v1373 = vunpack.c.h.b16 %v1176
        %v1374 = vunpack.c.l.b16 %v1177
        %v1375 = vunpack.c.h.b16 %v1177
        %v1376 = vunpack.c.l.b16 %v1178
        %v1377 = vunpack.c.h.b16 %v1178
        %v1378 = vunpack.c.l.b16 %v1179
        %v1379 = vunpack.c.h.b16 %v1179
        %v1380 = vunpack.c.l.b16 %v1180
        %v1381 = vunpack.c.h.b16 %v1180
        %v1382 = vunpack.c.l.b16 %v1181
        %v1383 = vunpack.c.h.b16 %v1181
        %v1384 = vunpack.c.l.b16 %v1182
        %v1385 = vunpack.c.h.b16 %v1182
        %v1386 = vunpack.c.l.b16 %v1183
        %v1387 = vunpack.c.h.b16 %v1183
        %v1388 = vunpack.c.l.b16 %v1184
        %v1389 = vunpack.c.h.b16 %v1184
        %v1390 = vunpack.c.l.b16 %v1185
        %v1391 = vunpack.c.h.b16 %v1185
        %v1392 = vunpack.c.l.b16 %v1186
        %v1393 = vunpack.c.h.b16 %v1186
        %v1394 = vunpack.c.l.b16 %v1187
        %v1395 = vunpack.c.h.b16 %v1187
        %v1396 = vunpack.c.l.b16 %v1188
        %v1397 = vunpack.c.h.b16 %v1188
        %v1398 = vunpack.c.l.b16 %v1189
        %v1399 = vunpack.c.h.b16 %v1189
        %v1400 = vunpack.c.l.b16 %v1190
        %v1401 = vunpack.c.h.b16 %v1190
        %v1402 = vunpack.c.l.b16 %v1191
        %v1403 = vunpack.c.h.b16 %v1191
        %v1404 = vunpack.c.l.b16 %v1192
        %v1405 = vunpack.c.h.b16 %v1192
        %v1406 = vunpack.c.l.b16 %v1193
        %v1407 = vunpack.c.h.b16 %v1193
        %v1408 = vpack.c.b16 %v1284, %v1280
        %v1409 = vpack.c.b16 %v1285, %v1281
        %v1410 = vpack.c.b16 %v1286, %v1282
        %v1411 = vpack.c.b16 %v1287, %v1283
        %v1412 = vpack.c.b16 %v1292, %v1288
        %v1413 = vpack.c.b16 %v1293, %v1289
        %v1414 = vpack.c.b16 %v1294, %v1290
        %v1415 = vpack.c.b16 %v1295, %v1291
        %v1416 = vpack.c.b16 %v1300, %v1296
        %v1417 = vpack.c.b16 %v1301, %v1297
        %v1418 = vpack.c.b16 %v1302, %v1298
        %v1419 = vpack.c.b16 %v1303, %v1299
        %v1420 = vpack.c.b16 %v1308, %v1304
        %v1421 = vpack.c.b16 %v1309, %v1305
        %v1422 = vpack.c.b16 %v1310, %v1306
        %v1423 = vpack.c.b16 %v1311, %v1307
        %v1424 = vpack.c.b16 %v1316, %v1312
        %v1425 = vpack.c.b16 %v1317, %v1313
        %v1426 = vpack.c.b16 %v1318, %v1314
        %v1427 = vpack.c.b16 %v1319, %v1315
        %v1428 = vpack.c.b16 %v1324, %v1320
        %v1429 = vpack.c.b16 %v1325, %v1321
        %v1430 = vpack.c.b16 %v1326, %v1322
        %v1431 = vpack.c.b16 %v1327, %v1323
        %v1432 = vpack.c.b16 %v1332, %v1328
        %v1433 = vpack.c.b16 %v1333, %v1329
        %v1434 = vpack.c.b16 %v1334, %v1330
        %v1435 = vpack.c.b16 %v1335, %v1331
        %v1436 = vpack.c.b16 %v1340, %v1336
        %v1437 = vpack.c.b16 %v1341, %v1337
        %v1438 = vpack.c.b16 %v1342, %v1338
        %v1439 = vpack.c.b16 %v1343, %v1339
        %v1440 = vpack.c.b16 %v1348, %v1344
        %v1441 = vpack.c.b16 %v1349, %v1345
        %v1442 = vpack.c.b16 %v1350, %v1346
        %v1443 = vpack.c.b16 %v1351, %v1347
        %v1444 = vpack.c.b16 %v1356, %v1352
        %v1445 = vpack.c.b16 %v1357, %v1353
        %v1446 = vpack.c.b16 %v1358, %v1354
        %v1447 = vpack.c.b16 %v1359, %v1355
        %v1448 = vpack.c.b16 %v1364, %v1360
        %v1449 = vpack.c.b16 %v1365, %v1361
        %v1450 = vpack.c.b16 %v1366, %v1362
        %v1451 = vpack.c.b16 %v1367, %v1363
        %v1452 = vpack.c.b16 %v1372, %v1368
        %v1453 = vpack.c.b16 %v1373, %v1369
        %v1454 = vpack.c.b16 %v1374, %v1370
        %v1455 = vpack.c.b16 %v1375, %v1371
        %v1456 = vpack.c.b16 %v1380, %v1376
        %v1457 = vpack.c.b16 %v1381, %v1377
        %v1458 = vpack.c.b16 %v1382, %v1378
        %v1459 = vpack.c.b16 %v1383, %v1379
        %v1460 = vpack.c.b16 %v1388, %v1384
        %v1461 = vpack.c.b16 %v1389, %v1385
        %v1462 = vpack.c.b16 %v1390, %v1386
        %v1463 = vpack.c.b16 %v1391, %v1387
        %v1464 = vpack.c.b16 %v1396, %v1392
        %v1465 = vpack.c.b16 %v1397, %v1393
        %v1466 = vpack.c.b16 %v1398, %v1394
        %v1467 = vpack.c.b16 %v1399, %v1395
        %v1468 = vpack.c.b16 %v1404, %v1400
        %v1469 = vpack.c.b16 %v1405, %v1401
        %v1470 = vpack.c.b16 %v1406, %v1402
        %v1471 = vpack.c.b16 %v1407, %v1403
        %1536 = vmatprep.subr.bf16.mxu0 %v1437
        %1537 = vmatpush1.bf16.msra.mxu0 %v1436
        %1538 = vmatprep.subr.bf16.mxu0 %v1433
        %1539 = vmatpush1.bf16.msra.mxu0 %v1432
        %1540 = vmatprep.subr.bf16.mxu0 %v1429
        %1541 = vmatpush1.bf16.msra.mxu0 %v1428
        %1542 = vmatprep.subr.bf16.mxu0 %v1425
        %1543 = vmatpush1.bf16.msra.mxu0 %v1424
        %1544 = vmatprep.subr.bf16.mxu0 %v1421
        %1545 = vmatpush1.bf16.msra.mxu0 %v1420
        %1546 = vmatprep.subr.bf16.mxu0 %v1417
        %1547 = vmatpush1.bf16.msra.mxu0 %v1416
        %1548 = vmatprep.subr.bf16.mxu0 %v1413
        %1549 = vmatpush1.bf16.msra.mxu0 %v1412
        %1550 = vmatprep.subr.bf16.mxu0 %v1409
        %1551 = vmatpush1.bf16.msra.mxu0 %v1408
        %1552 = vmatprep.subr.bf16.mxu0 %v1469
        %1553 = vmatpush2.bf16.msra.mxu0 %v1468
        %1554 = vmatprep.subr.bf16.mxu0 %v1465
        %1555 = vmatpush2.bf16.msra.mxu0 %v1464
        %1556 = vmatprep.subr.bf16.mxu0 %v1461
        %1557 = vmatpush2.bf16.msra.mxu0 %v1460
        %1558 = vmatprep.subr.bf16.mxu0 %v1457
        %1559 = vmatpush2.bf16.msra.mxu0 %v1456
        %1560 = vmatprep.subr.bf16.mxu0 %v1453
        %1561 = vmatpush2.bf16.msra.mxu0 %v1452
        %1562 = vmatprep.subr.bf16.mxu0 %v1449
        %1563 = vmatpush2.bf16.msra.mxu0 %v1448
        %1564 = vmatprep.subr.bf16.mxu0 %v1445
        %1565 = vmatpush2.bf16.msra.mxu0 %v1444
        %1566 = vmatprep.subr.bf16.mxu0 %v1441
        %1567 = vmatpush2.bf16.msra.mxu0 %v1440
        %1568 = vmatprep.mubr.bf16.mxu0 %v1115
        %1569 = vmatmul.mubr.bf16.gmra.mxu0 %v1114
        %v1570 = vpop.f32.mrf.mxu0
        %v1571 = vadd.f32 %v1199, %v1570
        %v1572 = vpop.f32.mrf.mxu0
        %v1573 = vadd.f32 %v1203, %v1572
        %v1574 = vpop.f32.mrf.mxu0
        %v1575 = vadd.f32 %v1199, %v1574
        %v1576 = vpop.f32.mrf.mxu0
        %v1577 = vadd.f32 %v1203, %v1576
        %1578 = vmatprep.mubr.bf16.mxu0 %v1117
        %1579 = vmatmul.mubr.bf16.gmra.mxu0 %v1116
        %v1580 = vpop.f32.mrf.mxu0
        %v1581 = vadd.f32 %v1199, %v1580
        %v1582 = vpop.f32.mrf.mxu0
        %v1583 = vadd.f32 %v1203, %v1582
        %v1584 = vpop.f32.mrf.mxu0
        %v1585 = vadd.f32 %v1199, %v1584
        %v1586 = vpop.f32.mrf.mxu0
        %v1587 = vadd.f32 %v1203, %v1586
        %1588 = vmatprep.mubr.bf16.mxu0 %v1119
        %1589 = vmatmul.mubr.bf16.gmra.mxu0 %v1118
        %v1590 = vpop.f32.mrf.mxu0
        %v1591 = vadd.f32 %v1199, %v1590
        %v1592 = vpop.f32.mrf.mxu0
        %v1593 = vadd.f32 %v1203, %v1592
        %v1594 = vpop.f32.mrf.mxu0
        %v1595 = vadd.f32 %v1199, %v1594
        %v1596 = vpop.f32.mrf.mxu0
        %v1597 = vadd.f32 %v1203, %v1596
        %1598 = vmatprep.mubr.bf16.mxu0 %v1121
        %1599 = vmatmul.mubr.bf16.gmra.mxu0 %v1120
        %v1600 = vpop.f32.mrf.mxu0
        %v1601 = vadd.f32 %v1199, %v1600
        %v1602 = vpop.f32.mrf.mxu0
        %v1603 = vadd.f32 %v1203, %v1602
        %v1604 = vpop.f32.mrf.mxu0
        %v1605 = vadd.f32 %v1199, %v1604
        %v1606 = vpop.f32.mrf.mxu0
        %v1607 = vadd.f32 %v1203, %v1606
        %1608 = vmatprep.mubr.bf16.mxu0 %v1123
        %1609 = vmatmul.mubr.bf16.gmra.mxu0 %v1122
        %v1610 = vpop.f32.mrf.mxu0
        %v1611 = vadd.f32 %v1199, %v1610
        %v1612 = vpop.f32.mrf.mxu0
        %v1613 = vadd.f32 %v1203, %v1612
        %v1614 = vpop.f32.mrf.mxu0
        %v1615 = vadd.f32 %v1199, %v1614
        %v1616 = vpop.f32.mrf.mxu0
        %v1617 = vadd.f32 %v1203, %v1616
        %1618 = vmatprep.mubr.bf16.mxu0 %v1125
        %1619 = vmatmul.mubr.bf16.gmra.mxu0 %v1124
        %v1620 = vpop.f32.mrf.mxu0
        %v1621 = vadd.f32 %v1199, %v1620
        %v1622 = vpop.f32.mrf.mxu0
        %v1623 = vadd.f32 %v1203, %v1622
        %v1624 = vpop.f32.mrf.mxu0
        %v1625 = vadd.f32 %v1199, %v1624
        %v1626 = vpop.f32.mrf.mxu0
        %v1627 = vadd.f32 %v1203, %v1626
        %1628 = vmatprep.mubr.bf16.mxu0 %v1127
        %1629 = vmatmul.mubr.bf16.gmra.mxu0 %v1126
        %v1630 = vpop.f32.mrf.mxu0
        %v1631 = vadd.f32 %v1199, %v1630
        %v1632 = vpop.f32.mrf.mxu0
        %v1633 = vadd.f32 %v1203, %v1632
        %v1634 = vpop.f32.mrf.mxu0
        %v1635 = vadd.f32 %v1199, %v1634
        %v1636 = vpop.f32.mrf.mxu0
        %v1637 = vadd.f32 %v1203, %v1636
        %1638 = vmatprep.mubr.bf16.mxu0 %v1129
        %1639 = vmatmul.mubr.bf16.gmra.mxu0 %v1128
        %v1640 = vpop.f32.mrf.mxu0
        %v1641 = vadd.f32 %v1199, %v1640
        %v1642 = vpop.f32.mrf.mxu0
        %v1643 = vadd.f32 %v1203, %v1642
        %v1644 = vpop.f32.mrf.mxu0
        %v1645 = vadd.f32 %v1199, %v1644
        %v1646 = vpop.f32.mrf.mxu0
        %v1647 = vadd.f32 %v1203, %v1646
        %1648 = vdwg.mxu0
        %1649 = vmatprep.subr.bf16.mxu0 %v1439
        %1650 = vmatpush1.bf16.msra.mxu0 %v1438
        %1651 = vmatprep.subr.bf16.mxu0 %v1435
        %1652 = vmatpush1.bf16.msra.mxu0 %v1434
        %1653 = vmatprep.subr.bf16.mxu0 %v1431
        %1654 = vmatpush1.bf16.msra.mxu0 %v1430
        %1655 = vmatprep.subr.bf16.mxu0 %v1427
        %1656 = vmatpush1.bf16.msra.mxu0 %v1426
        %1657 = vmatprep.subr.bf16.mxu0 %v1423
        %1658 = vmatpush1.bf16.msra.mxu0 %v1422
        %1659 = vmatprep.subr.bf16.mxu0 %v1419
        %1660 = vmatpush1.bf16.msra.mxu0 %v1418
        %1661 = vmatprep.subr.bf16.mxu0 %v1415
        %1662 = vmatpush1.bf16.msra.mxu0 %v1414
        %1663 = vmatprep.subr.bf16.mxu0 %v1411
        %1664 = vmatpush1.bf16.msra.mxu0 %v1410
        %1665 = vmatprep.subr.bf16.mxu0 %v1471
        %1666 = vmatpush2.bf16.msra.mxu0 %v1470
        %1667 = vmatprep.subr.bf16.mxu0 %v1467
        %1668 = vmatpush2.bf16.msra.mxu0 %v1466
        %1669 = vmatprep.subr.bf16.mxu0 %v1463
        %1670 = vmatpush2.bf16.msra.mxu0 %v1462
        %1671 = vmatprep.subr.bf16.mxu0 %v1459
        %1672 = vmatpush2.bf16.msra.mxu0 %v1458
        %1673 = vmatprep.subr.bf16.mxu0 %v1455
        %1674 = vmatpush2.bf16.msra.mxu0 %v1454
        %1675 = vmatprep.subr.bf16.mxu0 %v1451
        %1676 = vmatpush2.bf16.msra.mxu0 %v1450
        %1677 = vmatprep.subr.bf16.mxu0 %v1447
        %1678 = vmatpush2.bf16.msra.mxu0 %v1446
        %1679 = vmatprep.subr.bf16.mxu0 %v1443
        %1680 = vmatpush2.bf16.msra.mxu0 %v1442
        %1681 = vmatprep.mubr.bf16.mxu0 %v1115
        %1682 = vmatmul.mubr.bf16.gmra.mxu0 %v1114
        %v1683 = vpop.f32.mrf.mxu0
        %v1684 = vadd.f32 %v1207, %v1683
        %v1685 = vpop.f32.mrf.mxu0
        %v1686 = vadd.f32 %v1211, %v1685
        %v1687 = vpop.f32.mrf.mxu0
        %v1688 = vadd.f32 %v1207, %v1687
        %v1689 = vpop.f32.mrf.mxu0
        %v1690 = vadd.f32 %v1211, %v1689
        %1691 = vmatprep.mubr.bf16.mxu0 %v1117
        %1692 = vmatmul.mubr.bf16.gmra.mxu0 %v1116
        %v1693 = vpop.f32.mrf.mxu0
        %v1694 = vadd.f32 %v1207, %v1693
        %v1695 = vpop.f32.mrf.mxu0
        %v1696 = vadd.f32 %v1211, %v1695
        %v1697 = vpop.f32.mrf.mxu0
        %v1698 = vadd.f32 %v1207, %v1697
        %v1699 = vpop.f32.mrf.mxu0
        %v1700 = vadd.f32 %v1211, %v1699
        %1701 = vmatprep.mubr.bf16.mxu0 %v1119
        %1702 = vmatmul.mubr.bf16.gmra.mxu0 %v1118
        %v1703 = vpop.f32.mrf.mxu0
        %v1704 = vadd.f32 %v1207, %v1703
        %v1705 = vpop.f32.mrf.mxu0
        %v1706 = vadd.f32 %v1211, %v1705
        %v1707 = vpop.f32.mrf.mxu0
        %v1708 = vadd.f32 %v1207, %v1707
        %v1709 = vpop.f32.mrf.mxu0
        %v1710 = vadd.f32 %v1211, %v1709
        %1711 = vmatprep.mubr.bf16.mxu0 %v1121
        %1712 = vmatmul.mubr.bf16.gmra.mxu0 %v1120
        %v1713 = vpop.f32.mrf.mxu0
        %v1714 = vadd.f32 %v1207, %v1713
        %v1715 = vpop.f32.mrf.mxu0
        %v1716 = vadd.f32 %v1211, %v1715
        %v1717 = vpop.f32.mrf.mxu0
        %v1718 = vadd.f32 %v1207, %v1717
        %v1719 = vpop.f32.mrf.mxu0
        %v1720 = vadd.f32 %v1211, %v1719
        %1721 = vmatprep.mubr.bf16.mxu0 %v1123
        %1722 = vmatmul.mubr.bf16.gmra.mxu0 %v1122
        %v1723 = vpop.f32.mrf.mxu0
        %v1724 = vadd.f32 %v1207, %v1723
        %v1725 = vpop.f32.mrf.mxu0
        %v1726 = vadd.f32 %v1211, %v1725
        %v1727 = vpop.f32.mrf.mxu0
        %v1728 = vadd.f32 %v1207, %v1727
        %v1729 = vpop.f32.mrf.mxu0
        %v1730 = vadd.f32 %v1211, %v1729
        %1731 = vmatprep.mubr.bf16.mxu0 %v1125
        %1732 = vmatmul.mubr.bf16.gmra.mxu0 %v1124
        %v1733 = vpop.f32.mrf.mxu0
        %v1734 = vadd.f32 %v1207, %v1733
        %v1735 = vpop.f32.mrf.mxu0
        %v1736 = vadd.f32 %v1211, %v1735
        %v1737 = vpop.f32.mrf.mxu0
        %v1738 = vadd.f32 %v1207, %v1737
        %v1739 = vpop.f32.mrf.mxu0
        %v1740 = vadd.f32 %v1211, %v1739
        %1741 = vmatprep.mubr.bf16.mxu0 %v1127
        %1742 = vmatmul.mubr.bf16.gmra.mxu0 %v1126
        %v1743 = vpop.f32.mrf.mxu0
        %v1744 = vadd.f32 %v1207, %v1743
        %v1745 = vpop.f32.mrf.mxu0
        %v1746 = vadd.f32 %v1211, %v1745
        %v1747 = vpop.f32.mrf.mxu0
        %v1748 = vadd.f32 %v1207, %v1747
        %v1749 = vpop.f32.mrf.mxu0
        %v1750 = vadd.f32 %v1211, %v1749
        %1751 = vmatprep.mubr.bf16.mxu0 %v1129
        %1752 = vmatmul.mubr.bf16.gmra.mxu0 %v1128
        %v1753 = vpop.f32.mrf.mxu0
        %v1754 = vadd.f32 %v1207, %v1753
        %v1755 = vpop.f32.mrf.mxu0
        %v1756 = vadd.f32 %v1211, %v1755
        %v1757 = vpop.f32.mrf.mxu0
        %v1758 = vadd.f32 %v1207, %v1757
        %v1759 = vpop.f32.mrf.mxu0
        %v1760 = vadd.f32 %v1211, %v1759
        %1761 = vdwg.mxu0
        %v1762 = vmax.f32 %v1571, 0.0
        %v1763 = vmax.f32 %v1573, 0.0
        %v1764 = vmax.f32 %v1684, 0.0
        %v1765 = vmax.f32 %v1686, 0.0
        %v1766 = vmax.f32 %v1575, 0.0
        %v1767 = vmax.f32 %v1577, 0.0
        %v1768 = vmax.f32 %v1688, 0.0
        %v1769 = vmax.f32 %v1690, 0.0
        %v1770 = vmax.f32 %v1581, 0.0
        %v1771 = vmax.f32 %v1583, 0.0
        %v1772 = vmax.f32 %v1694, 0.0
        %v1773 = vmax.f32 %v1696, 0.0
        %v1774 = vmax.f32 %v1585, 0.0
        %v1775 = vmax.f32 %v1587, 0.0
        %v1776 = vmax.f32 %v1698, 0.0
        %v1777 = vmax.f32 %v1700, 0.0
        %v1778 = vmax.f32 %v1591, 0.0
        %v1779 = vmax.f32 %v1593, 0.0
        %v1780 = vmax.f32 %v1704, 0.0
        %v1781 = vmax.f32 %v1706, 0.0
        %v1782 = vmax.f32 %v1595, 0.0
        %v1783 = vmax.f32 %v1597, 0.0
        %v1784 = vmax.f32 %v1708, 0.0
        %v1785 = vmax.f32 %v1710, 0.0
        %v1786 = vmax.f32 %v1601, 0.0
        %v1787 = vmax.f32 %v1603, 0.0
        %v1788 = vmax.f32 %v1714, 0.0
        %v1789 = vmax.f32 %v1716, 0.0
        %v1790 = vmax.f32 %v1605, 0.0
        %v1791 = vmax.f32 %v1607, 0.0
        %v1792 = vmax.f32 %v1718, 0.0
        %v1793 = vmax.f32 %v1720, 0.0
        %v1794 = vmax.f32 %v1611, 0.0
        %v1795 = vmax.f32 %v1613, 0.0
        %v1796 = vmax.f32 %v1724, 0.0
        %v1797 = vmax.f32 %v1726, 0.0
        %v1798 = vmax.f32 %v1615, 0.0
        %v1799 = vmax.f32 %v1617, 0.0
        %v1800 = vmax.f32 %v1728, 0.0
        %v1801 = vmax.f32 %v1730, 0.0
        %v1802 = vmax.f32 %v1621, 0.0
        %v1803 = vmax.f32 %v1623, 0.0
        %v1804 = vmax.f32 %v1734, 0.0
        %v1805 = vmax.f32 %v1736, 0.0
        %v1806 = vmax.f32 %v1625, 0.0
        %v1807 = vmax.f32 %v1627, 0.0
        %v1808 = vmax.f32 %v1738, 0.0
        %v1809 = vmax.f32 %v1740, 0.0
        %v1810 = vmax.f32 %v1631, 0.0
        %v1811 = vmax.f32 %v1633, 0.0
        %v1812 = vmax.f32 %v1744, 0.0
        %v1813 = vmax.f32 %v1746, 0.0
        %v1814 = vmax.f32 %v1635, 0.0
        %v1815 = vmax.f32 %v1637, 0.0
        %v1816 = vmax.f32 %v1748, 0.0
        %v1817 = vmax.f32 %v1750, 0.0
        %v1818 = vmax.f32 %v1641, 0.0
        %v1819 = vmax.f32 %v1643, 0.0
        %v1820 = vmax.f32 %v1754, 0.0
        %v1821 = vmax.f32 %v1756, 0.0
        %v1822 = vmax.f32 %v1645, 0.0
        %v1823 = vmax.f32 %v1647, 0.0
        %v1824 = vmax.f32 %v1758, 0.0
        %v1825 = vmax.f32 %v1760, 0.0
        %v1826 = vpack.c.bf16 %v1766, %v1762
        %v1827 = vpack.c.bf16 %v1767, %v1763
        %v1828 = vpack.c.bf16 %v1768, %v1764
        %v1829 = vpack.c.bf16 %v1769, %v1765
        %v1830 = vpack.c.bf16 %v1774, %v1770
        %v1831 = vpack.c.bf16 %v1775, %v1771
        %v1832 = vpack.c.bf16 %v1776, %v1772
        %v1833 = vpack.c.bf16 %v1777, %v1773
        %v1834 = vpack.c.bf16 %v1782, %v1778
        %v1835 = vpack.c.bf16 %v1783, %v1779
        %v1836 = vpack.c.bf16 %v1784, %v1780
        %v1837 = vpack.c.bf16 %v1785, %v1781
        %v1838 = vpack.c.bf16 %v1790, %v1786
        %v1839 = vpack.c.bf16 %v1791, %v1787
        %v1840 = vpack.c.bf16 %v1792, %v1788
        %v1841 = vpack.c.bf16 %v1793, %v1789
        %v1842 = vpack.c.bf16 %v1798, %v1794
        %v1843 = vpack.c.bf16 %v1799, %v1795
        %v1844 = vpack.c.bf16 %v1800, %v1796
        %v1845 = vpack.c.bf16 %v1801, %v1797
        %v1846 = vpack.c.bf16 %v1806, %v1802
        %v1847 = vpack.c.bf16 %v1807, %v1803
        %v1848 = vpack.c.bf16 %v1808, %v1804
        %v1849 = vpack.c.bf16 %v1809, %v1805
        %v1850 = vpack.c.bf16 %v1814, %v1810
        %v1851 = vpack.c.bf16 %v1815, %v1811
        %v1852 = vpack.c.bf16 %v1816, %v1812
        %v1853 = vpack.c.bf16 %v1817, %v1813
        %v1854 = vpack.c.bf16 %v1822, %v1818
        %v1855 = vpack.c.bf16 %v1823, %v1819
        %v1856 = vpack.c.bf16 %v1824, %v1820
        %v1857 = vpack.c.bf16 %v1825, %v1821
        %v1858 = vld [vmem:[#allocation11] sm:$0xff]
        %v1859 = vld [vmem:[#allocation11 + $0x8] sm:$0xff]
        %v1860 = vld [vmem:[#allocation11 + $0x10] sm:$0xff]
        %v1861 = vld [vmem:[#allocation11 + $0x18] sm:$0xff]
        %v1862 = vld [vmem:[#allocation11 + $0x20] sm:$0xff]
        %v1863 = vld [vmem:[#allocation11 + $0x28] sm:$0xff]
        %v1864 = vld [vmem:[#allocation11 + $0x30] sm:$0xff]
        %v1865 = vld [vmem:[#allocation11 + $0x38] sm:$0xff]
        %v1866 = vld [vmem:[#allocation11 + $0x40] sm:$0xff]
        %v1867 = vld [vmem:[#allocation11 + $0x48] sm:$0xff]
        %v1868 = vld [vmem:[#allocation11 + $0x50] sm:$0xff]
        %v1869 = vld [vmem:[#allocation11 + $0x58] sm:$0xff]
        %v1870 = vld [vmem:[#allocation11 + $0x60] sm:$0xff]
        %v1871 = vld [vmem:[#allocation11 + $0x68] sm:$0xff]
        %v1872 = vld [vmem:[#allocation11 + $0x70] sm:$0xff]
        %v1873 = vld [vmem:[#allocation11 + $0x78] sm:$0xff]
        %v1874 = vld [vmem:[#allocation11 + $0x80] sm:$0xff]
        %v1875 = vld [vmem:[#allocation11 + $0x88] sm:$0xff]
        %v1876 = vld [vmem:[#allocation11 + $0x90] sm:$0xff]
        %v1877 = vld [vmem:[#allocation11 + $0x98] sm:$0xff]
        %v1878 = vld [vmem:[#allocation11 + $0xa0] sm:$0xff]
        %v1879 = vld [vmem:[#allocation11 + $0xa8] sm:$0xff]
        %v1880 = vld [vmem:[#allocation11 + $0xb0] sm:$0xff]
        %v1881 = vld [vmem:[#allocation11 + $0xb8] sm:$0xff]
        %v1882 = vld [vmem:[#allocation11 + $0xc0] sm:$0xff]
        %v1883 = vld [vmem:[#allocation11 + $0xc8] sm:$0xff]
        %v1884 = vld [vmem:[#allocation11 + $0xd0] sm:$0xff]
        %v1885 = vld [vmem:[#allocation11 + $0xd8] sm:$0xff]
        %v1886 = vld [vmem:[#allocation11 + $0xe0] sm:$0xff]
        %v1887 = vld [vmem:[#allocation11 + $0xe8] sm:$0xff]
        %v1888 = vld [vmem:[#allocation11 + $0xf0] sm:$0xff]
        %v1889 = vld [vmem:[#allocation11 + $0xf8] sm:$0xff]
        %v1890 = vld [vmem:[#allocation11 + $0x100] sm:$0xff]
        %v1891 = vld [vmem:[#allocation11 + $0x108] sm:$0xff]
        %v1892 = vld [vmem:[#allocation11 + $0x110] sm:$0xff]
        %v1893 = vld [vmem:[#allocation11 + $0x118] sm:$0xff]
        %v1894 = vld [vmem:[#allocation11 + $0x120] sm:$0xff]
        %v1895 = vld [vmem:[#allocation11 + $0x128] sm:$0xff]
        %v1896 = vld [vmem:[#allocation11 + $0x130] sm:$0xff]
        %v1897 = vld [vmem:[#allocation11 + $0x138] sm:$0xff]
        %v1898 = vld [vmem:[#allocation11 + $0x140] sm:$0xff]
        %v1899 = vld [vmem:[#allocation11 + $0x148] sm:$0xff]
        %v1900 = vld [vmem:[#allocation11 + $0x150] sm:$0xff]
        %v1901 = vld [vmem:[#allocation11 + $0x158] sm:$0xff]
        %v1902 = vld [vmem:[#allocation11 + $0x160] sm:$0xff]
        %v1903 = vld [vmem:[#allocation11 + $0x168] sm:$0xff]
        %v1904 = vld [vmem:[#allocation11 + $0x170] sm:$0xff]
        %v1905 = vld [vmem:[#allocation11 + $0x178] sm:$0xff]
        %v1906 = vld [vmem:[#allocation11 + $0x180] sm:$0xff]
        %v1907 = vld [vmem:[#allocation11 + $0x188] sm:$0xff]
        %v1908 = vld [vmem:[#allocation11 + $0x190] sm:$0xff]
        %v1909 = vld [vmem:[#allocation11 + $0x198] sm:$0xff]
        %v1910 = vld [vmem:[#allocation11 + $0x1a0] sm:$0xff]
        %v1911 = vld [vmem:[#allocation11 + $0x1a8] sm:$0xff]
        %v1912 = vld [vmem:[#allocation11 + $0x1b0] sm:$0xff]
        %v1913 = vld [vmem:[#allocation11 + $0x1b8] sm:$0xff]
        %v1914 = vld [vmem:[#allocation11 + $0x1c0] sm:$0xff]
        %v1915 = vld [vmem:[#allocation11 + $0x1c8] sm:$0xff]
        %v1916 = vld [vmem:[#allocation11 + $0x1d0] sm:$0xff]
        %v1917 = vld [vmem:[#allocation11 + $0x1d8] sm:$0xff]
        %v1918 = vld [vmem:[#allocation11 + $0x1e0] sm:$0xff]
        %v1919 = vld [vmem:[#allocation11 + $0x1e8] sm:$0xff]
        %v1920 = vld [vmem:[#allocation11 + $0x1f0] sm:$0xff]
        %v1921 = vld [vmem:[#allocation11 + $0x1f8] sm:$0xff]
        %v1922 = vld [vmem:[%s8] sm:$0x3]
        %v1924 = vlaneseq
        %v1925 = vshrl.u32 %v1924, 7
        %v1926 = vsub.s32 0, %v1925
        %v1927 = vrot.slane %v1922, %v1926
        %v1928 = vlaneseq
        %v1929 = vshrl.u32 %v1928, 7
        %v1930 = vsub.s32 1, %v1929
        %v1931 = vrot.slane %v1922, %v1930
        %v1998 = vunpack.c.l.b16 %v1858
        %v1999 = vunpack.c.h.b16 %v1858
        %v2000 = vunpack.c.l.b16 %v1859
        %v2001 = vunpack.c.h.b16 %v1859
        %v2002 = vunpack.c.l.b16 %v1860
        %v2003 = vunpack.c.h.b16 %v1860
        %v2004 = vunpack.c.l.b16 %v1861
        %v2005 = vunpack.c.h.b16 %v1861
        %v2006 = vunpack.c.l.b16 %v1862
        %v2007 = vunpack.c.h.b16 %v1862
        %v2008 = vunpack.c.l.b16 %v1863
        %v2009 = vunpack.c.h.b16 %v1863
        %v2010 = vunpack.c.l.b16 %v1864
        %v2011 = vunpack.c.h.b16 %v1864
        %v2012 = vunpack.c.l.b16 %v1865
        %v2013 = vunpack.c.h.b16 %v1865
        %v2014 = vunpack.c.l.b16 %v1866
        %v2015 = vunpack.c.h.b16 %v1866
        %v2016 = vunpack.c.l.b16 %v1867
        %v2017 = vunpack.c.h.b16 %v1867
        %v2018 = vunpack.c.l.b16 %v1868
        %v2019 = vunpack.c.h.b16 %v1868
        %v2020 = vunpack.c.l.b16 %v1869
        %v2021 = vunpack.c.h.b16 %v1869
        %v2022 = vunpack.c.l.b16 %v1870
        %v2023 = vunpack.c.h.b16 %v1870
        %v2024 = vunpack.c.l.b16 %v1871
        %v2025 = vunpack.c.h.b16 %v1871
        %v2026 = vunpack.c.l.b16 %v1872
        %v2027 = vunpack.c.h.b16 %v1872
        %v2028 = vunpack.c.l.b16 %v1873
        %v2029 = vunpack.c.h.b16 %v1873
        %v2030 = vunpack.c.l.b16 %v1874
        %v2031 = vunpack.c.h.b16 %v1874
        %v2032 = vunpack.c.l.b16 %v1875
        %v2033 = vunpack.c.h.b16 %v1875
        %v2034 = vunpack.c.l.b16 %v1876
        %v2035 = vunpack.c.h.b16 %v1876
        %v2036 = vunpack.c.l.b16 %v1877
        %v2037 = vunpack.c.h.b16 %v1877
        %v2038 = vunpack.c.l.b16 %v1878
        %v2039 = vunpack.c.h.b16 %v1878
        %v2040 = vunpack.c.l.b16 %v1879
        %v2041 = vunpack.c.h.b16 %v1879
        %v2042 = vunpack.c.l.b16 %v1880
        %v2043 = vunpack.c.h.b16 %v1880
        %v2044 = vunpack.c.l.b16 %v1881
        %v2045 = vunpack.c.h.b16 %v1881
        %v2046 = vunpack.c.l.b16 %v1882
        %v2047 = vunpack.c.h.b16 %v1882
        %v2048 = vunpack.c.l.b16 %v1883
        %v2049 = vunpack.c.h.b16 %v1883
        %v2050 = vunpack.c.l.b16 %v1884
        %v2051 = vunpack.c.h.b16 %v1884
        %v2052 = vunpack.c.l.b16 %v1885
        %v2053 = vunpack.c.h.b16 %v1885
        %v2054 = vunpack.c.l.b16 %v1886
        %v2055 = vunpack.c.h.b16 %v1886
        %v2056 = vunpack.c.l.b16 %v1887
        %v2057 = vunpack.c.h.b16 %v1887
        %v2058 = vunpack.c.l.b16 %v1888
        %v2059 = vunpack.c.h.b16 %v1888
        %v2060 = vunpack.c.l.b16 %v1889
        %v2061 = vunpack.c.h.b16 %v1889
        %v2062 = vunpack.c.l.b16 %v1890
        %v2063 = vunpack.c.h.b16 %v1890
        %v2064 = vunpack.c.l.b16 %v1891
        %v2065 = vunpack.c.h.b16 %v1891
        %v2066 = vunpack.c.l.b16 %v1892
        %v2067 = vunpack.c.h.b16 %v1892
        %v2068 = vunpack.c.l.b16 %v1893
        %v2069 = vunpack.c.h.b16 %v1893
        %v2070 = vunpack.c.l.b16 %v1894
        %v2071 = vunpack.c.h.b16 %v1894
        %v2072 = vunpack.c.l.b16 %v1895
        %v2073 = vunpack.c.h.b16 %v1895
        %v2074 = vunpack.c.l.b16 %v1896
        %v2075 = vunpack.c.h.b16 %v1896
        %v2076 = vunpack.c.l.b16 %v1897
        %v2077 = vunpack.c.h.b16 %v1897
        %v2078 = vunpack.c.l.b16 %v1898
        %v2079 = vunpack.c.h.b16 %v1898
        %v2080 = vunpack.c.l.b16 %v1899
        %v2081 = vunpack.c.h.b16 %v1899
        %v2082 = vunpack.c.l.b16 %v1900
        %v2083 = vunpack.c.h.b16 %v1900
        %v2084 = vunpack.c.l.b16 %v1901
        %v2085 = vunpack.c.h.b16 %v1901
        %v2086 = vunpack.c.l.b16 %v1902
        %v2087 = vunpack.c.h.b16 %v1902
        %v2088 = vunpack.c.l.b16 %v1903
        %v2089 = vunpack.c.h.b16 %v1903
        %v2090 = vunpack.c.l.b16 %v1904
        %v2091 = vunpack.c.h.b16 %v1904
        %v2092 = vunpack.c.l.b16 %v1905
        %v2093 = vunpack.c.h.b16 %v1905
        %v2094 = vunpack.c.l.b16 %v1906
        %v2095 = vunpack.c.h.b16 %v1906
        %v2096 = vunpack.c.l.b16 %v1907
        %v2097 = vunpack.c.h.b16 %v1907
        %v2098 = vunpack.c.l.b16 %v1908
        %v2099 = vunpack.c.h.b16 %v1908
        %v2100 = vunpack.c.l.b16 %v1909
        %v2101 = vunpack.c.h.b16 %v1909
        %v2102 = vunpack.c.l.b16 %v1910
        %v2103 = vunpack.c.h.b16 %v1910
        %v2104 = vunpack.c.l.b16 %v1911
        %v2105 = vunpack.c.h.b16 %v1911
        %v2106 = vunpack.c.l.b16 %v1912
        %v2107 = vunpack.c.h.b16 %v1912
        %v2108 = vunpack.c.l.b16 %v1913
        %v2109 = vunpack.c.h.b16 %v1913
        %v2110 = vunpack.c.l.b16 %v1914
        %v2111 = vunpack.c.h.b16 %v1914
        %v2112 = vunpack.c.l.b16 %v1915
        %v2113 = vunpack.c.h.b16 %v1915
        %v2114 = vunpack.c.l.b16 %v1916
        %v2115 = vunpack.c.h.b16 %v1916
        %v2116 = vunpack.c.l.b16 %v1917
        %v2117 = vunpack.c.h.b16 %v1917
        %v2118 = vunpack.c.l.b16 %v1918
        %v2119 = vunpack.c.h.b16 %v1918
        %v2120 = vunpack.c.l.b16 %v1919
        %v2121 = vunpack.c.h.b16 %v1919
        %v2122 = vunpack.c.l.b16 %v1920
        %v2123 = vunpack.c.h.b16 %v1920
        %v2124 = vunpack.c.l.b16 %v1921
        %v2125 = vunpack.c.h.b16 %v1921
        %v2126 = vpack.c.b16 %v2000, %v1998
        %v2127 = vpack.c.b16 %v2001, %v1999
        %v2128 = vpack.c.b16 %v2004, %v2002
        %v2129 = vpack.c.b16 %v2005, %v2003
        %v2130 = vpack.c.b16 %v2008, %v2006
        %v2131 = vpack.c.b16 %v2009, %v2007
        %v2132 = vpack.c.b16 %v2012, %v2010
        %v2133 = vpack.c.b16 %v2013, %v2011
        %v2134 = vpack.c.b16 %v2016, %v2014
        %v2135 = vpack.c.b16 %v2017, %v2015
        %v2136 = vpack.c.b16 %v2020, %v2018
        %v2137 = vpack.c.b16 %v2021, %v2019
        %v2138 = vpack.c.b16 %v2024, %v2022
        %v2139 = vpack.c.b16 %v2025, %v2023
        %v2140 = vpack.c.b16 %v2028, %v2026
        %v2141 = vpack.c.b16 %v2029, %v2027
        %v2142 = vpack.c.b16 %v2032, %v2030
        %v2143 = vpack.c.b16 %v2033, %v2031
        %v2144 = vpack.c.b16 %v2036, %v2034
        %v2145 = vpack.c.b16 %v2037, %v2035
        %v2146 = vpack.c.b16 %v2040, %v2038
        %v2147 = vpack.c.b16 %v2041, %v2039
        %v2148 = vpack.c.b16 %v2044, %v2042
        %v2149 = vpack.c.b16 %v2045, %v2043
        %v2150 = vpack.c.b16 %v2048, %v2046
        %v2151 = vpack.c.b16 %v2049, %v2047
        %v2152 = vpack.c.b16 %v2052, %v2050
        %v2153 = vpack.c.b16 %v2053, %v2051
        %v2154 = vpack.c.b16 %v2056, %v2054
        %v2155 = vpack.c.b16 %v2057, %v2055
        %v2156 = vpack.c.b16 %v2060, %v2058
        %v2157 = vpack.c.b16 %v2061, %v2059
        %v2158 = vpack.c.b16 %v2064, %v2062
        %v2159 = vpack.c.b16 %v2065, %v2063
        %v2160 = vpack.c.b16 %v2068, %v2066
        %v2161 = vpack.c.b16 %v2069, %v2067
        %v2162 = vpack.c.b16 %v2072, %v2070
        %v2163 = vpack.c.b16 %v2073, %v2071
        %v2164 = vpack.c.b16 %v2076, %v2074
        %v2165 = vpack.c.b16 %v2077, %v2075
        %v2166 = vpack.c.b16 %v2080, %v2078
        %v2167 = vpack.c.b16 %v2081, %v2079
        %v2168 = vpack.c.b16 %v2084, %v2082
        %v2169 = vpack.c.b16 %v2085, %v2083
        %v2170 = vpack.c.b16 %v2088, %v2086
        %v2171 = vpack.c.b16 %v2089, %v2087
        %v2172 = vpack.c.b16 %v2092, %v2090
        %v2173 = vpack.c.b16 %v2093, %v2091
        %v2174 = vpack.c.b16 %v2096, %v2094
        %v2175 = vpack.c.b16 %v2097, %v2095
        %v2176 = vpack.c.b16 %v2100, %v2098
        %v2177 = vpack.c.b16 %v2101, %v2099
        %v2178 = vpack.c.b16 %v2104, %v2102
        %v2179 = vpack.c.b16 %v2105, %v2103
        %v2180 = vpack.c.b16 %v2108, %v2106
        %v2181 = vpack.c.b16 %v2109, %v2107
        %v2182 = vpack.c.b16 %v2112, %v2110
        %v2183 = vpack.c.b16 %v2113, %v2111
        %v2184 = vpack.c.b16 %v2116, %v2114
        %v2185 = vpack.c.b16 %v2117, %v2115
        %v2186 = vpack.c.b16 %v2120, %v2118
        %v2187 = vpack.c.b16 %v2121, %v2119
        %v2188 = vpack.c.b16 %v2124, %v2122
        %v2189 = vpack.c.b16 %v2125, %v2123
        %2254 = vmatprep.subr.bf16.mxu0 %v2141
        %2255 = vmatpush1.bf16.msra.mxu0 %v2140
        %2256 = vmatprep.subr.bf16.mxu0 %v2139
        %2257 = vmatpush1.bf16.msra.mxu0 %v2138
        %2258 = vmatprep.subr.bf16.mxu0 %v2137
        %2259 = vmatpush1.bf16.msra.mxu0 %v2136
        %2260 = vmatprep.subr.bf16.mxu0 %v2135
        %2261 = vmatpush1.bf16.msra.mxu0 %v2134
        %2262 = vmatprep.subr.bf16.mxu0 %v2133
        %2263 = vmatpush1.bf16.msra.mxu0 %v2132
        %2264 = vmatprep.subr.bf16.mxu0 %v2131
        %2265 = vmatpush1.bf16.msra.mxu0 %v2130
        %2266 = vmatprep.subr.bf16.mxu0 %v2129
        %2267 = vmatpush1.bf16.msra.mxu0 %v2128
        %2268 = vmatprep.subr.bf16.mxu0 %v2127
        %2269 = vmatpush1.bf16.msra.mxu0 %v2126
        %2270 = vmatprep.subr.bf16.mxu0 %v2157
        %2271 = vmatpush2.bf16.msra.mxu0 %v2156
        %2272 = vmatprep.subr.bf16.mxu0 %v2155
        %2273 = vmatpush2.bf16.msra.mxu0 %v2154
        %2274 = vmatprep.subr.bf16.mxu0 %v2153
        %2275 = vmatpush2.bf16.msra.mxu0 %v2152
        %2276 = vmatprep.subr.bf16.mxu0 %v2151
        %2277 = vmatpush2.bf16.msra.mxu0 %v2150
        %2278 = vmatprep.subr.bf16.mxu0 %v2149
        %2279 = vmatpush2.bf16.msra.mxu0 %v2148
        %2280 = vmatprep.subr.bf16.mxu0 %v2147
        %2281 = vmatpush2.bf16.msra.mxu0 %v2146
        %2282 = vmatprep.subr.bf16.mxu0 %v2145
        %2283 = vmatpush2.bf16.msra.mxu0 %v2144
        %2284 = vmatprep.subr.bf16.mxu0 %v2143
        %2285 = vmatpush2.bf16.msra.mxu0 %v2142
        %2286 = vmatprep.mubr.bf16.mxu0 %v1827
        %2287 = vmatmul.mubr.bf16.gmra.mxu0 %v1826
        %v2288 = vpop.f32.mrf.mxu0
        %v2289 = vadd.f32 %v1927, %v2288
        %v2290 = vpop.f32.mrf.mxu0
        %v2291 = vadd.f32 %v1931, %v2290
        %v2292 = vpop.f32.mrf.mxu0
        %v2293 = vadd.f32 %v1927, %v2292
        %v2294 = vpop.f32.mrf.mxu0
        %v2295 = vadd.f32 %v1931, %v2294
        %2296 = vmatprep.mubr.bf16.mxu0 %v1831
        %2297 = vmatmul.mubr.bf16.gmra.mxu0 %v1830
        %v2298 = vpop.f32.mrf.mxu0
        %v2299 = vadd.f32 %v1927, %v2298
        %v2300 = vpop.f32.mrf.mxu0
        %v2301 = vadd.f32 %v1931, %v2300
        %v2302 = vpop.f32.mrf.mxu0
        %v2303 = vadd.f32 %v1927, %v2302
        %v2304 = vpop.f32.mrf.mxu0
        %v2305 = vadd.f32 %v1931, %v2304
        %2306 = vmatprep.mubr.bf16.mxu0 %v1835
        %2307 = vmatmul.mubr.bf16.gmra.mxu0 %v1834
        %v2308 = vpop.f32.mrf.mxu0
        %v2309 = vadd.f32 %v1927, %v2308
        %v2310 = vpop.f32.mrf.mxu0
        %v2311 = vadd.f32 %v1931, %v2310
        %v2312 = vpop.f32.mrf.mxu0
        %v2313 = vadd.f32 %v1927, %v2312
        %v2314 = vpop.f32.mrf.mxu0
        %v2315 = vadd.f32 %v1931, %v2314
        %2316 = vmatprep.mubr.bf16.mxu0 %v1839
        %2317 = vmatmul.mubr.bf16.gmra.mxu0 %v1838
        %v2318 = vpop.f32.mrf.mxu0
        %v2319 = vadd.f32 %v1927, %v2318
        %v2320 = vpop.f32.mrf.mxu0
        %v2321 = vadd.f32 %v1931, %v2320
        %v2322 = vpop.f32.mrf.mxu0
        %v2323 = vadd.f32 %v1927, %v2322
        %v2324 = vpop.f32.mrf.mxu0
        %v2325 = vadd.f32 %v1931, %v2324
        %2326 = vmatprep.mubr.bf16.mxu0 %v1843
        %2327 = vmatmul.mubr.bf16.gmra.mxu0 %v1842
        %v2328 = vpop.f32.mrf.mxu0
        %v2329 = vadd.f32 %v1927, %v2328
        %v2330 = vpop.f32.mrf.mxu0
        %v2331 = vadd.f32 %v1931, %v2330
        %v2332 = vpop.f32.mrf.mxu0
        %v2333 = vadd.f32 %v1927, %v2332
        %v2334 = vpop.f32.mrf.mxu0
        %v2335 = vadd.f32 %v1931, %v2334
        %2336 = vmatprep.mubr.bf16.mxu0 %v1847
        %2337 = vmatmul.mubr.bf16.gmra.mxu0 %v1846
        %v2338 = vpop.f32.mrf.mxu0
        %v2339 = vadd.f32 %v1927, %v2338
        %v2340 = vpop.f32.mrf.mxu0
        %v2341 = vadd.f32 %v1931, %v2340
        %v2342 = vpop.f32.mrf.mxu0
        %v2343 = vadd.f32 %v1927, %v2342
        %v2344 = vpop.f32.mrf.mxu0
        %v2345 = vadd.f32 %v1931, %v2344
        %2346 = vmatprep.mubr.bf16.mxu0 %v1851
        %2347 = vmatmul.mubr.bf16.gmra.mxu0 %v1850
        %v2348 = vpop.f32.mrf.mxu0
        %v2349 = vadd.f32 %v1927, %v2348
        %v2350 = vpop.f32.mrf.mxu0
        %v2351 = vadd.f32 %v1931, %v2350
        %v2352 = vpop.f32.mrf.mxu0
        %v2353 = vadd.f32 %v1927, %v2352
        %v2354 = vpop.f32.mrf.mxu0
        %v2355 = vadd.f32 %v1931, %v2354
        %2356 = vmatprep.mubr.bf16.mxu0 %v1855
        %2357 = vmatmul.mubr.bf16.gmra.mxu0 %v1854
        %v2358 = vpop.f32.mrf.mxu0
        %v2359 = vadd.f32 %v1927, %v2358
        %v2360 = vpop.f32.mrf.mxu0
        %v2361 = vadd.f32 %v1931, %v2360
        %v2362 = vpop.f32.mrf.mxu0
        %v2363 = vadd.f32 %v1927, %v2362
        %v2364 = vpop.f32.mrf.mxu0
        %v2365 = vadd.f32 %v1931, %v2364
        %2366 = vdwg.mxu0
        %2367 = vmatprep.subr.bf16.mxu0 %v2173
        %2368 = vmatpush1.bf16.msra.mxu0 %v2172
        %2369 = vmatprep.subr.bf16.mxu0 %v2171
        %2370 = vmatpush1.bf16.msra.mxu0 %v2170
        %2371 = vmatprep.subr.bf16.mxu0 %v2169
        %2372 = vmatpush1.bf16.msra.mxu0 %v2168
        %2373 = vmatprep.subr.bf16.mxu0 %v2167
        %2374 = vmatpush1.bf16.msra.mxu0 %v2166
        %2375 = vmatprep.subr.bf16.mxu0 %v2165
        %2376 = vmatpush1.bf16.msra.mxu0 %v2164
        %2377 = vmatprep.subr.bf16.mxu0 %v2163
        %2378 = vmatpush1.bf16.msra.mxu0 %v2162
        %2379 = vmatprep.subr.bf16.mxu0 %v2161
        %2380 = vmatpush1.bf16.msra.mxu0 %v2160
        %2381 = vmatprep.subr.bf16.mxu0 %v2159
        %2382 = vmatpush1.bf16.msra.mxu0 %v2158
        %2383 = vmatprep.subr.bf16.mxu0 %v2189
        %2384 = vmatpush2.bf16.msra.mxu0 %v2188
        %2385 = vmatprep.subr.bf16.mxu0 %v2187
        %2386 = vmatpush2.bf16.msra.mxu0 %v2186
        %2387 = vmatprep.subr.bf16.mxu0 %v2185
        %2388 = vmatpush2.bf16.msra.mxu0 %v2184
        %2389 = vmatprep.subr.bf16.mxu0 %v2183
        %2390 = vmatpush2.bf16.msra.mxu0 %v2182
        %2391 = vmatprep.subr.bf16.mxu0 %v2181
        %2392 = vmatpush2.bf16.msra.mxu0 %v2180
        %2393 = vmatprep.subr.bf16.mxu0 %v2179
        %2394 = vmatpush2.bf16.msra.mxu0 %v2178
        %2395 = vmatprep.subr.bf16.mxu0 %v2177
        %2396 = vmatpush2.bf16.msra.mxu0 %v2176
        %2397 = vmatprep.subr.bf16.mxu0 %v2175
        %2398 = vmatpush2.bf16.msra.mxu0 %v2174
        %2399 = vmatprep.mubr.bf16.mxu0 %v1829
        %2400 = vmatmul.mubr.bf16.gmra.mxu0 %v1828
        %v2401 = vpop.f32.mrf.mxu0
        %v2402 = vadd.f32 %v2289, %v2401
        %v2403 = vpop.f32.mrf.mxu0
        %v2404 = vadd.f32 %v2291, %v2403
        %v2405 = vpop.f32.mrf.mxu0
        %v2406 = vadd.f32 %v2293, %v2405
        %v2407 = vpop.f32.mrf.mxu0
        %v2408 = vadd.f32 %v2295, %v2407
        %2409 = vmatprep.mubr.bf16.mxu0 %v1833
        %2410 = vmatmul.mubr.bf16.gmra.mxu0 %v1832
        %v2411 = vpop.f32.mrf.mxu0
        %v2412 = vadd.f32 %v2299, %v2411
        %v2413 = vpop.f32.mrf.mxu0
        %v2414 = vadd.f32 %v2301, %v2413
        %v2415 = vpop.f32.mrf.mxu0
        %v2416 = vadd.f32 %v2303, %v2415
        %v2417 = vpop.f32.mrf.mxu0
        %v2418 = vadd.f32 %v2305, %v2417
        %2419 = vmatprep.mubr.bf16.mxu0 %v1837
        %2420 = vmatmul.mubr.bf16.gmra.mxu0 %v1836
        %v2421 = vpop.f32.mrf.mxu0
        %v2422 = vadd.f32 %v2309, %v2421
        %v2423 = vpop.f32.mrf.mxu0
        %v2424 = vadd.f32 %v2311, %v2423
        %v2425 = vpop.f32.mrf.mxu0
        %v2426 = vadd.f32 %v2313, %v2425
        %v2427 = vpop.f32.mrf.mxu0
        %v2428 = vadd.f32 %v2315, %v2427
        %2429 = vmatprep.mubr.bf16.mxu0 %v1841
        %2430 = vmatmul.mubr.bf16.gmra.mxu0 %v1840
        %v2431 = vpop.f32.mrf.mxu0
        %v2432 = vadd.f32 %v2319, %v2431
        %v2433 = vpop.f32.mrf.mxu0
        %v2434 = vadd.f32 %v2321, %v2433
        %v2435 = vpop.f32.mrf.mxu0
        %v2436 = vadd.f32 %v2323, %v2435
        %v2437 = vpop.f32.mrf.mxu0
        %v2438 = vadd.f32 %v2325, %v2437
        %2439 = vmatprep.mubr.bf16.mxu0 %v1845
        %2440 = vmatmul.mubr.bf16.gmra.mxu0 %v1844
        %v2441 = vpop.f32.mrf.mxu0
        %v2442 = vadd.f32 %v2329, %v2441
        %v2443 = vpop.f32.mrf.mxu0
        %v2444 = vadd.f32 %v2331, %v2443
        %v2445 = vpop.f32.mrf.mxu0
        %v2446 = vadd.f32 %v2333, %v2445
        %v2447 = vpop.f32.mrf.mxu0
        %v2448 = vadd.f32 %v2335, %v2447
        %2449 = vmatprep.mubr.bf16.mxu0 %v1849
        %2450 = vmatmul.mubr.bf16.gmra.mxu0 %v1848
        %v2451 = vpop.f32.mrf.mxu0
        %v2452 = vadd.f32 %v2339, %v2451
        %v2453 = vpop.f32.mrf.mxu0
        %v2454 = vadd.f32 %v2341, %v2453
        %v2455 = vpop.f32.mrf.mxu0
        %v2456 = vadd.f32 %v2343, %v2455
        %v2457 = vpop.f32.mrf.mxu0
        %v2458 = vadd.f32 %v2345, %v2457
        %2459 = vmatprep.mubr.bf16.mxu0 %v1853
        %2460 = vmatmul.mubr.bf16.gmra.mxu0 %v1852
        %v2461 = vpop.f32.mrf.mxu0
        %v2462 = vadd.f32 %v2349, %v2461
        %v2463 = vpop.f32.mrf.mxu0
        %v2464 = vadd.f32 %v2351, %v2463
        %v2465 = vpop.f32.mrf.mxu0
        %v2466 = vadd.f32 %v2353, %v2465
        %v2467 = vpop.f32.mrf.mxu0
        %v2468 = vadd.f32 %v2355, %v2467
        %2469 = vmatprep.mubr.bf16.mxu0 %v1857
        %2470 = vmatmul.mubr.bf16.gmra.mxu0 %v1856
        %v2471 = vpop.f32.mrf.mxu0
        %v2472 = vadd.f32 %v2359, %v2471
        %v2473 = vpop.f32.mrf.mxu0
        %v2474 = vadd.f32 %v2361, %v2473
        %v2475 = vpop.f32.mrf.mxu0
        %v2476 = vadd.f32 %v2363, %v2475
        %v2477 = vpop.f32.mrf.mxu0
        %v2478 = vadd.f32 %v2365, %v2477
        %2479 = vdwg.mxu0
        %v2480 = vld [vmem:[%s9] sm:$0x3]
        %v2481 = vld [vmem:[%s10] sm:$0x3]
        %v2482 = vadd.f32 %v2402, %v2404
        %2483 = vadd.xlane.f32.xlu0 %v2482
        %v2484 = vpop.xlane.xlu0 %2483
        %v2485 = vadd.f32 %v2406, %v2408
        %2486 = vadd.xlane.f32.xlu0 %v2485
        %v2487 = vpop.xlane.xlu0 %2486
        %v2488 = vadd.f32 %v2412, %v2414
        %2489 = vadd.xlane.f32.xlu0 %v2488
        %v2490 = vpop.xlane.xlu0 %2489
        %v2491 = vadd.f32 %v2416, %v2418
        %2492 = vadd.xlane.f32.xlu0 %v2491
        %v2493 = vpop.xlane.xlu0 %2492
        %v2494 = vadd.f32 %v2422, %v2424
        %2495 = vadd.xlane.f32.xlu0 %v2494
        %v2496 = vpop.xlane.xlu0 %2495
        %v2497 = vadd.f32 %v2426, %v2428
        %2498 = vadd.xlane.f32.xlu0 %v2497
        %v2499 = vpop.xlane.xlu0 %2498
        %v2500 = vadd.f32 %v2432, %v2434
        %2501 = vadd.xlane.f32.xlu0 %v2500
        %v2502 = vpop.xlane.xlu0 %2501
        %v2503 = vadd.f32 %v2436, %v2438
        %2504 = vadd.xlane.f32.xlu0 %v2503
        %v2505 = vpop.xlane.xlu0 %2504
        %v2506 = vadd.f32 %v2442, %v2444
        %2507 = vadd.xlane.f32.xlu0 %v2506
        %v2508 = vpop.xlane.xlu0 %2507
        %v2509 = vadd.f32 %v2446, %v2448
        %2510 = vadd.xlane.f32.xlu0 %v2509
        %v2511 = vpop.xlane.xlu0 %2510
        %v2512 = vadd.f32 %v2452, %v2454
        %2513 = vadd.xlane.f32.xlu0 %v2512
        %v2514 = vpop.xlane.xlu0 %2513
        %v2515 = vadd.f32 %v2456, %v2458
        %2516 = vadd.xlane.f32.xlu0 %v2515
        %v2517 = vpop.xlane.xlu0 %2516
        %v2518 = vadd.f32 %v2462, %v2464
        %2519 = vadd.xlane.f32.xlu0 %v2518
        %v2520 = vpop.xlane.xlu0 %2519
        %v2521 = vadd.f32 %v2466, %v2468
        %2522 = vadd.xlane.f32.xlu0 %v2521
        %v2523 = vpop.xlane.xlu0 %2522
        %v2524 = vadd.f32 %v2472, %v2474
        %2525 = vadd.xlane.f32.xlu0 %v2524
        %v2526 = vpop.xlane.xlu0 %2525
        %v2527 = vadd.f32 %v2476, %v2478
        %2528 = vadd.xlane.f32.xlu0 %v2527
        %v2529 = vpop.xlane.xlu0 %2528
        %v2530 = vmul.f32 %v2402, %v2402
        %v2531 = vmul.f32 %v2404, %v2404
        %v2532 = vmul.f32 %v2406, %v2406
        %v2533 = vmul.f32 %v2408, %v2408
        %v2534 = vmul.f32 %v2412, %v2412
        %v2535 = vmul.f32 %v2414, %v2414
        %v2536 = vmul.f32 %v2416, %v2416
        %v2537 = vmul.f32 %v2418, %v2418
        %v2538 = vmul.f32 %v2422, %v2422
        %v2539 = vmul.f32 %v2424, %v2424
        %v2540 = vmul.f32 %v2426, %v2426
        %v2541 = vmul.f32 %v2428, %v2428
        %v2542 = vmul.f32 %v2432, %v2432
        %v2543 = vmul.f32 %v2434, %v2434
        %v2544 = vmul.f32 %v2436, %v2436
        %v2545 = vmul.f32 %v2438, %v2438
        %v2546 = vmul.f32 %v2442, %v2442
        %v2547 = vmul.f32 %v2444, %v2444
        %v2548 = vmul.f32 %v2446, %v2446
        %v2549 = vmul.f32 %v2448, %v2448
        %v2550 = vmul.f32 %v2452, %v2452
        %v2551 = vmul.f32 %v2454, %v2454
        %v2552 = vmul.f32 %v2456, %v2456
        %v2553 = vmul.f32 %v2458, %v2458
        %v2554 = vmul.f32 %v2462, %v2462
        %v2555 = vmul.f32 %v2464, %v2464
        %v2556 = vmul.f32 %v2466, %v2466
        %v2557 = vmul.f32 %v2468, %v2468
        %v2558 = vmul.f32 %v2472, %v2472
        %v2559 = vmul.f32 %v2474, %v2474
        %v2560 = vmul.f32 %v2476, %v2476
        %v2561 = vmul.f32 %v2478, %v2478
        %v2562 = vadd.f32 %v2530, %v2531
        %2563 = vadd.xlane.f32.xlu0 %v2562
        %v2564 = vpop.xlane.xlu0 %2563
        %v2565 = vadd.f32 %v2532, %v2533
        %2566 = vadd.xlane.f32.xlu0 %v2565
        %v2567 = vpop.xlane.xlu0 %2566
        %v2568 = vadd.f32 %v2534, %v2535
        %2569 = vadd.xlane.f32.xlu0 %v2568
        %v2570 = vpop.xlane.xlu0 %2569
        %v2571 = vadd.f32 %v2536, %v2537
        %2572 = vadd.xlane.f32.xlu0 %v2571
        %v2573 = vpop.xlane.xlu0 %2572
        %v2574 = vadd.f32 %v2538, %v2539
        %2575 = vadd.xlane.f32.xlu0 %v2574
        %v2576 = vpop.xlane.xlu0 %2575
        %v2577 = vadd.f32 %v2540, %v2541
        %2578 = vadd.xlane.f32.xlu0 %v2577
        %v2579 = vpop.xlane.xlu0 %2578
        %v2580 = vadd.f32 %v2542, %v2543
        %2581 = vadd.xlane.f32.xlu0 %v2580
        %v2582 = vpop.xlane.xlu0 %2581
        %v2583 = vadd.f32 %v2544, %v2545
        %2584 = vadd.xlane.f32.xlu0 %v2583
        %v2585 = vpop.xlane.xlu0 %2584
        %v2586 = vadd.f32 %v2546, %v2547
        %2587 = vadd.xlane.f32.xlu0 %v2586
        %v2588 = vpop.xlane.xlu0 %2587
        %v2589 = vadd.f32 %v2548, %v2549
        %2590 = vadd.xlane.f32.xlu0 %v2589
        %v2591 = vpop.xlane.xlu0 %2590
        %v2592 = vadd.f32 %v2550, %v2551
        %2593 = vadd.xlane.f32.xlu0 %v2592
        %v2594 = vpop.xlane.xlu0 %2593
        %v2595 = vadd.f32 %v2552, %v2553
        %2596 = vadd.xlane.f32.xlu0 %v2595
        %v2597 = vpop.xlane.xlu0 %2596
        %v2598 = vadd.f32 %v2554, %v2555
        %2599 = vadd.xlane.f32.xlu0 %v2598
        %v2600 = vpop.xlane.xlu0 %2599
        %v2601 = vadd.f32 %v2556, %v2557
        %2602 = vadd.xlane.f32.xlu0 %v2601
        %v2603 = vpop.xlane.xlu0 %2602
        %v2604 = vadd.f32 %v2558, %v2559
        %2605 = vadd.xlane.f32.xlu0 %v2604
        %v2606 = vpop.xlane.xlu0 %2605
        %v2607 = vadd.f32 %v2560, %v2561
        %2608 = vadd.xlane.f32.xlu0 %v2607
        %v2609 = vpop.xlane.xlu0 %2608
        %v2610 = vmul.f32 %v2484, 0.00390625
        %v2611 = vmul.f32 %v2487, 0.00390625
        %v2612 = vmul.f32 %v2490, 0.00390625
        %v2613 = vmul.f32 %v2493, 0.00390625
        %v2614 = vmul.f32 %v2496, 0.00390625
        %v2615 = vmul.f32 %v2499, 0.00390625
        %v2616 = vmul.f32 %v2502, 0.00390625
        %v2617 = vmul.f32 %v2505, 0.00390625
        %v2618 = vmul.f32 %v2508, 0.00390625
        %v2619 = vmul.f32 %v2511, 0.00390625
        %v2620 = vmul.f32 %v2514, 0.00390625
        %v2621 = vmul.f32 %v2517, 0.00390625
        %v2622 = vmul.f32 %v2520, 0.00390625
        %v2623 = vmul.f32 %v2523, 0.00390625
        %v2624 = vmul.f32 %v2526, 0.00390625
        %v2625 = vmul.f32 %v2529, 0.00390625
        %v2626 = vmul.f32 %v2564, 0.00390625
        %v2627 = vmul.f32 %v2567, 0.00390625
        %v2628 = vmul.f32 %v2570, 0.00390625
        %v2629 = vmul.f32 %v2573, 0.00390625
        %v2630 = vmul.f32 %v2576, 0.00390625
        %v2631 = vmul.f32 %v2579, 0.00390625
        %v2632 = vmul.f32 %v2582, 0.00390625
        %v2633 = vmul.f32 %v2585, 0.00390625
        %v2634 = vmul.f32 %v2588, 0.00390625
        %v2635 = vmul.f32 %v2591, 0.00390625
        %v2636 = vmul.f32 %v2594, 0.00390625
        %v2637 = vmul.f32 %v2597, 0.00390625
        %v2638 = vmul.f32 %v2600, 0.00390625
        %v2639 = vmul.f32 %v2603, 0.00390625
        %v2640 = vmul.f32 %v2606, 0.00390625
        %v2641 = vmul.f32 %v2609, 0.00390625
        %v2642 = vmul.f32 %v2610, %v2610
        %v2643 = vmul.f32 %v2611, %v2611
        %v2644 = vmul.f32 %v2612, %v2612
        %v2645 = vmul.f32 %v2613, %v2613
        %v2646 = vmul.f32 %v2614, %v2614
        %v2647 = vmul.f32 %v2615, %v2615
        %v2648 = vmul.f32 %v2616, %v2616
        %v2649 = vmul.f32 %v2617, %v2617
        %v2650 = vmul.f32 %v2618, %v2618
        %v2651 = vmul.f32 %v2619, %v2619
        %v2652 = vmul.f32 %v2620, %v2620
        %v2653 = vmul.f32 %v2621, %v2621
        %v2654 = vmul.f32 %v2622, %v2622
        %v2655 = vmul.f32 %v2623, %v2623
        %v2656 = vmul.f32 %v2624, %v2624
        %v2657 = vmul.f32 %v2625, %v2625
        %v2658 = vsub.f32 %v2626, %v2642
        %v2659 = vsub.f32 %v2627, %v2643
        %v2660 = vsub.f32 %v2628, %v2644
        %v2661 = vsub.f32 %v2629, %v2645
        %v2662 = vsub.f32 %v2630, %v2646
        %v2663 = vsub.f32 %v2631, %v2647
        %v2664 = vsub.f32 %v2632, %v2648
        %v2665 = vsub.f32 %v2633, %v2649
        %v2666 = vsub.f32 %v2634, %v2650
        %v2667 = vsub.f32 %v2635, %v2651
        %v2668 = vsub.f32 %v2636, %v2652
        %v2669 = vsub.f32 %v2637, %v2653
        %v2670 = vsub.f32 %v2638, %v2654
        %v2671 = vsub.f32 %v2639, %v2655
        %v2672 = vsub.f32 %v2640, %v2656
        %v2673 = vsub.f32 %v2641, %v2657
        %v2674 = vmax.f32 %v2658, 0.0
        %v2675 = vmax.f32 %v2659, 0.0
        %v2676 = vmax.f32 %v2660, 0.0
        %v2677 = vmax.f32 %v2661, 0.0
        %v2678 = vmax.f32 %v2662, 0.0
        %v2679 = vmax.f32 %v2663, 0.0
        %v2680 = vmax.f32 %v2664, 0.0
        %v2681 = vmax.f32 %v2665, 0.0
        %v2682 = vmax.f32 %v2666, 0.0
        %v2683 = vmax.f32 %v2667, 0.0
        %v2684 = vmax.f32 %v2668, 0.0
        %v2685 = vmax.f32 %v2669, 0.0
        %v2686 = vmax.f32 %v2670, 0.0
        %v2687 = vmax.f32 %v2671, 0.0
        %v2688 = vmax.f32 %v2672, 0.0
        %v2689 = vmax.f32 %v2673, 0.0
        %v2690 = vsub.f32 %v2402, %v2610
        %v2691 = vsub.f32 %v2404, %v2610
        %v2692 = vsub.f32 %v2406, %v2611
        %v2693 = vsub.f32 %v2408, %v2611
        %v2694 = vsub.f32 %v2412, %v2612
        %v2695 = vsub.f32 %v2414, %v2612
        %v2696 = vsub.f32 %v2416, %v2613
        %v2697 = vsub.f32 %v2418, %v2613
        %v2698 = vsub.f32 %v2422, %v2614
        %v2699 = vsub.f32 %v2424, %v2614
        %v2700 = vsub.f32 %v2426, %v2615
        %v2701 = vsub.f32 %v2428, %v2615
        %v2702 = vsub.f32 %v2432, %v2616
        %v2703 = vsub.f32 %v2434, %v2616
        %v2704 = vsub.f32 %v2436, %v2617
        %v2705 = vsub.f32 %v2438, %v2617
        %v2706 = vsub.f32 %v2442, %v2618
        %v2707 = vsub.f32 %v2444, %v2618
        %v2708 = vsub.f32 %v2446, %v2619
        %v2709 = vsub.f32 %v2448, %v2619
        %v2710 = vsub.f32 %v2452, %v2620
        %v2711 = vsub.f32 %v2454, %v2620
        %v2712 = vsub.f32 %v2456, %v2621
        %v2713 = vsub.f32 %v2458, %v2621
        %v2714 = vsub.f32 %v2462, %v2622
        %v2715 = vsub.f32 %v2464, %v2622
        %v2716 = vsub.f32 %v2466, %v2623
        %v2717 = vsub.f32 %v2468, %v2623
        %v2718 = vsub.f32 %v2472, %v2624
        %v2719 = vsub.f32 %v2474, %v2624
        %v2720 = vsub.f32 %v2476, %v2625
        %v2721 = vsub.f32 %v2478, %v2625
        %v2722 = vadd.f32 %v2674, 1e-05
        %v2723 = vadd.f32 %v2675, 1e-05
        %v2724 = vadd.f32 %v2676, 1e-05
        %v2725 = vadd.f32 %v2677, 1e-05
        %v2726 = vadd.f32 %v2678, 1e-05
        %v2727 = vadd.f32 %v2679, 1e-05
        %v2728 = vadd.f32 %v2680, 1e-05
        %v2729 = vadd.f32 %v2681, 1e-05
        %v2730 = vadd.f32 %v2682, 1e-05
        %v2731 = vadd.f32 %v2683, 1e-05
        %v2732 = vadd.f32 %v2684, 1e-05
        %v2733 = vadd.f32 %v2685, 1e-05
        %v2734 = vadd.f32 %v2686, 1e-05
        %v2735 = vadd.f32 %v2687, 1e-05
        %v2736 = vadd.f32 %v2688, 1e-05
        %v2737 = vadd.f32 %v2689, 1e-05
        %v2738 = vrsqrt.pop %v2722
        %v2739 = vrsqrt.pop %v2723
        %v2740 = vrsqrt.pop %v2724
        %v2741 = vrsqrt.pop %v2725
        %v2742 = vrsqrt.pop %v2726
        %v2743 = vrsqrt.pop %v2727
        %v2744 = vrsqrt.pop %v2728
        %v2745 = vrsqrt.pop %v2729
        %v2746 = vrsqrt.pop %v2730
        %v2747 = vrsqrt.pop %v2731
        %v2748 = vrsqrt.pop %v2732
        %v2749 = vrsqrt.pop %v2733
        %v2750 = vrsqrt.pop %v2734
        %v2751 = vrsqrt.pop %v2735
        %v2752 = vrsqrt.pop %v2736
        %v2753 = vrsqrt.pop %v2737
        %v2754 = vmul.f32 %v2690, %v2738
        %v2755 = vmul.f32 %v2691, %v2738
        %v2756 = vmul.f32 %v2692, %v2739
        %v2757 = vmul.f32 %v2693, %v2739
        %v2758 = vmul.f32 %v2694, %v2740
        %v2759 = vmul.f32 %v2695, %v2740
        %v2760 = vmul.f32 %v2696, %v2741
        %v2761 = vmul.f32 %v2697, %v2741
        %v2762 = vmul.f32 %v2698, %v2742
        %v2763 = vmul.f32 %v2699, %v2742
        %v2764 = vmul.f32 %v2700, %v2743
        %v2765 = vmul.f32 %v2701, %v2743
        %v2766 = vmul.f32 %v2702, %v2744
        %v2767 = vmul.f32 %v2703, %v2744
        %v2768 = vmul.f32 %v2704, %v2745
        %v2769 = vmul.f32 %v2705, %v2745
        %v2770 = vmul.f32 %v2706, %v2746
        %v2771 = vmul.f32 %v2707, %v2746
        %v2772 = vmul.f32 %v2708, %v2747
        %v2773 = vmul.f32 %v2709, %v2747
        %v2774 = vmul.f32 %v2710, %v2748
        %v2775 = vmul.f32 %v2711, %v2748
        %v2776 = vmul.f32 %v2712, %v2749
        %v2777 = vmul.f32 %v2713, %v2749
        %v2778 = vmul.f32 %v2714, %v2750
        %v2779 = vmul.f32 %v2715, %v2750
        %v2780 = vmul.f32 %v2716, %v2751
        %v2781 = vmul.f32 %v2717, %v2751
        %v2782 = vmul.f32 %v2718, %v2752
        %v2783 = vmul.f32 %v2719, %v2752
        %v2784 = vmul.f32 %v2720, %v2753
        %v2785 = vmul.f32 %v2721, %v2753
        %v2787 = vlaneseq
        %v2788 = vshrl.u32 %v2787, 7
        %v2789 = vsub.s32 0, %v2788
        %v2790 = vrot.slane %v2480, %v2789
        %v2791 = vlaneseq
        %v2792 = vshrl.u32 %v2791, 7
        %v2793 = vsub.s32 1, %v2792
        %v2794 = vrot.slane %v2480, %v2793
        %v2797 = vmul.f32 %v2754, %v2790
        %v2798 = vmul.f32 %v2755, %v2794
        %v2799 = vmul.f32 %v2756, %v2790
        %v2800 = vmul.f32 %v2757, %v2794
        %v2801 = vmul.f32 %v2758, %v2790
        %v2802 = vmul.f32 %v2759, %v2794
        %v2803 = vmul.f32 %v2760, %v2790
        %v2804 = vmul.f32 %v2761, %v2794
        %v2805 = vmul.f32 %v2762, %v2790
        %v2806 = vmul.f32 %v2763, %v2794
        %v2807 = vmul.f32 %v2764, %v2790
        %v2808 = vmul.f32 %v2765, %v2794
        %v2809 = vmul.f32 %v2766, %v2790
        %v2810 = vmul.f32 %v2767, %v2794
        %v2811 = vmul.f32 %v2768, %v2790
        %v2812 = vmul.f32 %v2769, %v2794
        %v2813 = vmul.f32 %v2770, %v2790
        %v2814 = vmul.f32 %v2771, %v2794
        %v2815 = vmul.f32 %v2772, %v2790
        %v2816 = vmul.f32 %v2773, %v2794
        %v2817 = vmul.f32 %v2774, %v2790
        %v2818 = vmul.f32 %v2775, %v2794
        %v2819 = vmul.f32 %v2776, %v2790
        %v2820 = vmul.f32 %v2777, %v2794
        %v2821 = vmul.f32 %v2778, %v2790
        %v2822 = vmul.f32 %v2779, %v2794
        %v2823 = vmul.f32 %v2780, %v2790
        %v2824 = vmul.f32 %v2781, %v2794
        %v2825 = vmul.f32 %v2782, %v2790
        %v2826 = vmul.f32 %v2783, %v2794
        %v2827 = vmul.f32 %v2784, %v2790
        %v2828 = vmul.f32 %v2785, %v2794
        %v2830 = vlaneseq
        %v2831 = vshrl.u32 %v2830, 7
        %v2832 = vsub.s32 0, %v2831
        %v2833 = vrot.slane %v2481, %v2832
        %v2834 = vlaneseq
        %v2835 = vshrl.u32 %v2834, 7
        %v2836 = vsub.s32 1, %v2835
        %v2837 = vrot.slane %v2481, %v2836
        %v2840 = vadd.f32 %v2797, %v2833
        %v2841 = vadd.f32 %v2798, %v2837
        %v2842 = vadd.f32 %v2799, %v2833
        %v2843 = vadd.f32 %v2800, %v2837
        %v2844 = vadd.f32 %v2801, %v2833
        %v2845 = vadd.f32 %v2802, %v2837
        %v2846 = vadd.f32 %v2803, %v2833
        %v2847 = vadd.f32 %v2804, %v2837
        %v2848 = vadd.f32 %v2805, %v2833
        %v2849 = vadd.f32 %v2806, %v2837
        %v2850 = vadd.f32 %v2807, %v2833
        %v2851 = vadd.f32 %v2808, %v2837
        %v2852 = vadd.f32 %v2809, %v2833
        %v2853 = vadd.f32 %v2810, %v2837
        %v2854 = vadd.f32 %v2811, %v2833
        %v2855 = vadd.f32 %v2812, %v2837
        %v2856 = vadd.f32 %v2813, %v2833
        %v2857 = vadd.f32 %v2814, %v2837
        %v2858 = vadd.f32 %v2815, %v2833
        %v2859 = vadd.f32 %v2816, %v2837
        %v2860 = vadd.f32 %v2817, %v2833
        %v2861 = vadd.f32 %v2818, %v2837
        %v2862 = vadd.f32 %v2819, %v2833
        %v2863 = vadd.f32 %v2820, %v2837
        %v2864 = vadd.f32 %v2821, %v2833
        %v2865 = vadd.f32 %v2822, %v2837
        %v2866 = vadd.f32 %v2823, %v2833
        %v2867 = vadd.f32 %v2824, %v2837
        %v2868 = vadd.f32 %v2825, %v2833
        %v2869 = vadd.f32 %v2826, %v2837
        %v2870 = vadd.f32 %v2827, %v2833
        %v2871 = vadd.f32 %v2828, %v2837
        %2872 = vst [vmem:[%s473] sm:$0xff] %v2840
        %2873 = vst [vmem:[%s473 + $0x8] sm:$0xff] %v2841
        %2874 = vst [vmem:[%s473 + $0x10] sm:$0xff] %v2842
        %2875 = vst [vmem:[%s473 + $0x18] sm:$0xff] %v2843
        %2876 = vst [vmem:[%s473 + $0x20] sm:$0xff] %v2844
        %2877 = vst [vmem:[%s473 + $0x28] sm:$0xff] %v2845
        %2878 = vst [vmem:[%s473 + $0x30] sm:$0xff] %v2846
        %2879 = vst [vmem:[%s473 + $0x38] sm:$0xff] %v2847
        %2880 = vst [vmem:[%s473 + $0x40] sm:$0xff] %v2848
        %2881 = vst [vmem:[%s473 + $0x48] sm:$0xff] %v2849
        %2882 = vst [vmem:[%s473 + $0x50] sm:$0xff] %v2850
        %2883 = vst [vmem:[%s473 + $0x58] sm:$0xff] %v2851
        %2884 = vst [vmem:[%s473 + $0x60] sm:$0xff] %v2852
        %2885 = vst [vmem:[%s473 + $0x68] sm:$0xff] %v2853
        %2886 = vst [vmem:[%s473 + $0x70] sm:$0xff] %v2854
        %2887 = vst [vmem:[%s473 + $0x78] sm:$0xff] %v2855
        %2888 = vst [vmem:[%s473 + $0x80] sm:$0xff] %v2856
        %2889 = vst [vmem:[%s473 + $0x88] sm:$0xff] %v2857
        %2890 = vst [vmem:[%s473 + $0x90] sm:$0xff] %v2858
        %2891 = vst [vmem:[%s473 + $0x98] sm:$0xff] %v2859
        %2892 = vst [vmem:[%s473 + $0xa0] sm:$0xff] %v2860
        %2893 = vst [vmem:[%s473 + $0xa8] sm:$0xff] %v2861
        %2894 = vst [vmem:[%s473 + $0xb0] sm:$0xff] %v2862
        %2895 = vst [vmem:[%s473 + $0xb8] sm:$0xff] %v2863
        %2896 = vst [vmem:[%s473 + $0xc0] sm:$0xff] %v2864
        %2897 = vst [vmem:[%s473 + $0xc8] sm:$0xff] %v2865
        %2898 = vst [vmem:[%s473 + $0xd0] sm:$0xff] %v2866
        %2899 = vst [vmem:[%s473 + $0xd8] sm:$0xff] %v2867
        %2900 = vst [vmem:[%s473 + $0xe0] sm:$0xff] %v2868
        %2901 = vst [vmem:[%s473 + $0xe8] sm:$0xff] %v2869
        %2902 = vst [vmem:[%s473 + $0xf0] sm:$0xff] %v2870
        %2903 = vst [vmem:[%s473 + $0xf8] sm:$0xff] %v2871
        %s2904 = sand.u32 %s275, 1
        %s2905 = scalar_lea.sflag [#allocation4], %s2904
        %s2906 = sand.u32 %s275, 1
        %s2907 = smul.addr %s2906, 256
        %s2908 = scalar_lea.vmem [#allocation13], %s2907
        // Predicated region
        $region89: #{tpu_custom_call.1} parent=63 // pred_check
          %p2909 = pneg %p285
        $region90: #{tpu_custom_call.1} parent=63 // pred_check_branch
          %2911 = sbr.rel (%p2909) target = $region92
        $region91: #{tpu_custom_call.1} parent=63 // pred_region
          %s2912 = smul.u32 16, %s31
          %s2914 = ssub.s32 4096, 4096
          %2915 = vsyncadd %s2905, %s2914
          %s2916 = smul.addr %s2912, 2
          %s2917 = smul.addr %s2916, 128
          %s2918 = scalar_lea.hbm %s11, %s2917
          %s2919 = sshll.u32 %s2908, 4
          %s2920 = int_to_ptr.vmem [resolvable:$true] %s2919
          %2925 = dma.vmem_to_hbm [thread:$0]  %s2920, 4096, %s2918, %s2905, 256, 256, 16
        $region92: #{tpu_custom_call.1} parent=63 // pred_fallthru
          _
      $region64: #{tpu_custom_call.1} parent=5 // pred_fallthru
        _
      %p2926 = scmp.le.s32.totalorder 2, %s26
      // Predicated region
      $region93: #{tpu_custom_call.1} parent=5 // pred_check
        %p2927 = pneg %p2926
      $region94: #{tpu_custom_call.1} parent=5 // pred_check_branch
        %2929 = sbr.rel (%p2927) target = $region96
      $region95: #{tpu_custom_call.1} parent=5 // pred_region
        %s2930 = ssub.s32 %s26, 2
        // Predicated region
        $region97: #{tpu_custom_call.1} parent=95 // pred_check
          %p2931 = pneg %p291
        $region98: #{tpu_custom_call.1} parent=95 // pred_check_branch
          %2933 = sbr.rel (%p2931) target = $region100
        $region99: #{tpu_custom_call.1} parent=95 // pred_region
          %s2934 = sand.u32 %s276, 1
          %s2935 = scalar_lea.sflag [#allocation4], %s2934
          %s2936 = sand.u32 %s276, 1
          %s2937 = smul.addr %s2936, 256
          %s2938 = scalar_lea.vmem [#allocation13], %s2937
          %2939 = dma.done %s2935, 4096
        $region100: #{tpu_custom_call.1} parent=95 // pred_fallthru
          _
      $region96: #{tpu_custom_call.1} parent=5 // pred_fallthru
        _
    $region6: #{tpu_custom_call.1} parent=1 // loop_footer
      %s30 = sadd.s32 1, %s26
    $region7: #{tpu_custom_call.1} parent=1 // loop_footer_branch
      %25 = sbr.rel target = $region3
    $region8: #{tpu_custom_call.1} parent=1 // loop_exit
      _
    %2940 = vsyncpa [#allocation3], 1
    %s2941 = scalar_lea.sflag [#allocation3], 1
    %2942 = vsyncpa %s2941, 1
    %2943 = vsyncpa [#allocation6], 1
    %2944 = vsyncpa [#allocation9], 1
    %2945 = vsyncpa [#allocation12], 1
    %2946 = vsyncpa [#allocation4], 1
    %s2947 = scalar_lea.sflag [#allocation4], 1
    %2948 = vsyncpa %s2947, 1

// kernel: tpu_custom_call.1
$region0: #{tpu_custom_call.1}
  #allocation0 [shape = 'u32[]', space=smem, size = 0x4, offset = 0x4, fixed_abs, tag = 'smem constant byte address 0x4 - core index']
  #allocation1 [shape = 'u32[144,128]{1,0:T(1,128)}', space=vmem, size = 0x12000, scoped, tag = 'internal scratch']
  %s0 = inlined_call_operand.hbm [shape: f32[256,128], index: 0, kind: input, shape index: {}]
  %s1 = inlined_call_operand.hbm [shape: bf16[128,256], index: 1, kind: input, shape index: {}]
  %s2 = inlined_call_operand.vmem [shape: f32[1,256], index: 2, kind: input, shape index: {}]
  %s3 = inlined_call_operand.hbm [shape: f32[1,256], index: 3, kind: input, shape index: {}]
  %s4 = inlined_call_operand.hbm [shape: f32[1,256], index: 4, kind: input, shape index: {}]
  %s5 = inlined_call_operand.hbm [shape: bf16[256,512], index: 5, kind: input, shape index: {}]
  %s6 = inlined_call_operand.vmem [shape: f32[1,512], index: 6, kind: input, shape index: {}]
  %s7 = inlined_call_operand.hbm [shape: bf16[512,256], index: 7, kind: input, shape index: {}]
  %s8 = inlined_call_operand.vmem [shape: f32[1,256], index: 8, kind: input, shape index: {}]
  %s9 = inlined_call_operand.vmem [shape: f32[1,256], index: 9, kind: input, shape index: {}]
  %s10 = inlined_call_operand.vmem [shape: f32[1,256], index: 10, kind: input, shape index: {}]
  %s11 = inlined_call_operand.hbm [shape: f32[256,256], index: 11, kind: output, shape index: {}]
  %s12 = sld [smem:[#allocation0]]
  $region101: #{tpu_custom_call.1} parent=0
    _
  %s14 = ssub.s32 1, %s12
  %s15 = scalar_select 0, %s14, %s12
  $region1: #{tpu_custom_call.1} parent=0
    #allocation2 [shape = 'u8[131072]{0}', space=vmem, size = 0x20000, scoped, tag = 'input window, operand 0']
    #allocation3 [shape = 's32[2]{0}', space=sflag, size = 0x8, scoped, tag = 'scoped memory for tpu_custom_call.1']
    #allocation4 [shape = 's32[2]{0}', space=sflag, size = 0x8, scoped, tag = 'scoped memory for tpu_custom_call.1']
    #allocation5 [shape = 'u8[65536]{0}', space=vmem, size = 0x10000, scoped, tag = 'input window, operand 1, single buffered']
    #allocation6 [shape = 's32[1]{0}', space=sflag, size = 0x4, scoped, tag = 'scoped memory for tpu_custom_call.1']
    #allocation7 [shape = 'u8[1024]{0}', space=vmem, size = 0x400, scoped, tag = 'input window, operand 3, single buffered']
    #allocation8 [shape = 'u8[1024]{0}', space=vmem, size = 0x400, scoped, tag = 'input window, operand 4, single buffered']
    #allocation9 [shape = 's32[1]{0}', space=sflag, size = 0x4, scoped, tag = 'scoped memory for tpu_custom_call.1']
    #allocation10 [shape = 'u8[262144]{0}', space=vmem, size = 0x40000, scoped, tag = 'input window, operand 5, single buffered']
    #allocation11 [shape = 'u8[262144]{0}', space=vmem, size = 0x40000, scoped, tag = 'input window, operand 7, single buffered']
    #allocation12 [shape = 's32[1]{0}', space=sflag, size = 0x4, scoped, tag = 'scoped memory for tpu_custom_call.1']
    #allocation13 [shape = 'u8[262144]{0}', space=vmem, size = 0x40000, scoped, tag = 'output window, operand 0']
    %16 = vsyncpa [#allocation3], 0
    %s17 = scalar_lea.sflag [#allocation3], 1
    %18 = vsyncpa %s17, 0
    %19 = vsyncpa [#allocation6], 0
    %20 = vsyncpa [#allocation9], 0
    %21 = vsyncpa [#allocation12], 0
    %22 = vsyncpa [#allocation4], 0
    %s23 = scalar_lea.sflag [#allocation4], 1
    %24 = vsyncpa %s23, 0
    loop: start=0, step=1, limit=4
    $region2: #{tpu_custom_call.1} parent=1 // loop_pre_header
      _
    $region3: #{tpu_custom_call.1} parent=1 // loop_header
      %s26 = sphi 0, %s30
      %p27 = scmp.ge.s32.totalorder %s26, 4
      %s36 = sphi 0, %s38
      %s39 = sphi 0, %s36
      %s40 = sphi 0, %s39
      %s56 = sphi 0, %s40
      %s60 = sphi 0, %s60
      %s62 = sphi 0, %s60
      %s63 = sphi 0, %s62
      %s77 = sphi 0, %s63
      %s81 = sphi 0, %s81
      %s83 = sphi 0, %s81
      %s84 = sphi 0, %s83
      %s98 = sphi 0, %s84
      %s102 = sphi 0, %s102
      %s104 = sphi 0, %s102
      %s105 = sphi 0, %s104
      %s119 = sphi 0, %s105
      %s123 = sphi 0, %s123
      %s125 = sphi 0, %s123
      %s126 = sphi 0, %s125
      %s140 = sphi 0, %s126
      %s144 = sphi 0, %s144
      %s146 = sphi 0, %s144
      %s147 = sphi 0, %s146
      %s161 = sphi 0, %s147
      %s165 = sphi 0, %s165
      %s167 = sphi 0, %s165
      %s168 = sphi 0, %s167
      %s182 = sphi 0, %s168
      %s186 = sphi 0, %s186
      %s188 = sphi 0, %s186
      %s189 = sphi 0, %s188
      %s203 = sphi 0, %s189
      %s207 = sphi 0, %s207
      %s209 = sphi 0, %s207
      %s210 = sphi 0, %s209
      %s224 = sphi 0, %s210
      %s228 = sphi 0, %s228
      %s230 = sphi 0, %s228
      %s231 = sphi 0, %s230
      %s245 = sphi 0, %s231
      %s249 = sphi 0, %s249
      %s251 = sphi 0, %s249
      %s252 = sphi 0, %s251
      %s266 = sphi 0, %s252
      %s272 = sphi 0, %s274
      %s275 = sphi 0, %s272
      %s276 = sphi 0, %s275
      %s292 = sphi 0, %s276
    $region4: #{tpu_custom_call.1} parent=1 // loop_header_branch
      %29 = sbr.rel (%p27) target = $region8
    $region5: #{tpu_custom_call.1} parent=1 // loop_body
      %s31 = ssub.s32 %s26, 1
      %s32 = ssub.s32 %s26, 2
      %s33 = sadd.s32 %s26, 1
      %s34 = ssub.s32 %s26, %s33
      %p35 = scmp.eq.s32.totalorder %s34, 0
      %s37 = sadd.s32 %s36, 1
      %s38 = scalar_select %p35, %s36, %s37
      %p41 = pneg %p35
      %p42 = scmp.eq.s32.totalorder %s26, 1
      %p43 = por %p41, %p42
      %p44 = scmp.ne.s32.totalorder %s36, %s39
      %p45 = scmp.eq.s32.totalorder %s26, 0
      %p46 = por %p44, %p45
      %p47 = scmp.ne.s32.totalorder %s36, %s39
      %p48 = scmp.eq.s32.totalorder %s31, 1
      %p49 = por %p47, %p48
      %p50 = scmp.ne.s32.totalorder %s39, %s40
      %p51 = scmp.eq.s32.totalorder %s31, 0
      %p52 = por %p50, %p51
      %p53 = scmp.ne.s32.totalorder %s39, %s40
      %p54 = scmp.eq.s32.totalorder %s32, 1
      %p55 = por %p53, %p54
      %p57 = scmp.ne.s32.totalorder %s40, %s56
      %p58 = scmp.eq.s32.totalorder %s32, 0
      %p59 = por %p57, %p58
      %s61 = sadd.s32 %s60, 1
      %p64 = scmp.eq.s32.totalorder %s26, 1
      %p65 = scmp.ne.s32.totalorder %s60, %s62
      %p66 = scmp.eq.s32.totalorder %s26, 0
      %p67 = por %p65, %p66
      %p68 = scmp.ne.s32.totalorder %s60, %s62
      %p69 = scmp.eq.s32.totalorder %s31, 1
      %p70 = por %p68, %p69
      %p71 = scmp.ne.s32.totalorder %s62, %s63
      %p72 = scmp.eq.s32.totalorder %s31, 0
      %p73 = por %p71, %p72
      %p74 = scmp.ne.s32.totalorder %s62, %s63
      %p75 = scmp.eq.s32.totalorder %s32, 1
      %p76 = por %p74, %p75
      %p78 = scmp.ne.s32.totalorder %s63, %s77
      %p79 = scmp.eq.s32.totalorder %s32, 0
      %p80 = por %p78, %p79
      %s82 = sadd.s32 %s81, 1
      %p85 = scmp.eq.s32.totalorder %s26, 1
      %p86 = scmp.ne.s32.totalorder %s81, %s83
      %p87 = scmp.eq.s32.totalorder %s26, 0
      %p88 = por %p86, %p87
      %p89 = scmp.ne.s32.totalorder %s81, %s83
      %p90 = scmp.eq.s32.totalorder %s31, 1
      %p91 = por %p89, %p90
      %p92 = scmp.ne.s32.totalorder %s83, %s84
      %p93 = scmp.eq.s32.totalorder %s31, 0
      %p94 = por %p92, %p93
      %p95 = scmp.ne.s32.totalorder %s83, %s84
      %p96 = scmp.eq.s32.totalorder %s32, 1
      %p97 = por %p95, %p96
      %p99 = scmp.ne.s32.totalorder %s84, %s98
      %p100 = scmp.eq.s32.totalorder %s32, 0
      %p101 = por %p99, %p100
      %s103 = sadd.s32 %s102, 1
      %p106 = scmp.eq.s32.totalorder %s26, 1
      %p107 = scmp.ne.s32.totalorder %s102, %s104
      %p108 = scmp.eq.s32.totalorder %s26, 0
      %p109 = por %p107, %p108
      %p110 = scmp.ne.s32.totalorder %s102, %s104
      %p111 = scmp.eq.s32.totalorder %s31, 1
      %p112 = por %p110, %p111
      %p113 = scmp.ne.s32.totalorder %s104, %s105
      %p114 = scmp.eq.s32.totalorder %s31, 0
      %p115 = por %p113, %p114
      %p116 = scmp.ne.s32.totalorder %s104, %s105
      %p117 = scmp.eq.s32.totalorder %s32, 1
      %p118 = por %p116, %p117
      %p120 = scmp.ne.s32.totalorder %s105, %s119
      %p121 = scmp.eq.s32.totalorder %s32, 0
      %p122 = por %p120, %p121
      %s124 = sadd.s32 %s123, 1
      %p127 = scmp.eq.s32.totalorder %s26, 1
      %p128 = scmp.ne.s32.totalorder %s123, %s125
      %p129 = scmp.eq.s32.totalorder %s26, 0
      %p130 = por %p128, %p129
      %p131 = scmp.ne.s32.totalorder %s123, %s125
      %p132 = scmp.eq.s32.totalorder %s31, 1
      %p133 = por %p131, %p132
      %p134 = scmp.ne.s32.totalorder %s125, %s126
      %p135 = scmp.eq.s32.totalorder %s31, 0
      %p136 = por %p134, %p135
      %p137 = scmp.ne.s32.totalorder %s125, %s126
      %p138 = scmp.eq.s32.totalorder %s32, 1
      %p139 = por %p137, %p138
      %p141 = scmp.ne.s32.totalorder %s126, %s140
      %p142 = scmp.eq.s32.totalorder %s32, 0
      %p143 = por %p141, %p142
      %s145 = sadd.s32 %s144, 1
      %p148 = scmp.eq.s32.totalorder %s26, 1
      %p149 = scmp.ne.s32.totalorder %s144, %s146
      %p150 = scmp.eq.s32.totalorder %s26, 0
      %p151 = por %p149, %p150
      %p152 = scmp.ne.s32.totalorder %s144, %s146
      %p153 = scmp.eq.s32.totalorder %s31, 1
      %p154 = por %p152, %p153
      %p155 = scmp.ne.s32.totalorder %s146, %s147
      %p156 = scmp.eq.s32.totalorder %s31, 0
      %p157 = por %p155, %p156
      %p158 = scmp.ne.s32.totalorder %s146, %s147
      %p159 = scmp.eq.s32.totalorder %s32, 1
      %p160 = por %p158, %p159
      %p162 = scmp.ne.s32.totalorder %s147, %s161
      %p163 = scmp.eq.s32.totalorder %s32, 0
      %p164 = por %p162, %p163
      %s166 = sadd.s32 %s165, 1
      %p169 = scmp.eq.s32.totalorder %s26, 1
      %p170 = scmp.ne.s32.totalorder %s165, %s167
      %p171 = scmp.eq.s32.totalorder %s26, 0
      %p172 = por %p170, %p171
      %p173 = scmp.ne.s32.totalorder %s165, %s167
      %p174 = scmp.eq.s32.totalorder %s31, 1
      %p175 = por %p173, %p174
      %p176 = scmp.ne.s32.totalorder %s167, %s168
      %p177 = scmp.eq.s32.totalorder %s31, 0
      %p178 = por %p176, %p177
      %p179 = scmp.ne.s32.totalorder %s167, %s168
      %p180 = scmp.eq.s32.totalorder %s32, 1
      %p181 = por %p179, %p180
      %p183 = scmp.ne.s32.totalorder %s168, %s182
      %p184 = scmp.eq.s32.totalorder %s32, 0
      %p185 = por %p183, %p184
      %s187 = sadd.s32 %s186, 1
      %p190 = scmp.eq.s32.totalorder %s26, 1
      %p191 = scmp.ne.s32.totalorder %s186, %s188
      %p192 = scmp.eq.s32.totalorder %s26, 0
      %p193 = por %p191, %p192
      %p194 = scmp.ne.s32.totalorder %s186, %s188
      %p195 = scmp.eq.s32.totalorder %s31, 1
      %p196 = por %p194, %p195
      %p197 = scmp.ne.s32.totalorder %s188, %s189
      %p198 = scmp.eq.s32.totalorder %s31, 0
      %p199 = por %p197, %p198
      %p200 = scmp.ne.s32.totalorder %s188, %s189
      %p201 = scmp.eq.s32.totalorder %s32, 1
      %p202 = por %p200, %p201
      %p204 = scmp.ne.s32.totalorder %s189, %s203
      %p205 = scmp.eq.s32.totalorder %s32, 0
      %p206 = por %p204, %p205
      %s208 = sadd.s32 %s207, 1
      %p211 = scmp.eq.s32.totalorder %s26, 1
      %p212 = scmp.ne.s32.totalorder %s207, %s209
      %p213 = scmp.eq.s32.totalorder %s26, 0
      %p214 = por %p212, %p213
      %p215 = scmp.ne.s32.totalorder %s207, %s209
      %p216 = scmp.eq.s32.totalorder %s31, 1
      %p217 = por %p215, %p216
      %p218 = scmp.ne.s32.totalorder %s209, %s210
      %p219 = scmp.eq.s32.totalorder %s31, 0
      %p220 = por %p218, %p219
      %p221 = scmp.ne.s32.totalorder %s209, %s210
      %p222 = scmp.eq.s32.totalorder %s32, 1
      %p223 = por %p221, %p222
      %p225 = scmp.ne.s32.totalorder %s210, %s224
      %p226 = scmp.eq.s32.totalorder %s32, 0
      %p227 = por %p225, %p226
      %s229 = sadd.s32 %s228, 1
      %p232 = scmp.eq.s32.totalorder %s26, 1
      %p233 = scmp.ne.s32.totalorder %s228, %s230
      %p234 = scmp.eq.s32.totalorder %s26, 0
      %p235 = por %p233, %p234
      %p236 = scmp.ne.s32.totalorder %s228, %s230
      %p237 = scmp.eq.s32.totalorder %s31, 1
      %p238 = por %p236, %p237
      %p239 = scmp.ne.s32.totalorder %s230, %s231
      %p240 = scmp.eq.s32.totalorder %s31, 0
      %p241 = por %p239, %p240
      %p242 = scmp.ne.s32.totalorder %s230, %s231
      %p243 = scmp.eq.s32.totalorder %s32, 1
      %p244 = por %p242, %p243
      %p246 = scmp.ne.s32.totalorder %s231, %s245
      %p247 = scmp.eq.s32.totalorder %s32, 0
      %p248 = por %p246, %p247
      %s250 = sadd.s32 %s249, 1
      %p253 = scmp.eq.s32.totalorder %s26, 1
      %p254 = scmp.ne.s32.totalorder %s249, %s251
      %p255 = scmp.eq.s32.totalorder %s26, 0
      %p256 = por %p254, %p255
      %p257 = scmp.ne.s32.totalorder %s249, %s251
      %p258 = scmp.eq.s32.totalorder %s31, 1
      %p259 = por %p257, %p258
      %p260 = scmp.ne.s32.totalorder %s251, %s252
      %p261 = scmp.eq.s32.totalorder %s31, 0
      %p262 = por %p260, %p261
      %p263 = scmp.ne.s32.totalorder %s251, %s252
      %p264 = scmp.eq.s32.totalorder %s32, 1
      %p265 = por %p263, %p264
      %p267 = scmp.ne.s32.totalorder %s252, %s266
      %p268 = scmp.eq.s32.totalorder %s32, 0
      %p269 = por %p267, %p268
      %s270 = ssub.s32 %s26, %s33
      %p271 = scmp.eq.s32.totalorder %s270, 0
      %s273 = sadd.s32 %s272, 1
      %s274 = scalar_select %p271, %s272, %s273
      %p277 = pneg %p271
      %p278 = scmp.eq.s32.totalorder %s26, 1
      %p279 = por %p277, %p278
      %p280 = scmp.ne.s32.totalorder %s272, %s275
      %p281 = scmp.eq.s32.totalorder %s26, 0
      %p282 = por %p280, %p281
      %p283 = scmp.ne.s32.totalorder %s272, %s275
      %p284 = scmp.eq.s32.totalorder %s31, 1
      %p285 = por %p283, %p284
      %p286 = scmp.ne.s32.totalorder %s275, %s276
      %p287 = scmp.eq.s32.totalorder %s31, 0
      %p288 = por %p286, %p287
      %p289 = scmp.ne.s32.totalorder %s275, %s276
      %p290 = scmp.eq.s32.totalorder %s32, 1
      %p291 = por %p289, %p290
      %p293 = scmp.ne.s32.totalorder %s276, %s292
      %p294 = scmp.eq.s32.totalorder %s32, 0
      %p295 = por %p293, %p294
      %p296 = scmp.le.s32.totalorder 1, %s26
      %p297 = scmp.lt.s32.totalorder %s26, 3
      %p298 = pnand %p296, %p297
      %p299 = pneg %p298
      // Predicated region
      $region9: #{tpu_custom_call.1} parent=5 // pred_check
        _
      $region10: #{tpu_custom_call.1} parent=5 // pred_check_branch
        %301 = sbr.rel (%p298) target = $region12
      $region11: #{tpu_custom_call.1} parent=5 // pred_region
        %s302 = ssub.s32 %s26, 1
        // Predicated region
        $region13: #{tpu_custom_call.1} parent=11 // pred_check
          %p303 = pneg %p73
        $region14: #{tpu_custom_call.1} parent=11 // pred_check_branch
          %305 = sbr.rel (%p303) target = $region16
        $region15: #{tpu_custom_call.1} parent=11 // pred_region
          %s307 = ssub.s32 2048, 2048
          %308 = vsyncadd [#allocation6], %s307
          %s309 = sshll.u32 [#allocation5], 4
          %s310 = int_to_ptr.vmem [resolvable:$true] %s309
          %315 = dma.hbm_to_vmem [thread:$0]  %s1, 2048, %s310, [#allocation6], 128, 128, 8
        $region16: #{tpu_custom_call.1} parent=11 // pred_fallthru
          _
        // Predicated region
        $region17: #{tpu_custom_call.1} parent=11 // pred_check
          %p316 = pneg %p94
        $region18: #{tpu_custom_call.1} parent=11 // pred_check_branch
          %318 = sbr.rel (%p316) target = $region20
        $region19: #{tpu_custom_call.1} parent=11 // pred_region
          _
        $region20: #{tpu_custom_call.1} parent=11 // pred_fallthru
          _
        // Predicated region
        $region21: #{tpu_custom_call.1} parent=11 // pred_check
          %p319 = pneg %p115
        $region22: #{tpu_custom_call.1} parent=11 // pred_check_branch
          %321 = sbr.rel (%p319) target = $region24
        $region23: #{tpu_custom_call.1} parent=11 // pred_region
          %s323 = ssub.s32 32, 32
          %324 = vsyncadd [#allocation6], %s323
          %s326 = sshll.u32 [#allocation7], 4
          %s327 = int_to_ptr.vmem [resolvable:$true] %s326
          %329 = dma.hbm_to_vmem [thread:$0]  %s3, 32, %s327, [#allocation6]
        $region24: #{tpu_custom_call.1} parent=11 // pred_fallthru
          _
        // Predicated region
        $region25: #{tpu_custom_call.1} parent=11 // pred_check
          %p330 = pneg %p136
        $region26: #{tpu_custom_call.1} parent=11 // pred_check_branch
          %332 = sbr.rel (%p330) target = $region28
        $region27: #{tpu_custom_call.1} parent=11 // pred_region
          %s334 = ssub.s32 32, 32
          %335 = vsyncadd [#allocation9], %s334
          %s337 = sshll.u32 [#allocation8], 4
          %s338 = int_to_ptr.vmem [resolvable:$true] %s337
          %340 = dma.hbm_to_vmem [thread:$0]  %s4, 32, %s338, [#allocation9]
        $region28: #{tpu_custom_call.1} parent=11 // pred_fallthru
          _
        // Predicated region
        $region29: #{tpu_custom_call.1} parent=11 // pred_check
          %p341 = pneg %p157
        $region30: #{tpu_custom_call.1} parent=11 // pred_check_branch
          %343 = sbr.rel (%p341) target = $region32
        $region31: #{tpu_custom_call.1} parent=11 // pred_region
          %s345 = ssub.s32 8192, 8192
          %346 = vsyncadd [#allocation9], %s345
          %s347 = sshll.u32 [#allocation10], 4
          %s348 = int_to_ptr.vmem [resolvable:$true] %s347
          %353 = dma.hbm_to_vmem [thread:$0]  %s5, 8192, %s348, [#allocation9], 256, 256, 16
        $region32: #{tpu_custom_call.1} parent=11 // pred_fallthru
          _
        // Predicated region
        $region33: #{tpu_custom_call.1} parent=11 // pred_check
          %p354 = pneg %p178
        $region34: #{tpu_custom_call.1} parent=11 // pred_check_branch
          %356 = sbr.rel (%p354) target = $region36
        $region35: #{tpu_custom_call.1} parent=11 // pred_region
          _
        $region36: #{tpu_custom_call.1} parent=11 // pred_fallthru
          _
        // Predicated region
        $region37: #{tpu_custom_call.1} parent=11 // pred_check
          %p357 = pneg %p199
        $region38: #{tpu_custom_call.1} parent=11 // pred_check_branch
          %359 = sbr.rel (%p357) target = $region40
        $region39: #{tpu_custom_call.1} parent=11 // pred_region
          %s361 = ssub.s32 8192, 8192
          %362 = vsyncadd [#allocation12], %s361
          %s363 = sshll.u32 [#allocation11], 4
          %s364 = int_to_ptr.vmem [resolvable:$true] %s363
          %369 = dma.hbm_to_vmem [thread:$0]  %s7, 8192, %s364, [#allocation12], 128, 128, 8
        $region40: #{tpu_custom_call.1} parent=11 // pred_fallthru
          _
        // Predicated region
        $region41: #{tpu_custom_call.1} parent=11 // pred_check
          %p370 = pneg %p220
        $region42: #{tpu_custom_call.1} parent=11 // pred_check_branch
          %372 = sbr.rel (%p370) target = $region44
        $region43: #{tpu_custom_call.1} parent=11 // pred_region
          _
        $region44: #{tpu_custom_call.1} parent=11 // pred_fallthru
          _
        // Predicated region
        $region45: #{tpu_custom_call.1} parent=11 // pred_check
          %p373 = pneg %p241
        $region46: #{tpu_custom_call.1} parent=11 // pred_check_branch
          %375 = sbr.rel (%p373) target = $region48
        $region47: #{tpu_custom_call.1} parent=11 // pred_region
          _
        $region48: #{tpu_custom_call.1} parent=11 // pred_fallthru
          _
        // Predicated region
        $region49: #{tpu_custom_call.1} parent=11 // pred_check
          %p376 = pneg %p262
        $region50: #{tpu_custom_call.1} parent=11 // pred_check_branch
          %378 = sbr.rel (%p376) target = $region52
        $region51: #{tpu_custom_call.1} parent=11 // pred_region
          _
        $region52: #{tpu_custom_call.1} parent=11 // pred_fallthru
          _
      $region12: #{tpu_custom_call.1} parent=5 // pred_fallthru
        _
      %p379 = scmp.lt.s32.totalorder %s26, 2
      // Predicated region
      $region53: #{tpu_custom_call.1} parent=5 // pred_check
        %p380 = pneg %p379
      $region54: #{tpu_custom_call.1} parent=5 // pred_check_branch
        %382 = sbr.rel (%p380) target = $region56
      $region55: #{tpu_custom_call.1} parent=5 // pred_region
        // Predicated region
        $region57: #{tpu_custom_call.1} parent=55 // pred_check
          %p383 = pneg %p46
        $region58: #{tpu_custom_call.1} parent=55 // pred_check_branch
          %385 = sbr.rel (%p383) target = $region60
        $region59: #{tpu_custom_call.1} parent=55 // pred_region
          %s386 = sand.u32 %s36, 1
          %s387 = scalar_lea.sflag [#allocation3], %s386
          %s388 = sand.u32 %s36, 1
          %s389 = smul.addr %s388, 128
          %s390 = scalar_lea.vmem [#allocation2], %s389
          %s391 = smul.u32 16, %s26
          %s393 = ssub.s32 2048, 2048
          %394 = vsyncadd %s387, %s393
          %s395 = smul.addr %s391, 128
          %s396 = scalar_lea.hbm %s0, %s395
          %s397 = sshll.u32 %s390, 4
          %s398 = int_to_ptr.vmem [resolvable:$true] %s397
          %403 = dma.hbm_to_vmem [thread:$0]  %s396, 2048, %s398, %s387, 128, 128, 8
        $region60: #{tpu_custom_call.1} parent=55 // pred_fallthru
          _
      $region56: #{tpu_custom_call.1} parent=5 // pred_fallthru
        _
      %p404 = scmp.le.s32.totalorder 1, %s26
      %p405 = scmp.lt.s32.totalorder %s26, 3
      %p406 = pnand %p404, %p405
      %p407 = pneg %p406
      // Predicated region
      $region61: #{tpu_custom_call.1} parent=5 // pred_check
        _
      $region62: #{tpu_custom_call.1} parent=5 // pred_check_branch
        %409 = sbr.rel (%p406) target = $region64
      $region63: #{tpu_custom_call.1} parent=5 // pred_region
        %s410 = ssub.s32 %s26, 1
        %s411 = sand.u32 %s39, 1
        %s412 = scalar_lea.sflag [#allocation3], %s411
        %s413 = sand.u32 %s39, 1
        %s414 = smul.addr %s413, 128
        %s415 = scalar_lea.vmem [#allocation2], %s414
        // Predicated region
        $region65: #{tpu_custom_call.1} parent=63 // pred_check
          %p416 = pneg %p52
        $region66: #{tpu_custom_call.1} parent=63 // pred_check_branch
          %418 = sbr.rel (%p416) target = $region68
        $region67: #{tpu_custom_call.1} parent=63 // pred_region
          %419 = dma.done %s412, 2048
        $region68: #{tpu_custom_call.1} parent=63 // pred_fallthru
          _
        // Predicated region
        $region69: #{tpu_custom_call.1} parent=63 // pred_check
          %p420 = pneg %p73
        $region70: #{tpu_custom_call.1} parent=63 // pred_check_branch
          %422 = sbr.rel (%p420) target = $region72
        $region71: #{tpu_custom_call.1} parent=63 // pred_region
          %423 = dma.done [#allocation6], 2048
        $region72: #{tpu_custom_call.1} parent=63 // pred_fallthru
          _
        // Predicated region
        $region73: #{tpu_custom_call.1} parent=63 // pred_check
          %p424 = pneg %p115
        $region74: #{tpu_custom_call.1} parent=63 // pred_check_branch
          %426 = sbr.rel (%p424) target = $region76
        $region75: #{tpu_custom_call.1} parent=63 // pred_region
          %427 = dma.done [#allocation6], 32
        $region76: #{tpu_custom_call.1} parent=63 // pred_fallthru
          _
        // Predicated region
        $region77: #{tpu_custom_call.1} parent=63 // pred_check
          %p428 = pneg %p136
        $region78: #{tpu_custom_call.1} parent=63 // pred_check_branch
          %430 = sbr.rel (%p428) target = $region80
        $region79: #{tpu_custom_call.1} parent=63 // pred_region
          %431 = dma.done [#allocation9], 32
        $region80: #{tpu_custom_call.1} parent=63 // pred_fallthru
          _
        // Predicated region
        $region81: #{tpu_custom_call.1} parent=63 // pred_check
          %p432 = pneg %p157
        $region82: #{tpu_custom_call.1} parent=63 // pred_check_branch
          %434 = sbr.rel (%p432) target = $region84
        $region83: #{tpu_custom_call.1} parent=63 // pred_region
          %435 = dma.done [#allocation9], 8192
        $region84: #{tpu_custom_call.1} parent=63 // pred_fallthru
          _
        // Predicated region
        $region85: #{tpu_custom_call.1} parent=63 // pred_check
          %p436 = pneg %p199
        $region86: #{tpu_custom_call.1} parent=63 // pred_check_branch
          %438 = sbr.rel (%p436) target = $region88
        $region87: #{tpu_custom_call.1} parent=63 // pred_region
          %439 = dma.done [#allocation12], 8192
        $region88: #{tpu_custom_call.1} parent=63 // pred_fallthru
          _
        %s440 = sand.u32 %s39, 1
        %s441 = scalar_lea.sflag [#allocation3], %s440
        %s442 = sand.u32 %s39, 1
        %s443 = smul.addr %s442, 128
        %s444 = scalar_lea.vmem [#allocation2], %s443
        %p445 = pneg %p52
        %p446 = pneg %p49
        %p447 = pneg %p73
        %p448 = pneg %p70
        %p449 = pneg %p94
        %p450 = pneg %p91
        %p451 = pneg %p115
        %p452 = pneg %p112
        %p453 = pneg %p136
        %p454 = pneg %p133
        %p455 = pneg %p157
        %p456 = pneg %p154
        %p457 = pneg %p178
        %p458 = pneg %p175
        %p459 = pneg %p199
        %p460 = pneg %p196
        %p461 = pneg %p220
        %p462 = pneg %p217
        %p463 = pneg %p241
        %p464 = pneg %p238
        %p465 = pneg %p262
        %p466 = pneg %p259
        %p467 = pneg %p288
        %p468 = pneg %p285
        %s469 = sand.u32 %s275, 1
        %s470 = scalar_lea.sflag [#allocation4], %s469
        %s471 = sand.u32 %s275, 1
        %s472 = smul.addr %s471, 256
        %s473 = scalar_lea.vmem [#allocation13], %s472
        %s474 = smul.u32 16, %s31
        %s475 = smul.u32 16, %s31
        %v477 = vld [vmem:[%s415] sm:$0xff]
        %v478 = vld [vmem:[%s415 + $0x8] sm:$0xff]
        %v479 = vld [vmem:[%s415 + $0x10] sm:$0xff]
        %v480 = vld [vmem:[%s415 + $0x18] sm:$0xff]
        %v481 = vld [vmem:[%s415 + $0x20] sm:$0xff]
        %v482 = vld [vmem:[%s415 + $0x28] sm:$0xff]
        %v483 = vld [vmem:[%s415 + $0x30] sm:$0xff]
        %v484 = vld [vmem:[%s415 + $0x38] sm:$0xff]
        %v485 = vld [vmem:[%s415 + $0x40] sm:$0xff]
        %v486 = vld [vmem:[%s415 + $0x48] sm:$0xff]
        %v487 = vld [vmem:[%s415 + $0x50] sm:$0xff]
        %v488 = vld [vmem:[%s415 + $0x58] sm:$0xff]
        %v489 = vld [vmem:[%s415 + $0x60] sm:$0xff]
        %v490 = vld [vmem:[%s415 + $0x68] sm:$0xff]
        %v491 = vld [vmem:[%s415 + $0x70] sm:$0xff]
        %v492 = vld [vmem:[%s415 + $0x78] sm:$0xff]
        %v493 = vpack.c.bf16 %v478, %v477
        %v494 = vpack.c.bf16 %v480, %v479
        %v495 = vpack.c.bf16 %v482, %v481
        %v496 = vpack.c.bf16 %v484, %v483
        %v497 = vpack.c.bf16 %v486, %v485
        %v498 = vpack.c.bf16 %v488, %v487
        %v499 = vpack.c.bf16 %v490, %v489
        %v500 = vpack.c.bf16 %v492, %v491
        %v501 = vld [vmem:[#allocation5] sm:$0xff]
        %v502 = vld [vmem:[#allocation5 + $0x8] sm:$0xff]
        %v503 = vld [vmem:[#allocation5 + $0x10] sm:$0xff]
        %v504 = vld [vmem:[#allocation5 + $0x18] sm:$0xff]
        %v505 = vld [vmem:[#allocation5 + $0x20] sm:$0xff]
        %v506 = vld [vmem:[#allocation5 + $0x28] sm:$0xff]
        %v507 = vld [vmem:[#allocation5 + $0x30] sm:$0xff]
        %v508 = vld [vmem:[#allocation5 + $0x38] sm:$0xff]
        %v509 = vld [vmem:[#allocation5 + $0x40] sm:$0xff]
        %v510 = vld [vmem:[#allocation5 + $0x48] sm:$0xff]
        %v511 = vld [vmem:[#allocation5 + $0x50] sm:$0xff]
        %v512 = vld [vmem:[#allocation5 + $0x58] sm:$0xff]
        %v513 = vld [vmem:[#allocation5 + $0x60] sm:$0xff]
        %v514 = vld [vmem:[#allocation5 + $0x68] sm:$0xff]
        %v515 = vld [vmem:[#allocation5 + $0x70] sm:$0xff]
        %v516 = vld [vmem:[#allocation5 + $0x78] sm:$0xff]
        %v517 = vld [vmem:[%s2] sm:$0x3]
        %v519 = vlaneseq
        %v520 = vshrl.u32 %v519, 7
        %v521 = vsub.s32 0, %v520
        %v522 = vrot.slane %v517, %v521
        %v523 = vlaneseq
        %v524 = vshrl.u32 %v523, 7
        %v525 = vsub.s32 1, %v524
        %v526 = vrot.slane %v517, %v525
        %v545 = vunpack.c.l.b16 %v501
        %v546 = vunpack.c.h.b16 %v501
        %v547 = vunpack.c.l.b16 %v502
        %v548 = vunpack.c.h.b16 %v502
        %v549 = vunpack.c.l.b16 %v503
        %v550 = vunpack.c.h.b16 %v503
        %v551 = vunpack.c.l.b16 %v504
        %v552 = vunpack.c.h.b16 %v504
        %v553 = vunpack.c.l.b16 %v505
        %v554 = vunpack.c.h.b16 %v505
        %v555 = vunpack.c.l.b16 %v506
        %v556 = vunpack.c.h.b16 %v506
        %v557 = vunpack.c.l.b16 %v507
        %v558 = vunpack.c.h.b16 %v507
        %v559 = vunpack.c.l.b16 %v508
        %v560 = vunpack.c.h.b16 %v508
        %v561 = vunpack.c.l.b16 %v509
        %v562 = vunpack.c.h.b16 %v509
        %v563 = vunpack.c.l.b16 %v510
        %v564 = vunpack.c.h.b16 %v510
        %v565 = vunpack.c.l.b16 %v511
        %v566 = vunpack.c.h.b16 %v511
        %v567 = vunpack.c.l.b16 %v512
        %v568 = vunpack.c.h.b16 %v512
        %v569 = vunpack.c.l.b16 %v513
        %v570 = vunpack.c.h.b16 %v513
        %v571 = vunpack.c.l.b16 %v514
        %v572 = vunpack.c.h.b16 %v514
        %v573 = vunpack.c.l.b16 %v515
        %v574 = vunpack.c.h.b16 %v515
        %v575 = vunpack.c.l.b16 %v516
        %v576 = vunpack.c.h.b16 %v516
        %v577 = vpack.c.b16 %v547, %v545
        %v578 = vpack.c.b16 %v548, %v546
        %v579 = vpack.c.b16 %v551, %v549
        %v580 = vpack.c.b16 %v552, %v550
        %v581 = vpack.c.b16 %v555, %v553
        %v582 = vpack.c.b16 %v556, %v554
        %v583 = vpack.c.b16 %v559, %v557
        %v584 = vpack.c.b16 %v560, %v558
        %v585 = vpack.c.b16 %v563, %v561
        %v586 = vpack.c.b16 %v564, %v562
        %v587 = vpack.c.b16 %v567, %v565
        %v588 = vpack.c.b16 %v568, %v566
        %v589 = vpack.c.b16 %v571, %v569
        %v590 = vpack.c.b16 %v572, %v570
        %v591 = vpack.c.b16 %v575, %v573
        %v592 = vpack.c.b16 %v576, %v574
        %609 = vmatprep.subr.bf16.mxu0 %v592
        %610 = vmatpush1.bf16.msra.mxu0 %v591
        %611 = vmatprep.subr.bf16.mxu0 %v590
        %612 = vmatpush1.bf16.msra.mxu0 %v589
        %613 = vmatprep.subr.bf16.mxu0 %v588
        %614 = vmatpush1.bf16.msra.mxu0 %v587
        %615 = vmatprep.subr.bf16.mxu0 %v586
        %616 = vmatpush1.bf16.msra.mxu0 %v585
        %617 = vmatprep.subr.bf16.mxu0 %v584
        %618 = vmatpush1.bf16.msra.mxu0 %v583
        %619 = vmatprep.subr.bf16.mxu0 %v582
        %620 = vmatpush1.bf16.msra.mxu0 %v581
        %621 = vmatprep.subr.bf16.mxu0 %v580
        %622 = vmatpush1.bf16.msra.mxu0 %v579
        %623 = vmatprep.subr.bf16.mxu0 %v578
        %624 = vmatpush1.bf16.msra.mxu0 %v577
        %625 = vmatprep.subr.bf16.mxu0 0
        %626 = vmatpush2.bf16.msra.mxu0 0
        %627 = vmatprep.subr.bf16.mxu0 0
        %628 = vmatpush2.bf16.msra.mxu0 0
        %629 = vmatprep.subr.bf16.mxu0 0
        %630 = vmatpush2.bf16.msra.mxu0 0
        %631 = vmatprep.subr.bf16.mxu0 0
        %632 = vmatpush2.bf16.msra.mxu0 0
        %633 = vmatprep.subr.bf16.mxu0 0
        %634 = vmatpush2.bf16.msra.mxu0 0
        %635 = vmatprep.subr.bf16.mxu0 0
        %636 = vmatpush2.bf16.msra.mxu0 0
        %637 = vmatprep.subr.bf16.mxu0 0
        %638 = vmatpush2.bf16.msra.mxu0 0
        %639 = vmatprep.subr.bf16.mxu0 0
        %640 = vmatpush2.bf16.msra.mxu0 0
        %641 = vmatprep.mubr.bf16.mxu0 0
        %642 = vmatmul.mubr.bf16.gmra.mxu0 %v493
        %v643 = vpop.f32.mrf.mxu0
        %v644 = vadd.f32 %v522, %v643
        %v645 = vpop.f32.mrf.mxu0
        %v646 = vadd.f32 %v526, %v645
        %v647 = vpop.f32.mrf.mxu0
        %v648 = vadd.f32 %v522, %v647
        %v649 = vpop.f32.mrf.mxu0
        %v650 = vadd.f32 %v526, %v649
        %651 = vmatprep.mubr.bf16.mxu0 0
        %652 = vmatmul.mubr.bf16.gmra.mxu0 %v494
        %v653 = vpop.f32.mrf.mxu0
        %v654 = vadd.f32 %v522, %v653
        %v655 = vpop.f32.mrf.mxu0
        %v656 = vadd.f32 %v526, %v655
        %v657 = vpop.f32.mrf.mxu0
        %v658 = vadd.f32 %v522, %v657
        %v659 = vpop.f32.mrf.mxu0
        %v660 = vadd.f32 %v526, %v659
        %661 = vmatprep.mubr.bf16.mxu0 0
        %662 = vmatmul.mubr.bf16.gmra.mxu0 %v495
        %v663 = vpop.f32.mrf.mxu0
        %v664 = vadd.f32 %v522, %v663
        %v665 = vpop.f32.mrf.mxu0
        %v666 = vadd.f32 %v526, %v665
        %v667 = vpop.f32.mrf.mxu0
        %v668 = vadd.f32 %v522, %v667
        %v669 = vpop.f32.mrf.mxu0
        %v670 = vadd.f32 %v526, %v669
        %671 = vmatprep.mubr.bf16.mxu0 0
        %672 = vmatmul.mubr.bf16.gmra.mxu0 %v496
        %v673 = vpop.f32.mrf.mxu0
        %v674 = vadd.f32 %v522, %v673
        %v675 = vpop.f32.mrf.mxu0
        %v676 = vadd.f32 %v526, %v675
        %v677 = vpop.f32.mrf.mxu0
        %v678 = vadd.f32 %v522, %v677
        %v679 = vpop.f32.mrf.mxu0
        %v680 = vadd.f32 %v526, %v679
        %681 = vmatprep.mubr.bf16.mxu0 0
        %682 = vmatmul.mubr.bf16.gmra.mxu0 %v497
        %v683 = vpop.f32.mrf.mxu0
        %v684 = vadd.f32 %v522, %v683
        %v685 = vpop.f32.mrf.mxu0
        %v686 = vadd.f32 %v526, %v685
        %v687 = vpop.f32.mrf.mxu0
        %v688 = vadd.f32 %v522, %v687
        %v689 = vpop.f32.mrf.mxu0
        %v690 = vadd.f32 %v526, %v689
        %691 = vmatprep.mubr.bf16.mxu0 0
        %692 = vmatmul.mubr.bf16.gmra.mxu0 %v498
        %v693 = vpop.f32.mrf.mxu0
        %v694 = vadd.f32 %v522, %v693
        %v695 = vpop.f32.mrf.mxu0
        %v696 = vadd.f32 %v526, %v695
        %v697 = vpop.f32.mrf.mxu0
        %v698 = vadd.f32 %v522, %v697
        %v699 = vpop.f32.mrf.mxu0
        %v700 = vadd.f32 %v526, %v699
        %701 = vmatprep.mubr.bf16.mxu0 0
        %702 = vmatmul.mubr.bf16.gmra.mxu0 %v499
        %v703 = vpop.f32.mrf.mxu0
        %v704 = vadd.f32 %v522, %v703
        %v705 = vpop.f32.mrf.mxu0
        %v706 = vadd.f32 %v526, %v705
        %v707 = vpop.f32.mrf.mxu0
        %v708 = vadd.f32 %v522, %v707
        %v709 = vpop.f32.mrf.mxu0
        %v710 = vadd.f32 %v526, %v709
        %711 = vmatprep.mubr.bf16.mxu0 0
        %712 = vmatmul.mubr.bf16.gmra.mxu0 %v500
        %v713 = vpop.f32.mrf.mxu0
        %v714 = vadd.f32 %v522, %v713
        %v715 = vpop.f32.mrf.mxu0
        %v716 = vadd.f32 %v526, %v715
        %v717 = vpop.f32.mrf.mxu0
        %v718 = vadd.f32 %v522, %v717
        %v719 = vpop.f32.mrf.mxu0
        %v720 = vadd.f32 %v526, %v719
        %721 = vdwg.mxu0
        %v722 = vld [vmem:[#allocation7] sm:$0x3]
        %v723 = vld [vmem:[#allocation8] sm:$0x3]
        %v724 = vadd.f32 %v644, %v646
        %725 = vadd.xlane.f32.xlu0 %v724
        %v726 = vpop.xlane.xlu0 %725
        %v727 = vadd.f32 %v648, %v650
        %728 = vadd.xlane.f32.xlu0 %v727
        %v729 = vpop.xlane.xlu0 %728
        %v730 = vadd.f32 %v654, %v656
        %731 = vadd.xlane.f32.xlu0 %v730
        %v732 = vpop.xlane.xlu0 %731
        %v733 = vadd.f32 %v658, %v660
        %734 = vadd.xlane.f32.xlu0 %v733
        %v735 = vpop.xlane.xlu0 %734
        %v736 = vadd.f32 %v664, %v666
        %737 = vadd.xlane.f32.xlu0 %v736
        %v738 = vpop.xlane.xlu0 %737
        %v739 = vadd.f32 %v668, %v670
        %740 = vadd.xlane.f32.xlu0 %v739
        %v741 = vpop.xlane.xlu0 %740
        %v742 = vadd.f32 %v674, %v676
        %743 = vadd.xlane.f32.xlu0 %v742
        %v744 = vpop.xlane.xlu0 %743
        %v745 = vadd.f32 %v678, %v680
        %746 = vadd.xlane.f32.xlu0 %v745
        %v747 = vpop.xlane.xlu0 %746
        %v748 = vadd.f32 %v684, %v686
        %749 = vadd.xlane.f32.xlu0 %v748
        %v750 = vpop.xlane.xlu0 %749
        %v751 = vadd.f32 %v688, %v690
        %752 = vadd.xlane.f32.xlu0 %v751
        %v753 = vpop.xlane.xlu0 %752
        %v754 = vadd.f32 %v694, %v696
        %755 = vadd.xlane.f32.xlu0 %v754
        %v756 = vpop.xlane.xlu0 %755
        %v757 = vadd.f32 %v698, %v700
        %758 = vadd.xlane.f32.xlu0 %v757
        %v759 = vpop.xlane.xlu0 %758
        %v760 = vadd.f32 %v704, %v706
        %761 = vadd.xlane.f32.xlu0 %v760
        %v762 = vpop.xlane.xlu0 %761
        %v763 = vadd.f32 %v708, %v710
        %764 = vadd.xlane.f32.xlu0 %v763
        %v765 = vpop.xlane.xlu0 %764
        %v766 = vadd.f32 %v714, %v716
        %767 = vadd.xlane.f32.xlu0 %v766
        %v768 = vpop.xlane.xlu0 %767
        %v769 = vadd.f32 %v718, %v720
        %770 = vadd.xlane.f32.xlu0 %v769
        %v771 = vpop.xlane.xlu0 %770
        %v772 = vmul.f32 %v644, %v644
        %v773 = vmul.f32 %v646, %v646
        %v774 = vmul.f32 %v648, %v648
        %v775 = vmul.f32 %v650, %v650
        %v776 = vmul.f32 %v654, %v654
        %v777 = vmul.f32 %v656, %v656
        %v778 = vmul.f32 %v658, %v658
        %v779 = vmul.f32 %v660, %v660
        %v780 = vmul.f32 %v664, %v664
        %v781 = vmul.f32 %v666, %v666
        %v782 = vmul.f32 %v668, %v668
        %v783 = vmul.f32 %v670, %v670
        %v784 = vmul.f32 %v674, %v674
        %v785 = vmul.f32 %v676, %v676
        %v786 = vmul.f32 %v678, %v678
        %v787 = vmul.f32 %v680, %v680
        %v788 = vmul.f32 %v684, %v684
        %v789 = vmul.f32 %v686, %v686
        %v790 = vmul.f32 %v688, %v688
        %v791 = vmul.f32 %v690, %v690
        %v792 = vmul.f32 %v694, %v694
        %v793 = vmul.f32 %v696, %v696
        %v794 = vmul.f32 %v698, %v698
        %v795 = vmul.f32 %v700, %v700
        %v796 = vmul.f32 %v704, %v704
        %v797 = vmul.f32 %v706, %v706
        %v798 = vmul.f32 %v708, %v708
        %v799 = vmul.f32 %v710, %v710
        %v800 = vmul.f32 %v714, %v714
        %v801 = vmul.f32 %v716, %v716
        %v802 = vmul.f32 %v718, %v718
        %v803 = vmul.f32 %v720, %v720
        %v804 = vadd.f32 %v772, %v773
        %805 = vadd.xlane.f32.xlu0 %v804
        %v806 = vpop.xlane.xlu0 %805
        %v807 = vadd.f32 %v774, %v775
        %808 = vadd.xlane.f32.xlu0 %v807
        %v809 = vpop.xlane.xlu0 %808
        %v810 = vadd.f32 %v776, %v777
        %811 = vadd.xlane.f32.xlu0 %v810
        %v812 = vpop.xlane.xlu0 %811
        %v813 = vadd.f32 %v778, %v779
        %814 = vadd.xlane.f32.xlu0 %v813
        %v815 = vpop.xlane.xlu0 %814
        %v816 = vadd.f32 %v780, %v781
        %817 = vadd.xlane.f32.xlu0 %v816
        %v818 = vpop.xlane.xlu0 %817
        %v819 = vadd.f32 %v782, %v783
        %820 = vadd.xlane.f32.xlu0 %v819
        %v821 = vpop.xlane.xlu0 %820
        %v822 = vadd.f32 %v784, %v785
        %823 = vadd.xlane.f32.xlu0 %v822
        %v824 = vpop.xlane.xlu0 %823
        %v825 = vadd.f32 %v786, %v787
        %826 = vadd.xlane.f32.xlu0 %v825
        %v827 = vpop.xlane.xlu0 %826
        %v828 = vadd.f32 %v788, %v789
        %829 = vadd.xlane.f32.xlu0 %v828
        %v830 = vpop.xlane.xlu0 %829
        %v831 = vadd.f32 %v790, %v791
        %832 = vadd.xlane.f32.xlu0 %v831
        %v833 = vpop.xlane.xlu0 %832
        %v834 = vadd.f32 %v792, %v793
        %835 = vadd.xlane.f32.xlu0 %v834
        %v836 = vpop.xlane.xlu0 %835
        %v837 = vadd.f32 %v794, %v795
        %838 = vadd.xlane.f32.xlu0 %v837
        %v839 = vpop.xlane.xlu0 %838
        %v840 = vadd.f32 %v796, %v797
        %841 = vadd.xlane.f32.xlu0 %v840
        %v842 = vpop.xlane.xlu0 %841
        %v843 = vadd.f32 %v798, %v799
        %844 = vadd.xlane.f32.xlu0 %v843
        %v845 = vpop.xlane.xlu0 %844
        %v846 = vadd.f32 %v800, %v801
        %847 = vadd.xlane.f32.xlu0 %v846
        %v848 = vpop.xlane.xlu0 %847
        %v849 = vadd.f32 %v802, %v803
        %850 = vadd.xlane.f32.xlu0 %v849
        %v851 = vpop.xlane.xlu0 %850
        %v852 = vmul.f32 %v726, 0.00390625
        %v853 = vmul.f32 %v729, 0.00390625
        %v854 = vmul.f32 %v732, 0.00390625
        %v855 = vmul.f32 %v735, 0.00390625
        %v856 = vmul.f32 %v738, 0.00390625
        %v857 = vmul.f32 %v741, 0.00390625
        %v858 = vmul.f32 %v744, 0.00390625
        %v859 = vmul.f32 %v747, 0.00390625
        %v860 = vmul.f32 %v750, 0.00390625
        %v861 = vmul.f32 %v753, 0.00390625
        %v862 = vmul.f32 %v756, 0.00390625
        %v863 = vmul.f32 %v759, 0.00390625
        %v864 = vmul.f32 %v762, 0.00390625
        %v865 = vmul.f32 %v765, 0.00390625
        %v866 = vmul.f32 %v768, 0.00390625
        %v867 = vmul.f32 %v771, 0.00390625
        %v868 = vmul.f32 %v806, 0.00390625
        %v869 = vmul.f32 %v809, 0.00390625
        %v870 = vmul.f32 %v812, 0.00390625
        %v871 = vmul.f32 %v815, 0.00390625
        %v872 = vmul.f32 %v818, 0.00390625
        %v873 = vmul.f32 %v821, 0.00390625
        %v874 = vmul.f32 %v824, 0.00390625
        %v875 = vmul.f32 %v827, 0.00390625
        %v876 = vmul.f32 %v830, 0.00390625
        %v877 = vmul.f32 %v833, 0.00390625
        %v878 = vmul.f32 %v836, 0.00390625
        %v879 = vmul.f32 %v839, 0.00390625
        %v880 = vmul.f32 %v842, 0.00390625
        %v881 = vmul.f32 %v845, 0.00390625
        %v882 = vmul.f32 %v848, 0.00390625
        %v883 = vmul.f32 %v851, 0.00390625
        %v884 = vmul.f32 %v852, %v852
        %v885 = vmul.f32 %v853, %v853
        %v886 = vmul.f32 %v854, %v854
        %v887 = vmul.f32 %v855, %v855
        %v888 = vmul.f32 %v856, %v856
        %v889 = vmul.f32 %v857, %v857
        %v890 = vmul.f32 %v858, %v858
        %v891 = vmul.f32 %v859, %v859
        %v892 = vmul.f32 %v860, %v860
        %v893 = vmul.f32 %v861, %v861
        %v894 = vmul.f32 %v862, %v862
        %v895 = vmul.f32 %v863, %v863
        %v896 = vmul.f32 %v864, %v864
        %v897 = vmul.f32 %v865, %v865
        %v898 = vmul.f32 %v866, %v866
        %v899 = vmul.f32 %v867, %v867
        %v900 = vsub.f32 %v868, %v884
        %v901 = vsub.f32 %v869, %v885
        %v902 = vsub.f32 %v870, %v886
        %v903 = vsub.f32 %v871, %v887
        %v904 = vsub.f32 %v872, %v888
        %v905 = vsub.f32 %v873, %v889
        %v906 = vsub.f32 %v874, %v890
        %v907 = vsub.f32 %v875, %v891
        %v908 = vsub.f32 %v876, %v892
        %v909 = vsub.f32 %v877, %v893
        %v910 = vsub.f32 %v878, %v894
        %v911 = vsub.f32 %v879, %v895
        %v912 = vsub.f32 %v880, %v896
        %v913 = vsub.f32 %v881, %v897
        %v914 = vsub.f32 %v882, %v898
        %v915 = vsub.f32 %v883, %v899
        %v916 = vmax.f32 %v900, 0.0
        %v917 = vmax.f32 %v901, 0.0
        %v918 = vmax.f32 %v902, 0.0
        %v919 = vmax.f32 %v903, 0.0
        %v920 = vmax.f32 %v904, 0.0
        %v921 = vmax.f32 %v905, 0.0
        %v922 = vmax.f32 %v906, 0.0
        %v923 = vmax.f32 %v907, 0.0
        %v924 = vmax.f32 %v908, 0.0
        %v925 = vmax.f32 %v909, 0.0
        %v926 = vmax.f32 %v910, 0.0
        %v927 = vmax.f32 %v911, 0.0
        %v928 = vmax.f32 %v912, 0.0
        %v929 = vmax.f32 %v913, 0.0
        %v930 = vmax.f32 %v914, 0.0
        %v931 = vmax.f32 %v915, 0.0
        %v932 = vsub.f32 %v644, %v852
        %v933 = vsub.f32 %v646, %v852
        %v934 = vsub.f32 %v648, %v853
        %v935 = vsub.f32 %v650, %v853
        %v936 = vsub.f32 %v654, %v854
        %v937 = vsub.f32 %v656, %v854
        %v938 = vsub.f32 %v658, %v855
        %v939 = vsub.f32 %v660, %v855
        %v940 = vsub.f32 %v664, %v856
        %v941 = vsub.f32 %v666, %v856
        %v942 = vsub.f32 %v668, %v857
        %v943 = vsub.f32 %v670, %v857
        %v944 = vsub.f32 %v674, %v858
        %v945 = vsub.f32 %v676, %v858
        %v946 = vsub.f32 %v678, %v859
        %v947 = vsub.f32 %v680, %v859
        %v948 = vsub.f32 %v684, %v860
        %v949 = vsub.f32 %v686, %v860
        %v950 = vsub.f32 %v688, %v861
        %v951 = vsub.f32 %v690, %v861
        %v952 = vsub.f32 %v694, %v862
        %v953 = vsub.f32 %v696, %v862
        %v954 = vsub.f32 %v698, %v863
        %v955 = vsub.f32 %v700, %v863
        %v956 = vsub.f32 %v704, %v864
        %v957 = vsub.f32 %v706, %v864
        %v958 = vsub.f32 %v708, %v865
        %v959 = vsub.f32 %v710, %v865
        %v960 = vsub.f32 %v714, %v866
        %v961 = vsub.f32 %v716, %v866
        %v962 = vsub.f32 %v718, %v867
        %v963 = vsub.f32 %v720, %v867
        %v964 = vadd.f32 %v916, 1e-05
        %v965 = vadd.f32 %v917, 1e-05
        %v966 = vadd.f32 %v918, 1e-05
        %v967 = vadd.f32 %v919, 1e-05
        %v968 = vadd.f32 %v920, 1e-05
        %v969 = vadd.f32 %v921, 1e-05
        %v970 = vadd.f32 %v922, 1e-05
        %v971 = vadd.f32 %v923, 1e-05
        %v972 = vadd.f32 %v924, 1e-05
        %v973 = vadd.f32 %v925, 1e-05
        %v974 = vadd.f32 %v926, 1e-05
        %v975 = vadd.f32 %v927, 1e-05
        %v976 = vadd.f32 %v928, 1e-05
        %v977 = vadd.f32 %v929, 1e-05
        %v978 = vadd.f32 %v930, 1e-05
        %v979 = vadd.f32 %v931, 1e-05
        %v980 = vrsqrt.pop %v964
        %v981 = vrsqrt.pop %v965
        %v982 = vrsqrt.pop %v966
        %v983 = vrsqrt.pop %v967
        %v984 = vrsqrt.pop %v968
        %v985 = vrsqrt.pop %v969
        %v986 = vrsqrt.pop %v970
        %v987 = vrsqrt.pop %v971
        %v988 = vrsqrt.pop %v972
        %v989 = vrsqrt.pop %v973
        %v990 = vrsqrt.pop %v974
        %v991 = vrsqrt.pop %v975
        %v992 = vrsqrt.pop %v976
        %v993 = vrsqrt.pop %v977
        %v994 = vrsqrt.pop %v978
        %v995 = vrsqrt.pop %v979
        %v996 = vmul.f32 %v932, %v980
        %v997 = vmul.f32 %v933, %v980
        %v998 = vmul.f32 %v934, %v981
        %v999 = vmul.f32 %v935, %v981
        %v1000 = vmul.f32 %v936, %v982
        %v1001 = vmul.f32 %v937, %v982
        %v1002 = vmul.f32 %v938, %v983
        %v1003 = vmul.f32 %v939, %v983
        %v1004 = vmul.f32 %v940, %v984
        %v1005 = vmul.f32 %v941, %v984
        %v1006 = vmul.f32 %v942, %v985
        %v1007 = vmul.f32 %v943, %v985
        %v1008 = vmul.f32 %v944, %v986
        %v1009 = vmul.f32 %v945, %v986
        %v1010 = vmul.f32 %v946, %v987
        %v1011 = vmul.f32 %v947, %v987
        %v1012 = vmul.f32 %v948, %v988
        %v1013 = vmul.f32 %v949, %v988
        %v1014 = vmul.f32 %v950, %v989
        %v1015 = vmul.f32 %v951, %v989
        %v1016 = vmul.f32 %v952, %v990
        %v1017 = vmul.f32 %v953, %v990
        %v1018 = vmul.f32 %v954, %v991
        %v1019 = vmul.f32 %v955, %v991
        %v1020 = vmul.f32 %v956, %v992
        %v1021 = vmul.f32 %v957, %v992
        %v1022 = vmul.f32 %v958, %v993
        %v1023 = vmul.f32 %v959, %v993
        %v1024 = vmul.f32 %v960, %v994
        %v1025 = vmul.f32 %v961, %v994
        %v1026 = vmul.f32 %v962, %v995
        %v1027 = vmul.f32 %v963, %v995
        %v1029 = vlaneseq
        %v1030 = vshrl.u32 %v1029, 7
        %v1031 = vsub.s32 0, %v1030
        %v1032 = vrot.slane %v722, %v1031
        %v1033 = vlaneseq
        %v1034 = vshrl.u32 %v1033, 7
        %v1035 = vsub.s32 1, %v1034
        %v1036 = vrot.slane %v722, %v1035
        %v1039 = vmul.f32 %v996, %v1032
        %v1040 = vmul.f32 %v997, %v1036
        %v1041 = vmul.f32 %v998, %v1032
        %v1042 = vmul.f32 %v999, %v1036
        %v1043 = vmul.f32 %v1000, %v1032
        %v1044 = vmul.f32 %v1001, %v1036
        %v1045 = vmul.f32 %v1002, %v1032
        %v1046 = vmul.f32 %v1003, %v1036
        %v1047 = vmul.f32 %v1004, %v1032
        %v1048 = vmul.f32 %v1005, %v1036
        %v1049 = vmul.f32 %v1006, %v1032
        %v1050 = vmul.f32 %v1007, %v1036
        %v1051 = vmul.f32 %v1008, %v1032
        %v1052 = vmul.f32 %v1009, %v1036
        %v1053 = vmul.f32 %v1010, %v1032
        %v1054 = vmul.f32 %v1011, %v1036
        %v1055 = vmul.f32 %v1012, %v1032
        %v1056 = vmul.f32 %v1013, %v1036
        %v1057 = vmul.f32 %v1014, %v1032
        %v1058 = vmul.f32 %v1015, %v1036
        %v1059 = vmul.f32 %v1016, %v1032
        %v1060 = vmul.f32 %v1017, %v1036
        %v1061 = vmul.f32 %v1018, %v1032
        %v1062 = vmul.f32 %v1019, %v1036
        %v1063 = vmul.f32 %v1020, %v1032
        %v1064 = vmul.f32 %v1021, %v1036
        %v1065 = vmul.f32 %v1022, %v1032
        %v1066 = vmul.f32 %v1023, %v1036
        %v1067 = vmul.f32 %v1024, %v1032
        %v1068 = vmul.f32 %v1025, %v1036
        %v1069 = vmul.f32 %v1026, %v1032
        %v1070 = vmul.f32 %v1027, %v1036
        %v1072 = vlaneseq
        %v1073 = vshrl.u32 %v1072, 7
        %v1074 = vsub.s32 0, %v1073
        %v1075 = vrot.slane %v723, %v1074
        %v1076 = vlaneseq
        %v1077 = vshrl.u32 %v1076, 7
        %v1078 = vsub.s32 1, %v1077
        %v1079 = vrot.slane %v723, %v1078
        %v1082 = vadd.f32 %v1039, %v1075
        %v1083 = vadd.f32 %v1040, %v1079
        %v1084 = vadd.f32 %v1041, %v1075
        %v1085 = vadd.f32 %v1042, %v1079
        %v1086 = vadd.f32 %v1043, %v1075
        %v1087 = vadd.f32 %v1044, %v1079
        %v1088 = vadd.f32 %v1045, %v1075
        %v1089 = vadd.f32 %v1046, %v1079
        %v1090 = vadd.f32 %v1047, %v1075
        %v1091 = vadd.f32 %v1048, %v1079
        %v1092 = vadd.f32 %v1049, %v1075
        %v1093 = vadd.f32 %v1050, %v1079
        %v1094 = vadd.f32 %v1051, %v1075
        %v1095 = vadd.f32 %v1052, %v1079
        %v1096 = vadd.f32 %v1053, %v1075
        %v1097 = vadd.f32 %v1054, %v1079
        %v1098 = vadd.f32 %v1055, %v1075
        %v1099 = vadd.f32 %v1056, %v1079
        %v1100 = vadd.f32 %v1057, %v1075
        %v1101 = vadd.f32 %v1058, %v1079
        %v1102 = vadd.f32 %v1059, %v1075
        %v1103 = vadd.f32 %v1060, %v1079
        %v1104 = vadd.f32 %v1061, %v1075
        %v1105 = vadd.f32 %v1062, %v1079
        %v1106 = vadd.f32 %v1063, %v1075
        %v1107 = vadd.f32 %v1064, %v1079
        %v1108 = vadd.f32 %v1065, %v1075
        %v1109 = vadd.f32 %v1066, %v1079
        %v1110 = vadd.f32 %v1067, %v1075
        %v1111 = vadd.f32 %v1068, %v1079
        %v1112 = vadd.f32 %v1069, %v1075
        %v1113 = vadd.f32 %v1070, %v1079
        %v1114 = vpack.c.bf16 %v1084, %v1082
        %v1115 = vpack.c.bf16 %v1085, %v1083
        %v1116 = vpack.c.bf16 %v1088, %v1086
        %v1117 = vpack.c.bf16 %v1089, %v1087
        %v1118 = vpack.c.bf16 %v1092, %v1090
        %v1119 = vpack.c.bf16 %v1093, %v1091
        %v1120 = vpack.c.bf16 %v1096, %v1094
        %v1121 = vpack.c.bf16 %v1097, %v1095
        %v1122 = vpack.c.bf16 %v1100, %v1098
        %v1123 = vpack.c.bf16 %v1101, %v1099
        %v1124 = vpack.c.bf16 %v1104, %v1102
        %v1125 = vpack.c.bf16 %v1105, %v1103
        %v1126 = vpack.c.bf16 %v1108, %v1106
        %v1127 = vpack.c.bf16 %v1109, %v1107
        %v1128 = vpack.c.bf16 %v1112, %v1110
        %v1129 = vpack.c.bf16 %v1113, %v1111
        %v1130 = vld [vmem:[#allocation10] sm:$0xff]
        %v1131 = vld [vmem:[#allocation10 + $0x8] sm:$0xff]
        %v1132 = vld [vmem:[#allocation10 + $0x10] sm:$0xff]
        %v1133 = vld [vmem:[#allocation10 + $0x18] sm:$0xff]
        %v1134 = vld [vmem:[#allocation10 + $0x20] sm:$0xff]
        %v1135 = vld [vmem:[#allocation10 + $0x28] sm:$0xff]
        %v1136 = vld [vmem:[#allocation10 + $0x30] sm:$0xff]
        %v1137 = vld [vmem:[#allocation10 + $0x38] sm:$0xff]
        %v1138 = vld [vmem:[#allocation10 + $0x40] sm:$0xff]
        %v1139 = vld [vmem:[#allocation10 + $0x48] sm:$0xff]
        %v1140 = vld [vmem:[#allocation10 + $0x50] sm:$0xff]
        %v1141 = vld [vmem:[#allocation10 + $0x58] sm:$0xff]
        %v1142 = vld [vmem:[#allocation10 + $0x60] sm:$0xff]
        %v1143 = vld [vmem:[#allocation10 + $0x68] sm:$0xff]
        %v1144 = vld [vmem:[#allocation10 + $0x70] sm:$0xff]
        %v1145 = vld [vmem:[#allocation10 + $0x78] sm:$0xff]
        %v1146 = vld [vmem:[#allocation10 + $0x80] sm:$0xff]
        %v1147 = vld [vmem:[#allocation10 + $0x88] sm:$0xff]
        %v1148 = vld [vmem:[#allocation10 + $0x90] sm:$0xff]
        %v1149 = vld [vmem:[#allocation10 + $0x98] sm:$0xff]
        %v1150 = vld [vmem:[#allocation10 + $0xa0] sm:$0xff]
        %v1151 = vld [vmem:[#allocation10 + $0xa8] sm:$0xff]
        %v1152 = vld [vmem:[#allocation10 + $0xb0] sm:$0xff]
        %v1153 = vld [vmem:[#allocation10 + $0xb8] sm:$0xff]
        %v1154 = vld [vmem:[#allocation10 + $0xc0] sm:$0xff]
        %v1155 = vld [vmem:[#allocation10 + $0xc8] sm:$0xff]
        %v1156 = vld [vmem:[#allocation10 + $0xd0] sm:$0xff]
        %v1157 = vld [vmem:[#allocation10 + $0xd8] sm:$0xff]
        %v1158 = vld [vmem:[#allocation10 + $0xe0] sm:$0xff]
        %v1159 = vld [vmem:[#allocation10 + $0xe8] sm:$0xff]
        %v1160 = vld [vmem:[#allocation10 + $0xf0] sm:$0xff]
        %v1161 = vld [vmem:[#allocation10 + $0xf8] sm:$0xff]
        %v1162 = vld [vmem:[#allocation10 + $0x100] sm:$0xff]
        %v1163 = vld [vmem:[#allocation10 + $0x108] sm:$0xff]
        %v1164 = vld [vmem:[#allocation10 + $0x110] sm:$0xff]
        %v1165 = vld [vmem:[#allocation10 + $0x118] sm:$0xff]
        %v1166 = vld [vmem:[#allocation10 + $0x120] sm:$0xff]
        %v1167 = vld [vmem:[#allocation10 + $0x128] sm:$0xff]
        %v1168 = vld [vmem:[#allocation10 + $0x130] sm:$0xff]
        %v1169 = vld [vmem:[#allocation10 + $0x138] sm:$0xff]
        %v1170 = vld [vmem:[#allocation10 + $0x140] sm:$0xff]
        %v1171 = vld [vmem:[#allocation10 + $0x148] sm:$0xff]
        %v1172 = vld [vmem:[#allocation10 + $0x150] sm:$0xff]
        %v1173 = vld [vmem:[#allocation10 + $0x158] sm:$0xff]
        %v1174 = vld [vmem:[#allocation10 + $0x160] sm:$0xff]
        %v1175 = vld [vmem:[#allocation10 + $0x168] sm:$0xff]
        %v1176 = vld [vmem:[#allocation10 + $0x170] sm:$0xff]
        %v1177 = vld [vmem:[#allocation10 + $0x178] sm:$0xff]
        %v1178 = vld [vmem:[#allocation10 + $0x180] sm:$0xff]
        %v1179 = vld [vmem:[#allocation10 + $0x188] sm:$0xff]
        %v1180 = vld [vmem:[#allocation10 + $0x190] sm:$0xff]
        %v1181 = vld [vmem:[#allocation10 + $0x198] sm:$0xff]
        %v1182 = vld [vmem:[#allocation10 + $0x1a0] sm:$0xff]
        %v1183 = vld [vmem:[#allocation10 + $0x1a8] sm:$0xff]
        %v1184 = vld [vmem:[#allocation10 + $0x1b0] sm:$0xff]
        %v1185 = vld [vmem:[#allocation10 + $0x1b8] sm:$0xff]
        %v1186 = vld [vmem:[#allocation10 + $0x1c0] sm:$0xff]
        %v1187 = vld [vmem:[#allocation10 + $0x1c8] sm:$0xff]
        %v1188 = vld [vmem:[#allocation10 + $0x1d0] sm:$0xff]
        %v1189 = vld [vmem:[#allocation10 + $0x1d8] sm:$0xff]
        %v1190 = vld [vmem:[#allocation10 + $0x1e0] sm:$0xff]
        %v1191 = vld [vmem:[#allocation10 + $0x1e8] sm:$0xff]
        %v1192 = vld [vmem:[#allocation10 + $0x1f0] sm:$0xff]
        %v1193 = vld [vmem:[#allocation10 + $0x1f8] sm:$0xff]
        %v1194 = vld [vmem:[%s6] sm:$0xf]
        %v1196 = vlaneseq
        %v1197 = vshrl.u32 %v1196, 7
        %v1198 = vsub.s32 0, %v1197
        %v1199 = vrot.slane %v1194, %v1198
        %v1200 = vlaneseq
        %v1201 = vshrl.u32 %v1200, 7
        %v1202 = vsub.s32 1, %v1201
        %v1203 = vrot.slane %v1194, %v1202
        %v1204 = vlaneseq
        %v1205 = vshrl.u32 %v1204, 7
        %v1206 = vsub.s32 2, %v1205
        %v1207 = vrot.slane %v1194, %v1206
        %v1208 = vlaneseq
        %v1209 = vshrl.u32 %v1208, 7
        %v1210 = vsub.s32 3, %v1209
        %v1211 = vrot.slane %v1194, %v1210
        %v1280 = vunpack.c.l.b16 %v1130
        %v1281 = vunpack.c.h.b16 %v1130
        %v1282 = vunpack.c.l.b16 %v1131
        %v1283 = vunpack.c.h.b16 %v1131
        %v1284 = vunpack.c.l.b16 %v1132
        %v1285 = vunpack.c.h.b16 %v1132
        %v1286 = vunpack.c.l.b16 %v1133
        %v1287 = vunpack.c.h.b16 %v1133
        %v1288 = vunpack.c.l.b16 %v1134
        %v1289 = vunpack.c.h.b16 %v1134
        %v1290 = vunpack.c.l.b16 %v1135
        %v1291 = vunpack.c.h.b16 %v1135
        %v1292 = vunpack.c.l.b16 %v1136
        %v1293 = vunpack.c.h.b16 %v1136
        %v1294 = vunpack.c.l.b16 %v1137
        %v1295 = vunpack.c.h.b16 %v1137
        %v1296 = vunpack.c.l.b16 %v1138
        %v1297 = vunpack.c.h.b16 %v1138
        %v1298 = vunpack.c.l.b16 %v1139
        %v1299 = vunpack.c.h.b16 %v1139
        %v1300 = vunpack.c.l.b16 %v1140
        %v1301 = vunpack.c.h.b16 %v1140
        %v1302 = vunpack.c.l.b16 %v1141
        %v1303 = vunpack.c.h.b16 %v1141
        %v1304 = vunpack.c.l.b16 %v1142
        %v1305 = vunpack.c.h.b16 %v1142
        %v1306 = vunpack.c.l.b16 %v1143
        %v1307 = vunpack.c.h.b16 %v1143
        %v1308 = vunpack.c.l.b16 %v1144
        %v1309 = vunpack.c.h.b16 %v1144
        %v1310 = vunpack.c.l.b16 %v1145
        %v1311 = vunpack.c.h.b16 %v1145
        %v1312 = vunpack.c.l.b16 %v1146
        %v1313 = vunpack.c.h.b16 %v1146
        %v1314 = vunpack.c.l.b16 %v1147
        %v1315 = vunpack.c.h.b16 %v1147
        %v1316 = vunpack.c.l.b16 %v1148
        %v1317 = vunpack.c.h.b16 %v1148
        %v1318 = vunpack.c.l.b16 %v1149
        %v1319 = vunpack.c.h.b16 %v1149
        %v1320 = vunpack.c.l.b16 %v1150
        %v1321 = vunpack.c.h.b16 %v1150
        %v1322 = vunpack.c.l.b16 %v1151
        %v1323 = vunpack.c.h.b16 %v1151
        %v1324 = vunpack.c.l.b16 %v1152
        %v1325 = vunpack.c.h.b16 %v1152
        %v1326 = vunpack.c.l.b16 %v1153
        %v1327 = vunpack.c.h.b16 %v1153
        %v1328 = vunpack.c.l.b16 %v1154
        %v1329 = vunpack.c.h.b16 %v1154
        %v1330 = vunpack.c.l.b16 %v1155
        %v1331 = vunpack.c.h.b16 %v1155
        %v1332 = vunpack.c.l.b16 %v1156
        %v1333 = vunpack.c.h.b16 %v1156
        %v1334 = vunpack.c.l.b16 %v1157
        %v1335 = vunpack.c.h.b16 %v1157
        %v1336 = vunpack.c.l.b16 %v1158
        %v1337 = vunpack.c.h.b16 %v1158
        %v1338 = vunpack.c.l.b16 %v1159
        %v1339 = vunpack.c.h.b16 %v1159
        %v1340 = vunpack.c.l.b16 %v1160
        %v1341 = vunpack.c.h.b16 %v1160
        %v1342 = vunpack.c.l.b16 %v1161
        %v1343 = vunpack.c.h.b16 %v1161
        %v1344 = vunpack.c.l.b16 %v1162
        %v1345 = vunpack.c.h.b16 %v1162
        %v1346 = vunpack.c.l.b16 %v1163
        %v1347 = vunpack.c.h.b16 %v1163
        %v1348 = vunpack.c.l.b16 %v1164
        %v1349 = vunpack.c.h.b16 %v1164
        %v1350 = vunpack.c.l.b16 %v1165
        %v1351 = vunpack.c.h.b16 %v1165
        %v1352 = vunpack.c.l.b16 %v1166
        %v1353 = vunpack.c.h.b16 %v1166
        %v1354 = vunpack.c.l.b16 %v1167
        %v1355 = vunpack.c.h.b16 %v1167
        %v1356 = vunpack.c.l.b16 %v1168
        %v1357 = vunpack.c.h.b16 %v1168
        %v1358 = vunpack.c.l.b16 %v1169
        %v1359 = vunpack.c.h.b16 %v1169
        %v1360 = vunpack.c.l.b16 %v1170
        %v1361 = vunpack.c.h.b16 %v1170
        %v1362 = vunpack.c.l.b16 %v1171
        %v1363 = vunpack.c.h.b16 %v1171
        %v1364 = vunpack.c.l.b16 %v1172
        %v1365 = vunpack.c.h.b16 %v1172
        %v1366 = vunpack.c.l.b16 %v1173
        %v1367 = vunpack.c.h.b16 %v1173
        %v1368 = vunpack.c.l.b16 %v1174
        %v1369 = vunpack.c.h.b16 %v1174
        %v1370 = vunpack.c.l.b16 %v1175
        %v1371 = vunpack.c.h.b16 %v1175
        %v1372 = vunpack.c.l.b16 %v1176
        %v1373 = vunpack.c.h.b16 %v1176
        %v1374 = vunpack.c.l.b16 %v1177
        %v1375 = vunpack.c.h.b16 %v1177
        %v1376 = vunpack.c.l.b16 %v1178
        %v1377 = vunpack.c.h.b16 %v1178
        %v1378 = vunpack.c.l.b16 %v1179
        %v1379 = vunpack.c.h.b16 %v1179
        %v1380 = vunpack.c.l.b16 %v1180
        %v1381 = vunpack.c.h.b16 %v1180
        %v1382 = vunpack.c.l.b16 %v1181
        %v1383 = vunpack.c.h.b16 %v1181
        %v1384 = vunpack.c.l.b16 %v1182
        %v1385 = vunpack.c.h.b16 %v1182
        %v1386 = vunpack.c.l.b16 %v1183
        %v1387 = vunpack.c.h.b16 %v1183
        %v1388 = vunpack.c.l.b16 %v1184
        %v1389 = vunpack.c.h.b16 %v1184
        %v1390 = vunpack.c.l.b16 %v1185
        %v1391 = vunpack.c.h.b16 %v1185
        %v1392 = vunpack.c.l.b16 %v1186
        %v1393 = vunpack.c.h.b16 %v1186
        %v1394 = vunpack.c.l.b16 %v1187
        %v1395 = vunpack.c.h.b16 %v1187
        %v1396 = vunpack.c.l.b16 %v1188
        %v1397 = vunpack.c.h.b16 %v1188
        %v1398 = vunpack.c.l.b16 %v1189
        %v1399 = vunpack.c.h.b16 %v1189
        %v1400 = vunpack.c.l.b16 %v1190
        %v1401 = vunpack.c.h.b16 %v1190
        %v1402 = vunpack.c.l.b16 %v1191
        %v1403 = vunpack.c.h.b16 %v1191
        %v1404 = vunpack.c.l.b16 %v1192
        %v1405 = vunpack.c.h.b16 %v1192
        %v1406 = vunpack.c.l.b16 %v1193
        %v1407 = vunpack.c.h.b16 %v1193
        %v1408 = vpack.c.b16 %v1284, %v1280
        %v1409 = vpack.c.b16 %v1285, %v1281
        %v1410 = vpack.c.b16 %v1286, %v1282
        %v1411 = vpack.c.b16 %v1287, %v1283
        %v1412 = vpack.c.b16 %v1292, %v1288
        %v1413 = vpack.c.b16 %v1293, %v1289
        %v1414 = vpack.c.b16 %v1294, %v1290
        %v1415 = vpack.c.b16 %v1295, %v1291
        %v1416 = vpack.c.b16 %v1300, %v1296
        %v1417 = vpack.c.b16 %v1301, %v1297
        %v1418 = vpack.c.b16 %v1302, %v1298
        %v1419 = vpack.c.b16 %v1303, %v1299
        %v1420 = vpack.c.b16 %v1308, %v1304
        %v1421 = vpack.c.b16 %v1309, %v1305
        %v1422 = vpack.c.b16 %v1310, %v1306
        %v1423 = vpack.c.b16 %v1311, %v1307
        %v1424 = vpack.c.b16 %v1316, %v1312
        %v1425 = vpack.c.b16 %v1317, %v1313
        %v1426 = vpack.c.b16 %v1318, %v1314
        %v1427 = vpack.c.b16 %v1319, %v1315
        %v1428 = vpack.c.b16 %v1324, %v1320
        %v1429 = vpack.c.b16 %v1325, %v1321
        %v1430 = vpack.c.b16 %v1326, %v1322
        %v1431 = vpack.c.b16 %v1327, %v1323
        %v1432 = vpack.c.b16 %v1332, %v1328
        %v1433 = vpack.c.b16 %v1333, %v1329
        %v1434 = vpack.c.b16 %v1334, %v1330
        %v1435 = vpack.c.b16 %v1335, %v1331
        %v1436 = vpack.c.b16 %v1340, %v1336
        %v1437 = vpack.c.b16 %v1341, %v1337
        %v1438 = vpack.c.b16 %v1342, %v1338
        %v1439 = vpack.c.b16 %v1343, %v1339
        %v1440 = vpack.c.b16 %v1348, %v1344
        %v1441 = vpack.c.b16 %v1349, %v1345
        %v1442 = vpack.c.b16 %v1350, %v1346
        %v1443 = vpack.c.b16 %v1351, %v1347
        %v1444 = vpack.c.b16 %v1356, %v1352
        %v1445 = vpack.c.b16 %v1357, %v1353
        %v1446 = vpack.c.b16 %v1358, %v1354
        %v1447 = vpack.c.b16 %v1359, %v1355
        %v1448 = vpack.c.b16 %v1364, %v1360
        %v1449 = vpack.c.b16 %v1365, %v1361
        %v1450 = vpack.c.b16 %v1366, %v1362
        %v1451 = vpack.c.b16 %v1367, %v1363
        %v1452 = vpack.c.b16 %v1372, %v1368
        %v1453 = vpack.c.b16 %v1373, %v1369
        %v1454 = vpack.c.b16 %v1374, %v1370
        %v1455 = vpack.c.b16 %v1375, %v1371
        %v1456 = vpack.c.b16 %v1380, %v1376
        %v1457 = vpack.c.b16 %v1381, %v1377
        %v1458 = vpack.c.b16 %v1382, %v1378
        %v1459 = vpack.c.b16 %v1383, %v1379
        %v1460 = vpack.c.b16 %v1388, %v1384
        %v1461 = vpack.c.b16 %v1389, %v1385
        %v1462 = vpack.c.b16 %v1390, %v1386
        %v1463 = vpack.c.b16 %v1391, %v1387
        %v1464 = vpack.c.b16 %v1396, %v1392
        %v1465 = vpack.c.b16 %v1397, %v1393
        %v1466 = vpack.c.b16 %v1398, %v1394
        %v1467 = vpack.c.b16 %v1399, %v1395
        %v1468 = vpack.c.b16 %v1404, %v1400
        %v1469 = vpack.c.b16 %v1405, %v1401
        %v1470 = vpack.c.b16 %v1406, %v1402
        %v1471 = vpack.c.b16 %v1407, %v1403
        %1536 = vmatprep.subr.bf16.mxu0 %v1437
        %1537 = vmatpush1.bf16.msra.mxu0 %v1436
        %1538 = vmatprep.subr.bf16.mxu0 %v1433
        %1539 = vmatpush1.bf16.msra.mxu0 %v1432
        %1540 = vmatprep.subr.bf16.mxu0 %v1429
        %1541 = vmatpush1.bf16.msra.mxu0 %v1428
        %1542 = vmatprep.subr.bf16.mxu0 %v1425
        %1543 = vmatpush1.bf16.msra.mxu0 %v1424
        %1544 = vmatprep.subr.bf16.mxu0 %v1421
        %1545 = vmatpush1.bf16.msra.mxu0 %v1420
        %1546 = vmatprep.subr.bf16.mxu0 %v1417
        %1547 = vmatpush1.bf16.msra.mxu0 %v1416
        %1548 = vmatprep.subr.bf16.mxu0 %v1413
        %1549 = vmatpush1.bf16.msra.mxu0 %v1412
        %1550 = vmatprep.subr.bf16.mxu0 %v1409
        %1551 = vmatpush1.bf16.msra.mxu0 %v1408
        %1552 = vmatprep.subr.bf16.mxu0 %v1469
        %1553 = vmatpush2.bf16.msra.mxu0 %v1468
        %1554 = vmatprep.subr.bf16.mxu0 %v1465
        %1555 = vmatpush2.bf16.msra.mxu0 %v1464
        %1556 = vmatprep.subr.bf16.mxu0 %v1461
        %1557 = vmatpush2.bf16.msra.mxu0 %v1460
        %1558 = vmatprep.subr.bf16.mxu0 %v1457
        %1559 = vmatpush2.bf16.msra.mxu0 %v1456
        %1560 = vmatprep.subr.bf16.mxu0 %v1453
        %1561 = vmatpush2.bf16.msra.mxu0 %v1452
        %1562 = vmatprep.subr.bf16.mxu0 %v1449
        %1563 = vmatpush2.bf16.msra.mxu0 %v1448
        %1564 = vmatprep.subr.bf16.mxu0 %v1445
        %1565 = vmatpush2.bf16.msra.mxu0 %v1444
        %1566 = vmatprep.subr.bf16.mxu0 %v1441
        %1567 = vmatpush2.bf16.msra.mxu0 %v1440
        %1568 = vmatprep.mubr.bf16.mxu0 %v1115
        %1569 = vmatmul.mubr.bf16.gmra.mxu0 %v1114
        %v1570 = vpop.f32.mrf.mxu0
        %v1571 = vadd.f32 %v1199, %v1570
        %v1572 = vpop.f32.mrf.mxu0
        %v1573 = vadd.f32 %v1203, %v1572
        %v1574 = vpop.f32.mrf.mxu0
        %v1575 = vadd.f32 %v1199, %v1574
        %v1576 = vpop.f32.mrf.mxu0
        %v1577 = vadd.f32 %v1203, %v1576
        %1578 = vmatprep.mubr.bf16.mxu0 %v1117
        %1579 = vmatmul.mubr.bf16.gmra.mxu0 %v1116
        %v1580 = vpop.f32.mrf.mxu0
        %v1581 = vadd.f32 %v1199, %v1580
        %v1582 = vpop.f32.mrf.mxu0
        %v1583 = vadd.f32 %v1203, %v1582
        %v1584 = vpop.f32.mrf.mxu0
        %v1585 = vadd.f32 %v1199, %v1584
        %v1586 = vpop.f32.mrf.mxu0
        %v1587 = vadd.f32 %v1203, %v1586
        %1588 = vmatprep.mubr.bf16.mxu0 %v1119
        %1589 = vmatmul.mubr.bf16.gmra.mxu0 %v1118
        %v1590 = vpop.f32.mrf.mxu0
        %v1591 = vadd.f32 %v1199, %v1590
        %v1592 = vpop.f32.mrf.mxu0
        %v1593 = vadd.f32 %v1203, %v1592
        %v1594 = vpop.f32.mrf.mxu0
        %v1595 = vadd.f32 %v1199, %v1594
        %v1596 = vpop.f32.mrf.mxu0
        %v1597 = vadd.f32 %v1203, %v1596
        %1598 = vmatprep.mubr.bf16.mxu0 %v1121
        %1599 = vmatmul.mubr.bf16.gmra.mxu0 %v1120
        %v1600 = vpop.f32.mrf.mxu0
        %v1601 = vadd.f32 %v1199, %v1600
        %v1602 = vpop.f32.mrf.mxu0
        %v1603 = vadd.f32 %v1203, %v1602
        %v1604 = vpop.f32.mrf.mxu0
        %v1605 = vadd.f32 %v1199, %v1604
        %v1606 = vpop.f32.mrf.mxu0
        %v1607 = vadd.f32 %v1203, %v1606
        %1608 = vmatprep.mubr.bf16.mxu0 %v1123
        %1609 = vmatmul.mubr.bf16.gmra.mxu0 %v1122
        %v1610 = vpop.f32.mrf.mxu0
        %v1611 = vadd.f32 %v1199, %v1610
        %v1612 = vpop.f32.mrf.mxu0
        %v1613 = vadd.f32 %v1203, %v1612
        %v1614 = vpop.f32.mrf.mxu0
        %v1615 = vadd.f32 %v1199, %v1614
        %v1616 = vpop.f32.mrf.mxu0
        %v1617 = vadd.f32 %v1203, %v1616
        %1618 = vmatprep.mubr.bf16.mxu0 %v1125
        %1619 = vmatmul.mubr.bf16.gmra.mxu0 %v1124
        %v1620 = vpop.f32.mrf.mxu0
        %v1621 = vadd.f32 %v1199, %v1620
        %v1622 = vpop.f32.mrf.mxu0
        %v1623 = vadd.f32 %v1203, %v1622
        %v1624 = vpop.f32.mrf.mxu0
        %v1625 = vadd.f32 %v1199, %v1624
        %v1626 = vpop.f32.mrf.mxu0
        %v1627 = vadd.f32 %v1203, %v1626
        %1628 = vmatprep.mubr.bf16.mxu0 %v1127
        %1629 = vmatmul.mubr.bf16.gmra.mxu0 %v1126
        %v1630 = vpop.f32.mrf.mxu0
        %v1631 = vadd.f32 %v1199, %v1630
        %v1632 = vpop.f32.mrf.mxu0
        %v1633 = vadd.f32 %v1203, %v1632
        %v1634 = vpop.f32.mrf.mxu0
        %v1635 = vadd.f32 %v1199, %v1634
        %v1636 = vpop.f32.mrf.mxu0
        %v1637 = vadd.f32 %v1203, %v1636
        %1638 = vmatprep.mubr.bf16.mxu0 %v1129
        %1639 = vmatmul.mubr.bf16.gmra.mxu0 %v1128
        %v1640 = vpop.f32.mrf.mxu0
        %v1641 = vadd.f32 %v1199, %v1640
        %v1642 = vpop.f32.mrf.mxu0
        %v1643 = vadd.f32 %v1203, %v1642
        %v1644 = vpop.f32.mrf.mxu0
        %v1645 = vadd.f32 %v1199, %v1644
        %v1646 = vpop.f32.mrf.mxu0
        %v1647 = vadd.f32 %v1203, %v1646
        %1648 = vdwg.mxu0
        %1649 = vmatprep.subr.bf16.mxu0 %v1439
        %1650 = vmatpush1.bf16.msra.mxu0 %v1438
        %1651 = vmatprep.subr.bf16.mxu0 %v1435
        %1652 = vmatpush1.bf16.msra.mxu0 %v1434
        %1653 = vmatprep.subr.bf16.mxu0 %v1431
        %1654 = vmatpush1.bf16.msra.mxu0 %v1430
        %1655 = vmatprep.subr.bf16.mxu0 %v1427
        %1656 = vmatpush1.bf16.msra.mxu0 %v1426
        %1657 = vmatprep.subr.bf16.mxu0 %v1423
        %1658 = vmatpush1.bf16.msra.mxu0 %v1422
        %1659 = vmatprep.subr.bf16.mxu0 %v1419
        %1660 = vmatpush1.bf16.msra.mxu0 %v1418
        %1661 = vmatprep.subr.bf16.mxu0 %v1415
        %1662 = vmatpush1.bf16.msra.mxu0 %v1414
        %1663 = vmatprep.subr.bf16.mxu0 %v1411
        %1664 = vmatpush1.bf16.msra.mxu0 %v1410
        %1665 = vmatprep.subr.bf16.mxu0 %v1471
        %1666 = vmatpush2.bf16.msra.mxu0 %v1470
        %1667 = vmatprep.subr.bf16.mxu0 %v1467
        %1668 = vmatpush2.bf16.msra.mxu0 %v1466
        %1669 = vmatprep.subr.bf16.mxu0 %v1463
        %1670 = vmatpush2.bf16.msra.mxu0 %v1462
        %1671 = vmatprep.subr.bf16.mxu0 %v1459
        %1672 = vmatpush2.bf16.msra.mxu0 %v1458
        %1673 = vmatprep.subr.bf16.mxu0 %v1455
        %1674 = vmatpush2.bf16.msra.mxu0 %v1454
        %1675 = vmatprep.subr.bf16.mxu0 %v1451
        %1676 = vmatpush2.bf16.msra.mxu0 %v1450
        %1677 = vmatprep.subr.bf16.mxu0 %v1447
        %1678 = vmatpush2.bf16.msra.mxu0 %v1446
        %1679 = vmatprep.subr.bf16.mxu0 %v1443
        %1680 = vmatpush2.bf16.msra.mxu0 %v1442
        %1681 = vmatprep.mubr.bf16.mxu0 %v1115
        %1682 = vmatmul.mubr.bf16.gmra.mxu0 %v1114
        %v1683 = vpop.f32.mrf.mxu0
        %v1684 = vadd.f32 %v1207, %v1683
        %v1685 = vpop.f32.mrf.mxu0
        %v1686 = vadd.f32 %v1211, %v1685
        %v1687 = vpop.f32.mrf.mxu0
        %v1688 = vadd.f32 %v1207, %v1687
        %v1689 = vpop.f32.mrf.mxu0
        %v1690 = vadd.f32 %v1211, %v1689
        %1691 = vmatprep.mubr.bf16.mxu0 %v1117
        %1692 = vmatmul.mubr.bf16.gmra.mxu0 %v1116
        %v1693 = vpop.f32.mrf.mxu0
        %v1694 = vadd.f32 %v1207, %v1693
        %v1695 = vpop.f32.mrf.mxu0
        %v1696 = vadd.f32 %v1211, %v1695
        %v1697 = vpop.f32.mrf.mxu0
        %v1698 = vadd.f32 %v1207, %v1697
        %v1699 = vpop.f32.mrf.mxu0
        %v1700 = vadd.f32 %v1211, %v1699
        %1701 = vmatprep.mubr.bf16.mxu0 %v1119
        %1702 = vmatmul.mubr.bf16.gmra.mxu0 %v1118
        %v1703 = vpop.f32.mrf.mxu0
        %v1704 = vadd.f32 %v1207, %v1703
        %v1705 = vpop.f32.mrf.mxu0
        %v1706 = vadd.f32 %v1211, %v1705
        %v1707 = vpop.f32.mrf.mxu0
        %v1708 = vadd.f32 %v1207, %v1707
        %v1709 = vpop.f32.mrf.mxu0
        %v1710 = vadd.f32 %v1211, %v1709
        %1711 = vmatprep.mubr.bf16.mxu0 %v1121
        %1712 = vmatmul.mubr.bf16.gmra.mxu0 %v1120
        %v1713 = vpop.f32.mrf.mxu0
        %v1714 = vadd.f32 %v1207, %v1713
        %v1715 = vpop.f32.mrf.mxu0
        %v1716 = vadd.f32 %v1211, %v1715
        %v1717 = vpop.f32.mrf.mxu0
        %v1718 = vadd.f32 %v1207, %v1717
        %v1719 = vpop.f32.mrf.mxu0
        %v1720 = vadd.f32 %v1211, %v1719
        %1721 = vmatprep.mubr.bf16.mxu0 %v1123
        %1722 = vmatmul.mubr.bf16.gmra.mxu0 %v1122
        %v1723 = vpop.f32.mrf.mxu0
        %v1724 = vadd.f32 %v1207, %v1723
        %v1725 = vpop.f32.mrf.mxu0
        %v1726 = vadd.f32 %v1211, %v1725
        %v1727 = vpop.f32.mrf.mxu0
        %v1728 = vadd.f32 %v1207, %v1727
        %v1729 = vpop.f32.mrf.mxu0
        %v1730 = vadd.f32 %v1211, %v1729
        %1731 = vmatprep.mubr.bf16.mxu0 %v1125
        %1732 = vmatmul.mubr.bf16.gmra.mxu0 %v1124
        %v1733 = vpop.f32.mrf.mxu0
        %v1734 = vadd.f32 %v1207, %v1733
        %v1735 = vpop.f32.mrf.mxu0
        %v1736 = vadd.f32 %v1211, %v1735
        %v1737 = vpop.f32.mrf.mxu0
        %v1738 = vadd.f32 %v1207, %v1737
        %v1739 = vpop.f32.mrf.mxu0
        %v1740 = vadd.f32 %v1211, %v1739
        %1741 = vmatprep.mubr.bf16.mxu0 %v1127
        %1742 = vmatmul.mubr.bf16.gmra.mxu0 %v1126
        %v1743 = vpop.f32.mrf.mxu0
        %v1744 = vadd.f32 %v1207, %v1743
        %v1745 = vpop.f32.mrf.mxu0
        %v1746 = vadd.f32 %v1211, %v1745
        %v1747 = vpop.f32.mrf.mxu0
        %v1748 = vadd.f32 %v1207, %v1747
        %v1749 = vpop.f32.mrf.mxu0
        %v1750 = vadd.f32 %v1211, %v1749
        %1751 = vmatprep.mubr.bf16.mxu0 %v1129
        %1752 = vmatmul.mubr.bf16.gmra.mxu0 %v1128
        %v1753 = vpop.f32.mrf.mxu0
        %v1754 = vadd.f32 %v1207, %v1753
        %v1755 = vpop.f32.mrf.mxu0
        %v1756 = vadd.f32 %v1211, %v1755
        %v1757 = vpop.f32.mrf.mxu0
        %v1758 = vadd.f32 %v1207, %v1757
        %v1759 = vpop.f32.mrf.mxu0
        %v1760 = vadd.f32 %v1211, %v1759
        %1761 = vdwg.mxu0
        %v1762 = vmax.f32 %v1571, 0.0
        %v1763 = vmax.f32 %v1573, 0.0
        %v1764 = vmax.f32 %v1684, 0.0
        %v1765 = vmax.f32 %v1686, 0.0
        %v1766 = vmax.f32 %v1575, 0.0
        %v1767 = vmax.f32 %v1577, 0.0
        %v1768 = vmax.f32 %v1688, 0.0
        %v1769 = vmax.f32 %v1690, 0.0
        %v1770 = vmax.f32 %v1581, 0.0
        %v1771 = vmax.f32 %v1583, 0.0
        %v1772 = vmax.f32 %v1694, 0.0
        %v1773 = vmax.f32 %v1696, 0.0
        %v1774 = vmax.f32 %v1585, 0.0
        %v1775 = vmax.f32 %v1587, 0.0
        %v1776 = vmax.f32 %v1698, 0.0
        %v1777 = vmax.f32 %v1700, 0.0
        %v1778 = vmax.f32 %v1591, 0.0
        %v1779 = vmax.f32 %v1593, 0.0
        %v1780 = vmax.f32 %v1704, 0.0
        %v1781 = vmax.f32 %v1706, 0.0
        %v1782 = vmax.f32 %v1595, 0.0
        %v1783 = vmax.f32 %v1597, 0.0
        %v1784 = vmax.f32 %v1708, 0.0
        %v1785 = vmax.f32 %v1710, 0.0
        %v1786 = vmax.f32 %v1601, 0.0
        %v1787 = vmax.f32 %v1603, 0.0
        %v1788 = vmax.f32 %v1714, 0.0
        %v1789 = vmax.f32 %v1716, 0.0
        %v1790 = vmax.f32 %v1605, 0.0
        %v1791 = vmax.f32 %v1607, 0.0
        %v1792 = vmax.f32 %v1718, 0.0
        %v1793 = vmax.f32 %v1720, 0.0
        %v1794 = vmax.f32 %v1611, 0.0
        %v1795 = vmax.f32 %v1613, 0.0
        %v1796 = vmax.f32 %v1724, 0.0
        %v1797 = vmax.f32 %v1726, 0.0
        %v1798 = vmax.f32 %v1615, 0.0
        %v1799 = vmax.f32 %v1617, 0.0
        %v1800 = vmax.f32 %v1728, 0.0
        %v1801 = vmax.f32 %v1730, 0.0
        %v1802 = vmax.f32 %v1621, 0.0
        %v1803 = vmax.f32 %v1623, 0.0
        %v1804 = vmax.f32 %v1734, 0.0
        %v1805 = vmax.f32 %v1736, 0.0
        %v1806 = vmax.f32 %v1625, 0.0
        %v1807 = vmax.f32 %v1627, 0.0
        %v1808 = vmax.f32 %v1738, 0.0
        %v1809 = vmax.f32 %v1740, 0.0
        %v1810 = vmax.f32 %v1631, 0.0
        %v1811 = vmax.f32 %v1633, 0.0
        %v1812 = vmax.f32 %v1744, 0.0
        %v1813 = vmax.f32 %v1746, 0.0
        %v1814 = vmax.f32 %v1635, 0.0
        %v1815 = vmax.f32 %v1637, 0.0
        %v1816 = vmax.f32 %v1748, 0.0
        %v1817 = vmax.f32 %v1750, 0.0
        %v1818 = vmax.f32 %v1641, 0.0
        %v1819 = vmax.f32 %v1643, 0.0
        %v1820 = vmax.f32 %v1754, 0.0
        %v1821 = vmax.f32 %v1756, 0.0
        %v1822 = vmax.f32 %v1645, 0.0
        %v1823 = vmax.f32 %v1647, 0.0
        %v1824 = vmax.f32 %v1758, 0.0
        %v1825 = vmax.f32 %v1760, 0.0
        %v1826 = vpack.c.bf16 %v1766, %v1762
        %v1827 = vpack.c.bf16 %v1767, %v1763
        %v1828 = vpack.c.bf16 %v1768, %v1764
        %v1829 = vpack.c.bf16 %v1769, %v1765
        %v1830 = vpack.c.bf16 %v1774, %v1770
        %v1831 = vpack.c.bf16 %v1775, %v1771
        %v1832 = vpack.c.bf16 %v1776, %v1772
        %v1833 = vpack.c.bf16 %v1777, %v1773
        %v1834 = vpack.c.bf16 %v1782, %v1778
        %v1835 = vpack.c.bf16 %v1783, %v1779
        %v1836 = vpack.c.bf16 %v1784, %v1780
        %v1837 = vpack.c.bf16 %v1785, %v1781
        %v1838 = vpack.c.bf16 %v1790, %v1786
        %v1839 = vpack.c.bf16 %v1791, %v1787
        %v1840 = vpack.c.bf16 %v1792, %v1788
        %v1841 = vpack.c.bf16 %v1793, %v1789
        %v1842 = vpack.c.bf16 %v1798, %v1794
        %v1843 = vpack.c.bf16 %v1799, %v1795
        %v1844 = vpack.c.bf16 %v1800, %v1796
        %v1845 = vpack.c.bf16 %v1801, %v1797
        %v1846 = vpack.c.bf16 %v1806, %v1802
        %v1847 = vpack.c.bf16 %v1807, %v1803
        %v1848 = vpack.c.bf16 %v1808, %v1804
        %v1849 = vpack.c.bf16 %v1809, %v1805
        %v1850 = vpack.c.bf16 %v1814, %v1810
        %v1851 = vpack.c.bf16 %v1815, %v1811
        %v1852 = vpack.c.bf16 %v1816, %v1812
        %v1853 = vpack.c.bf16 %v1817, %v1813
        %v1854 = vpack.c.bf16 %v1822, %v1818
        %v1855 = vpack.c.bf16 %v1823, %v1819
        %v1856 = vpack.c.bf16 %v1824, %v1820
        %v1857 = vpack.c.bf16 %v1825, %v1821
        %v1858 = vld [vmem:[#allocation11] sm:$0xff]
        %v1859 = vld [vmem:[#allocation11 + $0x8] sm:$0xff]
        %v1860 = vld [vmem:[#allocation11 + $0x10] sm:$0xff]
        %v1861 = vld [vmem:[#allocation11 + $0x18] sm:$0xff]
        %v1862 = vld [vmem:[#allocation11 + $0x20] sm:$0xff]
        %v1863 = vld [vmem:[#allocation11 + $0x28] sm:$0xff]
        %v1864 = vld [vmem:[#allocation11 + $0x30] sm:$0xff]
        %v1865 = vld [vmem:[#allocation11 + $0x38] sm:$0xff]
        %v1866 = vld [vmem:[#allocation11 + $0x40] sm:$0xff]
        %v1867 = vld [vmem:[#allocation11 + $0x48] sm:$0xff]
        %v1868 = vld [vmem:[#allocation11 + $0x50] sm:$0xff]
        %v1869 = vld [vmem:[#allocation11 + $0x58] sm:$0xff]
        %v1870 = vld [vmem:[#allocation11 + $0x60] sm:$0xff]
        %v1871 = vld [vmem:[#allocation11 + $0x68] sm:$0xff]
        %v1872 = vld [vmem:[#allocation11 + $0x70] sm:$0xff]
        %v1873 = vld [vmem:[#allocation11 + $0x78] sm:$0xff]
        %v1874 = vld [vmem:[#allocation11 + $0x80] sm:$0xff]
        %v1875 = vld [vmem:[#allocation11 + $0x88] sm:$0xff]
        %v1876 = vld [vmem:[#allocation11 + $0x90] sm:$0xff]
        %v1877 = vld [vmem:[#allocation11 + $0x98] sm:$0xff]
        %v1878 = vld [vmem:[#allocation11 + $0xa0] sm:$0xff]
        %v1879 = vld [vmem:[#allocation11 + $0xa8] sm:$0xff]
        %v1880 = vld [vmem:[#allocation11 + $0xb0] sm:$0xff]
        %v1881 = vld [vmem:[#allocation11 + $0xb8] sm:$0xff]
        %v1882 = vld [vmem:[#allocation11 + $0xc0] sm:$0xff]
        %v1883 = vld [vmem:[#allocation11 + $0xc8] sm:$0xff]
        %v1884 = vld [vmem:[#allocation11 + $0xd0] sm:$0xff]
        %v1885 = vld [vmem:[#allocation11 + $0xd8] sm:$0xff]
        %v1886 = vld [vmem:[#allocation11 + $0xe0] sm:$0xff]
        %v1887 = vld [vmem:[#allocation11 + $0xe8] sm:$0xff]
        %v1888 = vld [vmem:[#allocation11 + $0xf0] sm:$0xff]
        %v1889 = vld [vmem:[#allocation11 + $0xf8] sm:$0xff]
        %v1890 = vld [vmem:[#allocation11 + $0x100] sm:$0xff]
        %v1891 = vld [vmem:[#allocation11 + $0x108] sm:$0xff]
        %v1892 = vld [vmem:[#allocation11 + $0x110] sm:$0xff]
        %v1893 = vld [vmem:[#allocation11 + $0x118] sm:$0xff]
        %v1894 = vld [vmem:[#allocation11 + $0x120] sm:$0xff]
        %v1895 = vld [vmem:[#allocation11 + $0x128] sm:$0xff]
        %v1896 = vld [vmem:[#allocation11 + $0x130] sm:$0xff]
        %v1897 = vld [vmem:[#allocation11 + $0x138] sm:$0xff]
        %v1898 = vld [vmem:[#allocation11 + $0x140] sm:$0xff]
        %v1899 = vld [vmem:[#allocation11 + $0x148] sm:$0xff]
        %v1900 = vld [vmem:[#allocation11 + $0x150] sm:$0xff]
        %v1901 = vld [vmem:[#allocation11 + $0x158] sm:$0xff]
        %v1902 = vld [vmem:[#allocation11 + $0x160] sm:$0xff]
        %v1903 = vld [vmem:[#allocation11 + $0x168] sm:$0xff]
        %v1904 = vld [vmem:[#allocation11 + $0x170] sm:$0xff]
        %v1905 = vld [vmem:[#allocation11 + $0x178] sm:$0xff]
        %v1906 = vld [vmem:[#allocation11 + $0x180] sm:$0xff]
        %v1907 = vld [vmem:[#allocation11 + $0x188] sm:$0xff]
        %v1908 = vld [vmem:[#allocation11 + $0x190] sm:$0xff]
        %v1909 = vld [vmem:[#allocation11 + $0x198] sm:$0xff]
        %v1910 = vld [vmem:[#allocation11 + $0x1a0] sm:$0xff]
        %v1911 = vld [vmem:[#allocation11 + $0x1a8] sm:$0xff]
        %v1912 = vld [vmem:[#allocation11 + $0x1b0] sm:$0xff]
        %v1913 = vld [vmem:[#allocation11 + $0x1b8] sm:$0xff]
        %v1914 = vld [vmem:[#allocation11 + $0x1c0] sm:$0xff]
        %v1915 = vld [vmem:[#allocation11 + $0x1c8] sm:$0xff]
        %v1916 = vld [vmem:[#allocation11 + $0x1d0] sm:$0xff]
        %v1917 = vld [vmem:[#allocation11 + $0x1d8] sm:$0xff]
        %v1918 = vld [vmem:[#allocation11 + $0x1e0] sm:$0xff]
        %v1919 = vld [vmem:[#allocation11 + $0x1e8] sm:$0xff]
        %v1920 = vld [vmem:[#allocation11 + $0x1f0] sm:$0xff]
        %v1921 = vld [vmem:[#allocation11 + $0x1f8] sm:$0xff]
        %v1922 = vld [vmem:[%s8] sm:$0x3]
        %v1924 = vlaneseq
        %v1925 = vshrl.u32 %v1924, 7
        %v1926 = vsub.s32 0, %v1925
        %v1927 = vrot.slane %v1922, %v1926
        %v1928 = vlaneseq
        %v1929 = vshrl.u32 %v1928, 7
        %v1930 = vsub.s32 1, %v1929
        %v1931 = vrot.slane %v1922, %v1930
        %v1998 = vunpack.c.l.b16 %v1858
        %v1999 = vunpack.c.h.b16 %v1858
        %v2000 = vunpack.c.l.b16 %v1859
        %v2001 = vunpack.c.h.b16 %v1859
        %v2002 = vunpack.c.l.b16 %v1860
        %v2003 = vunpack.c.h.b16 %v1860
        %v2004 = vunpack.c.l.b16 %v1861
        %v2005 = vunpack.c.h.b16 %v1861
        %v2006 = vunpack.c.l.b16 %v1862
        %v2007 = vunpack.c.h.b16 %v1862
        %v2008 = vunpack.c.l.b16 %v1863
        %v2009 = vunpack.c.h.b16 %v1863
        %v2010 = vunpack.c.l.b16 %v1864
        %v2011 = vunpack.c.h.b16 %v1864
        %v2012 = vunpack.c.l.b16 %v1865
        %v2013 = vunpack.c.h.b16 %v1865
        %v2014 = vunpack.c.l.b16 %v1866
        %v2015 = vunpack.c.h.b16 %v1866
        %v2016 = vunpack.c.l.b16 %v1867
        %v2017 = vunpack.c.h.b16 %v1867
        %v2018 = vunpack.c.l.b16 %v1868
        %v2019 = vunpack.c.h.b16 %v1868
        %v2020 = vunpack.c.l.b16 %v1869
        %v2021 = vunpack.c.h.b16 %v1869
        %v2022 = vunpack.c.l.b16 %v1870
        %v2023 = vunpack.c.h.b16 %v1870
        %v2024 = vunpack.c.l.b16 %v1871
        %v2025 = vunpack.c.h.b16 %v1871
        %v2026 = vunpack.c.l.b16 %v1872
        %v2027 = vunpack.c.h.b16 %v1872
        %v2028 = vunpack.c.l.b16 %v1873
        %v2029 = vunpack.c.h.b16 %v1873
        %v2030 = vunpack.c.l.b16 %v1874
        %v2031 = vunpack.c.h.b16 %v1874
        %v2032 = vunpack.c.l.b16 %v1875
        %v2033 = vunpack.c.h.b16 %v1875
        %v2034 = vunpack.c.l.b16 %v1876
        %v2035 = vunpack.c.h.b16 %v1876
        %v2036 = vunpack.c.l.b16 %v1877
        %v2037 = vunpack.c.h.b16 %v1877
        %v2038 = vunpack.c.l.b16 %v1878
        %v2039 = vunpack.c.h.b16 %v1878
        %v2040 = vunpack.c.l.b16 %v1879
        %v2041 = vunpack.c.h.b16 %v1879
        %v2042 = vunpack.c.l.b16 %v1880
        %v2043 = vunpack.c.h.b16 %v1880
        %v2044 = vunpack.c.l.b16 %v1881
        %v2045 = vunpack.c.h.b16 %v1881
        %v2046 = vunpack.c.l.b16 %v1882
        %v2047 = vunpack.c.h.b16 %v1882
        %v2048 = vunpack.c.l.b16 %v1883
        %v2049 = vunpack.c.h.b16 %v1883
        %v2050 = vunpack.c.l.b16 %v1884
        %v2051 = vunpack.c.h.b16 %v1884
        %v2052 = vunpack.c.l.b16 %v1885
        %v2053 = vunpack.c.h.b16 %v1885
        %v2054 = vunpack.c.l.b16 %v1886
        %v2055 = vunpack.c.h.b16 %v1886
        %v2056 = vunpack.c.l.b16 %v1887
        %v2057 = vunpack.c.h.b16 %v1887
        %v2058 = vunpack.c.l.b16 %v1888
        %v2059 = vunpack.c.h.b16 %v1888
        %v2060 = vunpack.c.l.b16 %v1889
        %v2061 = vunpack.c.h.b16 %v1889
        %v2062 = vunpack.c.l.b16 %v1890
        %v2063 = vunpack.c.h.b16 %v1890
        %v2064 = vunpack.c.l.b16 %v1891
        %v2065 = vunpack.c.h.b16 %v1891
        %v2066 = vunpack.c.l.b16 %v1892
        %v2067 = vunpack.c.h.b16 %v1892
        %v2068 = vunpack.c.l.b16 %v1893
        %v2069 = vunpack.c.h.b16 %v1893
        %v2070 = vunpack.c.l.b16 %v1894
        %v2071 = vunpack.c.h.b16 %v1894
        %v2072 = vunpack.c.l.b16 %v1895
        %v2073 = vunpack.c.h.b16 %v1895
        %v2074 = vunpack.c.l.b16 %v1896
        %v2075 = vunpack.c.h.b16 %v1896
        %v2076 = vunpack.c.l.b16 %v1897
        %v2077 = vunpack.c.h.b16 %v1897
        %v2078 = vunpack.c.l.b16 %v1898
        %v2079 = vunpack.c.h.b16 %v1898
        %v2080 = vunpack.c.l.b16 %v1899
        %v2081 = vunpack.c.h.b16 %v1899
        %v2082 = vunpack.c.l.b16 %v1900
        %v2083 = vunpack.c.h.b16 %v1900
        %v2084 = vunpack.c.l.b16 %v1901
        %v2085 = vunpack.c.h.b16 %v1901
        %v2086 = vunpack.c.l.b16 %v1902
        %v2087 = vunpack.c.h.b16 %v1902
        %v2088 = vunpack.c.l.b16 %v1903
        %v2089 = vunpack.c.h.b16 %v1903
        %v2090 = vunpack.c.l.b16 %v1904
        %v2091 = vunpack.c.h.b16 %v1904
        %v2092 = vunpack.c.l.b16 %v1905
        %v2093 = vunpack.c.h.b16 %v1905
        %v2094 = vunpack.c.l.b16 %v1906
        %v2095 = vunpack.c.h.b16 %v1906
        %v2096 = vunpack.c.l.b16 %v1907
        %v2097 = vunpack.c.h.b16 %v1907
        %v2098 = vunpack.c.l.b16 %v1908
        %v2099 = vunpack.c.h.b16 %v1908
        %v2100 = vunpack.c.l.b16 %v1909
        %v2101 = vunpack.c.h.b16 %v1909
        %v2102 = vunpack.c.l.b16 %v1910
        %v2103 = vunpack.c.h.b16 %v1910
        %v2104 = vunpack.c.l.b16 %v1911
        %v2105 = vunpack.c.h.b16 %v1911
        %v2106 = vunpack.c.l.b16 %v1912
        %v2107 = vunpack.c.h.b16 %v1912
        %v2108 = vunpack.c.l.b16 %v1913
        %v2109 = vunpack.c.h.b16 %v1913
        %v2110 = vunpack.c.l.b16 %v1914
        %v2111 = vunpack.c.h.b16 %v1914
        %v2112 = vunpack.c.l.b16 %v1915
        %v2113 = vunpack.c.h.b16 %v1915
        %v2114 = vunpack.c.l.b16 %v1916
        %v2115 = vunpack.c.h.b16 %v1916
        %v2116 = vunpack.c.l.b16 %v1917
        %v2117 = vunpack.c.h.b16 %v1917
        %v2118 = vunpack.c.l.b16 %v1918
        %v2119 = vunpack.c.h.b16 %v1918
        %v2120 = vunpack.c.l.b16 %v1919
        %v2121 = vunpack.c.h.b16 %v1919
        %v2122 = vunpack.c.l.b16 %v1920
        %v2123 = vunpack.c.h.b16 %v1920
        %v2124 = vunpack.c.l.b16 %v1921
        %v2125 = vunpack.c.h.b16 %v1921
        %v2126 = vpack.c.b16 %v2000, %v1998
        %v2127 = vpack.c.b16 %v2001, %v1999
        %v2128 = vpack.c.b16 %v2004, %v2002
        %v2129 = vpack.c.b16 %v2005, %v2003
        %v2130 = vpack.c.b16 %v2008, %v2006
        %v2131 = vpack.c.b16 %v2009, %v2007
        %v2132 = vpack.c.b16 %v2012, %v2010
        %v2133 = vpack.c.b16 %v2013, %v2011
        %v2134 = vpack.c.b16 %v2016, %v2014
        %v2135 = vpack.c.b16 %v2017, %v2015
        %v2136 = vpack.c.b16 %v2020, %v2018
        %v2137 = vpack.c.b16 %v2021, %v2019
        %v2138 = vpack.c.b16 %v2024, %v2022
        %v2139 = vpack.c.b16 %v2025, %v2023
        %v2140 = vpack.c.b16 %v2028, %v2026
        %v2141 = vpack.c.b16 %v2029, %v2027
        %v2142 = vpack.c.b16 %v2032, %v2030
        %v2143 = vpack.c.b16 %v2033, %v2031
        %v2144 = vpack.c.b16 %v2036, %v2034
        %v2145 = vpack.c.b16 %v2037, %v2035
        %v2146 = vpack.c.b16 %v2040, %v2038
        %v2147 = vpack.c.b16 %v2041, %v2039
        %v2148 = vpack.c.b16 %v2044, %v2042
        %v2149 = vpack.c.b16 %v2045, %v2043
        %v2150 = vpack.c.b16 %v2048, %v2046
        %v2151 = vpack.c.b16 %v2049, %v2047
        %v2152 = vpack.c.b16 %v2052, %v2050
        %v2153 = vpack.c.b16 %v2053, %v2051
        %v2154 = vpack.c.b16 %v2056, %v2054
        %v2155 = vpack.c.b16 %v2057, %v2055
        %v2156 = vpack.c.b16 %v2060, %v2058
        %v2157 = vpack.c.b16 %v2061, %v2059
        %v2158 = vpack.c.b16 %v2064, %v2062
        %v2159 = vpack.c.b16 %v2065, %v2063
        %v2160 = vpack.c.b16 %v2068, %v2066
        %v2161 = vpack.c.b16 %v2069, %v2067
        %v2162 = vpack.c.b16 %v2072, %v2070
        %v2163 = vpack.c.b16 %v2073, %v2071
        %v2164 = vpack.c.b16 %v2076, %v2074
        %v2165 = vpack.c.b16 %v2077, %v2075
        %v2166 = vpack.c.b16 %v2080, %v2078
        %v2167 = vpack.c.b16 %v2081, %v2079
        %v2168 = vpack.c.b16 %v2084, %v2082
        %v2169 = vpack.c.b16 %v2085, %v2083
        %v2170 = vpack.c.b16 %v2088, %v2086
        %v2171 = vpack.c.b16 %v2089, %v2087
        %v2172 = vpack.c.b16 %v2092, %v2090
        %v2173 = vpack.c.b16 %v2093, %v2091
        %v2174 = vpack.c.b16 %v2096, %v2094
        %v2175 = vpack.c.b16 %v2097, %v2095
        %v2176 = vpack.c.b16 %v2100, %v2098
        %v2177 = vpack.c.b16 %v2101, %v2099
        %v2178 = vpack.c.b16 %v2104, %v2102
        %v2179 = vpack.c.b16 %v2105, %v2103
        %v2180 = vpack.c.b16 %v2108, %v2106
        %v2181 = vpack.c.b16 %v2109, %v2107
        %v2182 = vpack.c.b16 %v2112, %v2110
        %v2183 = vpack.c.b16 %v2113, %v2111
        %v2184 = vpack.c.b16 %v2116, %v2114
        %v2185 = vpack.c.b16 %v2117, %v2115
        %v2186 = vpack.c.b16 %v2120, %v2118
        %v2187 = vpack.c.b16 %v2121, %v2119
        %v2188 = vpack.c.b16 %v2124, %v2122
        %v2189 = vpack.c.b16 %v2125, %v2123
        %2254 = vmatprep.subr.bf16.mxu0 %v2141
        %2255 = vmatpush1.bf16.msra.mxu0 %v2140
        %2256 = vmatprep.subr.bf16.mxu0 %v2139
        %2257 = vmatpush1.bf16.msra.mxu0 %v2138
        %2258 = vmatprep.subr.bf16.mxu0 %v2137
        %2259 = vmatpush1.bf16.msra.mxu0 %v2136
        %2260 = vmatprep.subr.bf16.mxu0 %v2135
        %2261 = vmatpush1.bf16.msra.mxu0 %v2134
        %2262 = vmatprep.subr.bf16.mxu0 %v2133
        %2263 = vmatpush1.bf16.msra.mxu0 %v2132
        %2264 = vmatprep.subr.bf16.mxu0 %v2131
        %2265 = vmatpush1.bf16.msra.mxu0 %v2130
        %2266 = vmatprep.subr.bf16.mxu0 %v2129
        %2267 = vmatpush1.bf16.msra.mxu0 %v2128
        %2268 = vmatprep.subr.bf16.mxu0 %v2127
        %2269 = vmatpush1.bf16.msra.mxu0 %v2126
        %2270 = vmatprep.subr.bf16.mxu0 %v2157
        %2271 = vmatpush2.bf16.msra.mxu0 %v2156
        %2272 = vmatprep.subr.bf16.mxu0 %v2155
        %2273 = vmatpush2.bf16.msra.mxu0 %v2154
        %2274 = vmatprep.subr.bf16.mxu0 %v2153
        %2275 = vmatpush2.bf16.msra.mxu0 %v2152
        %2276 = vmatprep.subr.bf16.mxu0 %v2151
        %2277 = vmatpush2.bf16.msra.mxu0 %v2150
        %2278 = vmatprep.subr.bf16.mxu0 %v2149
        %2279 = vmatpush2.bf16.msra.mxu0 %v2148
        %2280 = vmatprep.subr.bf16.mxu0 %v2147
        %2281 = vmatpush2.bf16.msra.mxu0 %v2146
        %2282 = vmatprep.subr.bf16.mxu0 %v2145
        %2283 = vmatpush2.bf16.msra.mxu0 %v2144
        %2284 = vmatprep.subr.bf16.mxu0 %v2143
        %2285 = vmatpush2.bf16.msra.mxu0 %v2142
        %2286 = vmatprep.mubr.bf16.mxu0 %v1827
        %2287 = vmatmul.mubr.bf16.gmra.mxu0 %v1826
        %v2288 = vpop.f32.mrf.mxu0
        %v2289 = vadd.f32 %v1927, %v2288
        %v2290 = vpop.f32.mrf.mxu0
        %v2291 = vadd.f32 %v1931, %v2290
        %v2292 = vpop.f32.mrf.mxu0
        %v2293 = vadd.f32 %v1927, %v2292
        %v2294 = vpop.f32.mrf.mxu0
        %v2295 = vadd.f32 %v1931, %v2294
        %2296 = vmatprep.mubr.bf16.mxu0 %v1831
        %2297 = vmatmul.mubr.bf16.gmra.mxu0 %v1830
        %v2298 = vpop.f32.mrf.mxu0
        %v2299 = vadd.f32 %v1927, %v2298
        %v2300 = vpop.f32.mrf.mxu0
        %v2301 = vadd.f32 %v1931, %v2300
        %v2302 = vpop.f32.mrf.mxu0
        %v2303 = vadd.f32 %v1927, %v2302
        %v2304 = vpop.f32.mrf.mxu0
        %v2305 = vadd.f32 %v1931, %v2304
        %2306 = vmatprep.mubr.bf16.mxu0 %v1835
        %2307 = vmatmul.mubr.bf16.gmra.mxu0 %v1834
        %v2308 = vpop.f32.mrf.mxu0
        %v2309 = vadd.f32 %v1927, %v2308
        %v2310 = vpop.f32.mrf.mxu0
        %v2311 = vadd.f32 %v1931, %v2310
        %v2312 = vpop.f32.mrf.mxu0
        %v2313 = vadd.f32 %v1927, %v2312
        %v2314 = vpop.f32.mrf.mxu0
        %v2315 = vadd.f32 %v1931, %v2314
        %2316 = vmatprep.mubr.bf16.mxu0 %v1839
        %2317 = vmatmul.mubr.bf16.gmra.mxu0 %v1838
        %v2318 = vpop.f32.mrf.mxu0
        %v2319 = vadd.f32 %v1927, %v2318
        %v2320 = vpop.f32.mrf.mxu0
        %v2321 = vadd.f32 %v1931, %v2320
        %v2322 = vpop.f32.mrf.mxu0
        %v2323 = vadd.f32 %v1927, %v2322
        %v2324 = vpop.f32.mrf.mxu0
        %v2325 = vadd.f32 %v1931, %v2324
        %2326 = vmatprep.mubr.bf16.mxu0 %v1843
        %2327 = vmatmul.mubr.bf16.gmra.mxu0 %v1842
        %v2328 = vpop.f32.mrf.mxu0
        %v2329 = vadd.f32 %v1927, %v2328
        %v2330 = vpop.f32.mrf.mxu0
        %v2331 = vadd.f32 %v1931, %v2330
        %v2332 = vpop.f32.mrf.mxu0
        %v2333 = vadd.f32 %v1927, %v2332
        %v2334 = vpop.f32.mrf.mxu0
        %v2335 = vadd.f32 %v1931, %v2334
        %2336 = vmatprep.mubr.bf16.mxu0 %v1847
        %2337 = vmatmul.mubr.bf16.gmra.mxu0 %v1846
        %v2338 = vpop.f32.mrf.mxu0
        %v2339 = vadd.f32 %v1927, %v2338
        %v2340 = vpop.f32.mrf.mxu0
        %v2341 = vadd.f32 %v1931, %v2340
        %v2342 = vpop.f32.mrf.mxu0
        %v2343 = vadd.f32 %v1927, %v2342
        %v2344 = vpop.f32.mrf.mxu0
        %v2345 = vadd.f32 %v1931, %v2344
        %2346 = vmatprep.mubr.bf16.mxu0 %v1851
        %2347 = vmatmul.mubr.bf16.gmra.mxu0 %v1850
        %v2348 = vpop.f32.mrf.mxu0
        %v2349 = vadd.f32 %v1927, %v2348
        %v2350 = vpop.f32.mrf.mxu0
        %v2351 = vadd.f32 %v1931, %v2350
        %v2352 = vpop.f32.mrf.mxu0
        %v2353 = vadd.f32 %v1927, %v2352
        %v2354 = vpop.f32.mrf.mxu0
        %v2355 = vadd.f32 %v1931, %v2354
        %2356 = vmatprep.mubr.bf16.mxu0 %v1855
        %2357 = vmatmul.mubr.bf16.gmra.mxu0 %v1854
        %v2358 = vpop.f32.mrf.mxu0
        %v2359 = vadd.f32 %v1927, %v2358
        %v2360 = vpop.f32.mrf.mxu0
        %v2361 = vadd.f32 %v1931, %v2360
        %v2362 = vpop.f32.mrf.mxu0
        %v2363 = vadd.f32 %v1927, %v2362
        %v2364 = vpop.f32.mrf.mxu0
        %v2365 = vadd.f32 %v1931, %v2364
        %2366 = vdwg.mxu0
        %2367 = vmatprep.subr.bf16.mxu0 %v2173
        %2368 = vmatpush1.bf16.msra.mxu0 %v2172
        %2369 = vmatprep.subr.bf16.mxu0 %v2171
        %2370 = vmatpush1.bf16.msra.mxu0 %v2170
        %2371 = vmatprep.subr.bf16.mxu0 %v2169
        %2372 = vmatpush1.bf16.msra.mxu0 %v2168
        %2373 = vmatprep.subr.bf16.mxu0 %v2167
        %2374 = vmatpush1.bf16.msra.mxu0 %v2166
        %2375 = vmatprep.subr.bf16.mxu0 %v2165
        %2376 = vmatpush1.bf16.msra.mxu0 %v2164
        %2377 = vmatprep.subr.bf16.mxu0 %v2163
        %2378 = vmatpush1.bf16.msra.mxu0 %v2162
        %2379 = vmatprep.subr.bf16.mxu0 %v2161
        %2380 = vmatpush1.bf16.msra.mxu0 %v2160
        %2381 = vmatprep.subr.bf16.mxu0 %v2159
        %2382 = vmatpush1.bf16.msra.mxu0 %v2158
        %2383 = vmatprep.subr.bf16.mxu0 %v2189
        %2384 = vmatpush2.bf16.msra.mxu0 %v2188
        %2385 = vmatprep.subr.bf16.mxu0 %v2187
        %2386 = vmatpush2.bf16.msra.mxu0 %v2186
        %2387 = vmatprep.subr.bf16.mxu0 %v2185
        %2388 = vmatpush2.bf16.msra.mxu0 %v2184
        %2389 = vmatprep.subr.bf16.mxu0 %v2183
        %2390 = vmatpush2.bf16.msra.mxu0 %v2182
        %2391 = vmatprep.subr.bf16.mxu0 %v2181
        %2392 = vmatpush2.bf16.msra.mxu0 %v2180
        %2393 = vmatprep.subr.bf16.mxu0 %v2179
        %2394 = vmatpush2.bf16.msra.mxu0 %v2178
        %2395 = vmatprep.subr.bf16.mxu0 %v2177
        %2396 = vmatpush2.bf16.msra.mxu0 %v2176
        %2397 = vmatprep.subr.bf16.mxu0 %v2175
        %2398 = vmatpush2.bf16.msra.mxu0 %v2174
        %2399 = vmatprep.mubr.bf16.mxu0 %v1829
        %2400 = vmatmul.mubr.bf16.gmra.mxu0 %v1828
        %v2401 = vpop.f32.mrf.mxu0
        %v2402 = vadd.f32 %v2289, %v2401
        %v2403 = vpop.f32.mrf.mxu0
        %v2404 = vadd.f32 %v2291, %v2403
        %v2405 = vpop.f32.mrf.mxu0
        %v2406 = vadd.f32 %v2293, %v2405
        %v2407 = vpop.f32.mrf.mxu0
        %v2408 = vadd.f32 %v2295, %v2407
        %2409 = vmatprep.mubr.bf16.mxu0 %v1833
        %2410 = vmatmul.mubr.bf16.gmra.mxu0 %v1832
        %v2411 = vpop.f32.mrf.mxu0
        %v2412 = vadd.f32 %v2299, %v2411
        %v2413 = vpop.f32.mrf.mxu0
        %v2414 = vadd.f32 %v2301, %v2413
        %v2415 = vpop.f32.mrf.mxu0
        %v2416 = vadd.f32 %v2303, %v2415
        %v2417 = vpop.f32.mrf.mxu0
        %v2418 = vadd.f32 %v2305, %v2417
        %2419 = vmatprep.mubr.bf16.mxu0 %v1837
        %2420 = vmatmul.mubr.bf16.gmra.mxu0 %v1836
        %v2421 = vpop.f32.mrf.mxu0
        %v2422 = vadd.f32 %v2309, %v2421
        %v2423 = vpop.f32.mrf.mxu0
        %v2424 = vadd.f32 %v2311, %v2423
        %v2425 = vpop.f32.mrf.mxu0
        %v2426 = vadd.f32 %v2313, %v2425
        %v2427 = vpop.f32.mrf.mxu0
        %v2428 = vadd.f32 %v2315, %v2427
        %2429 = vmatprep.mubr.bf16.mxu0 %v1841
        %2430 = vmatmul.mubr.bf16.gmra.mxu0 %v1840
        %v2431 = vpop.f32.mrf.mxu0
        %v2432 = vadd.f32 %v2319, %v2431
        %v2433 = vpop.f32.mrf.mxu0
        %v2434 = vadd.f32 %v2321, %v2433
        %v2435 = vpop.f32.mrf.mxu0
        %v2436 = vadd.f32 %v2323, %v2435
        %v2437 = vpop.f32.mrf.mxu0
        %v2438 = vadd.f32 %v2325, %v2437
        %2439 = vmatprep.mubr.bf16.mxu0 %v1845
        %2440 = vmatmul.mubr.bf16.gmra.mxu0 %v1844
        %v2441 = vpop.f32.mrf.mxu0
        %v2442 = vadd.f32 %v2329, %v2441
        %v2443 = vpop.f32.mrf.mxu0
        %v2444 = vadd.f32 %v2331, %v2443
        %v2445 = vpop.f32.mrf.mxu0
        %v2446 = vadd.f32 %v2333, %v2445
        %v2447 = vpop.f32.mrf.mxu0
        %v2448 = vadd.f32 %v2335, %v2447
        %2449 = vmatprep.mubr.bf16.mxu0 %v1849
        %2450 = vmatmul.mubr.bf16.gmra.mxu0 %v1848
        %v2451 = vpop.f32.mrf.mxu0
        %v2452 = vadd.f32 %v2339, %v2451
        %v2453 = vpop.f32.mrf.mxu0
        %v2454 = vadd.f32 %v2341, %v2453
        %v2455 = vpop.f32.mrf.mxu0
        %v2456 = vadd.f32 %v2343, %v2455
        %v2457 = vpop.f32.mrf.mxu0
        %v2458 = vadd.f32 %v2345, %v2457
        %2459 = vmatprep.mubr.bf16.mxu0 %v1853
        %2460 = vmatmul.mubr.bf16.gmra.mxu0 %v1852
        %v2461 = vpop.f32.mrf.mxu0
        %v2462 = vadd.f32 %v2349, %v2461
        %v2463 = vpop.f32.mrf.mxu0
        %v2464 = vadd.f32 %v2351, %v2463
        %v2465 = vpop.f32.mrf.mxu0
        %v2466 = vadd.f32 %v2353, %v2465
        %v2467 = vpop.f32.mrf.mxu0
        %v2468 = vadd.f32 %v2355, %v2467
        %2469 = vmatprep.mubr.bf16.mxu0 %v1857
        %2470 = vmatmul.mubr.bf16.gmra.mxu0 %v1856
        %v2471 = vpop.f32.mrf.mxu0
        %v2472 = vadd.f32 %v2359, %v2471
        %v2473 = vpop.f32.mrf.mxu0
        %v2474 = vadd.f32 %v2361, %v2473
        %v2475 = vpop.f32.mrf.mxu0
        %v2476 = vadd.f32 %v2363, %v2475
        %v2477 = vpop.f32.mrf.mxu0
        %v2478 = vadd.f32 %v2365, %v2477
        %2479 = vdwg.mxu0
        %v2480 = vld [vmem:[%s9] sm:$0x3]
        %v2481 = vld [vmem:[%s10] sm:$0x3]
        %v2482 = vadd.f32 %v2402, %v2404
        %2483 = vadd.xlane.f32.xlu0 %v2482
        %v2484 = vpop.xlane.xlu0 %2483
        %v2485 = vadd.f32 %v2406, %v2408
        %2486 = vadd.xlane.f32.xlu0 %v2485
        %v2487 = vpop.xlane.xlu0 %2486
        %v2488 = vadd.f32 %v2412, %v2414
        %2489 = vadd.xlane.f32.xlu0 %v2488
        %v2490 = vpop.xlane.xlu0 %2489
        %v2491 = vadd.f32 %v2416, %v2418
        %2492 = vadd.xlane.f32.xlu0 %v2491
        %v2493 = vpop.xlane.xlu0 %2492
        %v2494 = vadd.f32 %v2422, %v2424
        %2495 = vadd.xlane.f32.xlu0 %v2494
        %v2496 = vpop.xlane.xlu0 %2495
        %v2497 = vadd.f32 %v2426, %v2428
        %2498 = vadd.xlane.f32.xlu0 %v2497
        %v2499 = vpop.xlane.xlu0 %2498
        %v2500 = vadd.f32 %v2432, %v2434
        %2501 = vadd.xlane.f32.xlu0 %v2500
        %v2502 = vpop.xlane.xlu0 %2501
        %v2503 = vadd.f32 %v2436, %v2438
        %2504 = vadd.xlane.f32.xlu0 %v2503
        %v2505 = vpop.xlane.xlu0 %2504
        %v2506 = vadd.f32 %v2442, %v2444
        %2507 = vadd.xlane.f32.xlu0 %v2506
        %v2508 = vpop.xlane.xlu0 %2507
        %v2509 = vadd.f32 %v2446, %v2448
        %2510 = vadd.xlane.f32.xlu0 %v2509
        %v2511 = vpop.xlane.xlu0 %2510
        %v2512 = vadd.f32 %v2452, %v2454
        %2513 = vadd.xlane.f32.xlu0 %v2512
        %v2514 = vpop.xlane.xlu0 %2513
        %v2515 = vadd.f32 %v2456, %v2458
        %2516 = vadd.xlane.f32.xlu0 %v2515
        %v2517 = vpop.xlane.xlu0 %2516
        %v2518 = vadd.f32 %v2462, %v2464
        %2519 = vadd.xlane.f32.xlu0 %v2518
        %v2520 = vpop.xlane.xlu0 %2519
        %v2521 = vadd.f32 %v2466, %v2468
        %2522 = vadd.xlane.f32.xlu0 %v2521
        %v2523 = vpop.xlane.xlu0 %2522
        %v2524 = vadd.f32 %v2472, %v2474
        %2525 = vadd.xlane.f32.xlu0 %v2524
        %v2526 = vpop.xlane.xlu0 %2525
        %v2527 = vadd.f32 %v2476, %v2478
        %2528 = vadd.xlane.f32.xlu0 %v2527
        %v2529 = vpop.xlane.xlu0 %2528
        %v2530 = vmul.f32 %v2402, %v2402
        %v2531 = vmul.f32 %v2404, %v2404
        %v2532 = vmul.f32 %v2406, %v2406
        %v2533 = vmul.f32 %v2408, %v2408
        %v2534 = vmul.f32 %v2412, %v2412
        %v2535 = vmul.f32 %v2414, %v2414
        %v2536 = vmul.f32 %v2416, %v2416
        %v2537 = vmul.f32 %v2418, %v2418
        %v2538 = vmul.f32 %v2422, %v2422
        %v2539 = vmul.f32 %v2424, %v2424
        %v2540 = vmul.f32 %v2426, %v2426
        %v2541 = vmul.f32 %v2428, %v2428
        %v2542 = vmul.f32 %v2432, %v2432
        %v2543 = vmul.f32 %v2434, %v2434
        %v2544 = vmul.f32 %v2436, %v2436
        %v2545 = vmul.f32 %v2438, %v2438
        %v2546 = vmul.f32 %v2442, %v2442
        %v2547 = vmul.f32 %v2444, %v2444
        %v2548 = vmul.f32 %v2446, %v2446
        %v2549 = vmul.f32 %v2448, %v2448
        %v2550 = vmul.f32 %v2452, %v2452
        %v2551 = vmul.f32 %v2454, %v2454
        %v2552 = vmul.f32 %v2456, %v2456
        %v2553 = vmul.f32 %v2458, %v2458
        %v2554 = vmul.f32 %v2462, %v2462
        %v2555 = vmul.f32 %v2464, %v2464
        %v2556 = vmul.f32 %v2466, %v2466
        %v2557 = vmul.f32 %v2468, %v2468
        %v2558 = vmul.f32 %v2472, %v2472
        %v2559 = vmul.f32 %v2474, %v2474
        %v2560 = vmul.f32 %v2476, %v2476
        %v2561 = vmul.f32 %v2478, %v2478
        %v2562 = vadd.f32 %v2530, %v2531
        %2563 = vadd.xlane.f32.xlu0 %v2562
        %v2564 = vpop.xlane.xlu0 %2563
        %v2565 = vadd.f32 %v2532, %v2533
        %2566 = vadd.xlane.f32.xlu0 %v2565
        %v2567 = vpop.xlane.xlu0 %2566
        %v2568 = vadd.f32 %v2534, %v2535
        %2569 = vadd.xlane.f32.xlu0 %v2568
        %v2570 = vpop.xlane.xlu0 %2569
        %v2571 = vadd.f32 %v2536, %v2537
        %2572 = vadd.xlane.f32.xlu0 %v2571
        %v2573 = vpop.xlane.xlu0 %2572
        %v2574 = vadd.f32 %v2538, %v2539
        %2575 = vadd.xlane.f32.xlu0 %v2574
        %v2576 = vpop.xlane.xlu0 %2575
        %v2577 = vadd.f32 %v2540, %v2541
        %2578 = vadd.xlane.f32.xlu0 %v2577
        %v2579 = vpop.xlane.xlu0 %2578
        %v2580 = vadd.f32 %v2542, %v2543
        %2581 = vadd.xlane.f32.xlu0 %v2580
        %v2582 = vpop.xlane.xlu0 %2581
        %v2583 = vadd.f32 %v2544, %v2545
        %2584 = vadd.xlane.f32.xlu0 %v2583
        %v2585 = vpop.xlane.xlu0 %2584
        %v2586 = vadd.f32 %v2546, %v2547
        %2587 = vadd.xlane.f32.xlu0 %v2586
        %v2588 = vpop.xlane.xlu0 %2587
        %v2589 = vadd.f32 %v2548, %v2549
        %2590 = vadd.xlane.f32.xlu0 %v2589
        %v2591 = vpop.xlane.xlu0 %2590
        %v2592 = vadd.f32 %v2550, %v2551
        %2593 = vadd.xlane.f32.xlu0 %v2592
        %v2594 = vpop.xlane.xlu0 %2593
        %v2595 = vadd.f32 %v2552, %v2553
        %2596 = vadd.xlane.f32.xlu0 %v2595
        %v2597 = vpop.xlane.xlu0 %2596
        %v2598 = vadd.f32 %v2554, %v2555
        %2599 = vadd.xlane.f32.xlu0 %v2598
        %v2600 = vpop.xlane.xlu0 %2599
        %v2601 = vadd.f32 %v2556, %v2557
        %2602 = vadd.xlane.f32.xlu0 %v2601
        %v2603 = vpop.xlane.xlu0 %2602
        %v2604 = vadd.f32 %v2558, %v2559
        %2605 = vadd.xlane.f32.xlu0 %v2604
        %v2606 = vpop.xlane.xlu0 %2605
        %v2607 = vadd.f32 %v2560, %v2561
        %2608 = vadd.xlane.f32.xlu0 %v2607
        %v2609 = vpop.xlane.xlu0 %2608
        %v2610 = vmul.f32 %v2484, 0.00390625
        %v2611 = vmul.f32 %v2487, 0.00390625
        %v2612 = vmul.f32 %v2490, 0.00390625
        %v2613 = vmul.f32 %v2493, 0.00390625
        %v2614 = vmul.f32 %v2496, 0.00390625
        %v2615 = vmul.f32 %v2499, 0.00390625
        %v2616 = vmul.f32 %v2502, 0.00390625
        %v2617 = vmul.f32 %v2505, 0.00390625
        %v2618 = vmul.f32 %v2508, 0.00390625
        %v2619 = vmul.f32 %v2511, 0.00390625
        %v2620 = vmul.f32 %v2514, 0.00390625
        %v2621 = vmul.f32 %v2517, 0.00390625
        %v2622 = vmul.f32 %v2520, 0.00390625
        %v2623 = vmul.f32 %v2523, 0.00390625
        %v2624 = vmul.f32 %v2526, 0.00390625
        %v2625 = vmul.f32 %v2529, 0.00390625
        %v2626 = vmul.f32 %v2564, 0.00390625
        %v2627 = vmul.f32 %v2567, 0.00390625
        %v2628 = vmul.f32 %v2570, 0.00390625
        %v2629 = vmul.f32 %v2573, 0.00390625
        %v2630 = vmul.f32 %v2576, 0.00390625
        %v2631 = vmul.f32 %v2579, 0.00390625
        %v2632 = vmul.f32 %v2582, 0.00390625
        %v2633 = vmul.f32 %v2585, 0.00390625
        %v2634 = vmul.f32 %v2588, 0.00390625
        %v2635 = vmul.f32 %v2591, 0.00390625
        %v2636 = vmul.f32 %v2594, 0.00390625
        %v2637 = vmul.f32 %v2597, 0.00390625
        %v2638 = vmul.f32 %v2600, 0.00390625
        %v2639 = vmul.f32 %v2603, 0.00390625
        %v2640 = vmul.f32 %v2606, 0.00390625
        %v2641 = vmul.f32 %v2609, 0.00390625
        %v2642 = vmul.f32 %v2610, %v2610
        %v2643 = vmul.f32 %v2611, %v2611
        %v2644 = vmul.f32 %v2612, %v2612
        %v2645 = vmul.f32 %v2613, %v2613
        %v2646 = vmul.f32 %v2614, %v2614
        %v2647 = vmul.f32 %v2615, %v2615
        %v2648 = vmul.f32 %v2616, %v2616
        %v2649 = vmul.f32 %v2617, %v2617
        %v2650 = vmul.f32 %v2618, %v2618
        %v2651 = vmul.f32 %v2619, %v2619
        %v2652 = vmul.f32 %v2620, %v2620
        %v2653 = vmul.f32 %v2621, %v2621
        %v2654 = vmul.f32 %v2622, %v2622
        %v2655 = vmul.f32 %v2623, %v2623
        %v2656 = vmul.f32 %v2624, %v2624
        %v2657 = vmul.f32 %v2625, %v2625
        %v2658 = vsub.f32 %v2626, %v2642
        %v2659 = vsub.f32 %v2627, %v2643
        %v2660 = vsub.f32 %v2628, %v2644
        %v2661 = vsub.f32 %v2629, %v2645
        %v2662 = vsub.f32 %v2630, %v2646
        %v2663 = vsub.f32 %v2631, %v2647
        %v2664 = vsub.f32 %v2632, %v2648
        %v2665 = vsub.f32 %v2633, %v2649
        %v2666 = vsub.f32 %v2634, %v2650
        %v2667 = vsub.f32 %v2635, %v2651
        %v2668 = vsub.f32 %v2636, %v2652
        %v2669 = vsub.f32 %v2637, %v2653
        %v2670 = vsub.f32 %v2638, %v2654
        %v2671 = vsub.f32 %v2639, %v2655
        %v2672 = vsub.f32 %v2640, %v2656
        %v2673 = vsub.f32 %v2641, %v2657
        %v2674 = vmax.f32 %v2658, 0.0
        %v2675 = vmax.f32 %v2659, 0.0
        %v2676 = vmax.f32 %v2660, 0.0
        %v2677 = vmax.f32 %v2661, 0.0
        %v2678 = vmax.f32 %v2662, 0.0
        %v2679 = vmax.f32 %v2663, 0.0
        %v2680 = vmax.f32 %v2664, 0.0
        %v2681 = vmax.f32 %v2665, 0.0
        %v2682 = vmax.f32 %v2666, 0.0
        %v2683 = vmax.f32 %v2667, 0.0
        %v2684 = vmax.f32 %v2668, 0.0
        %v2685 = vmax.f32 %v2669, 0.0
        %v2686 = vmax.f32 %v2670, 0.0
        %v2687 = vmax.f32 %v2671, 0.0
        %v2688 = vmax.f32 %v2672, 0.0
        %v2689 = vmax.f32 %v2673, 0.0
        %v2690 = vsub.f32 %v2402, %v2610
        %v2691 = vsub.f32 %v2404, %v2610
        %v2692 = vsub.f32 %v2406, %v2611
        %v2693 = vsub.f32 %v2408, %v2611
        %v2694 = vsub.f32 %v2412, %v2612
        %v2695 = vsub.f32 %v2414, %v2612
        %v2696 = vsub.f32 %v2416, %v2613
        %v2697 = vsub.f32 %v2418, %v2613
        %v2698 = vsub.f32 %v2422, %v2614
        %v2699 = vsub.f32 %v2424, %v2614
        %v2700 = vsub.f32 %v2426, %v2615
        %v2701 = vsub.f32 %v2428, %v2615
        %v2702 = vsub.f32 %v2432, %v2616
        %v2703 = vsub.f32 %v2434, %v2616
        %v2704 = vsub.f32 %v2436, %v2617
        %v2705 = vsub.f32 %v2438, %v2617
        %v2706 = vsub.f32 %v2442, %v2618
        %v2707 = vsub.f32 %v2444, %v2618
        %v2708 = vsub.f32 %v2446, %v2619
        %v2709 = vsub.f32 %v2448, %v2619
        %v2710 = vsub.f32 %v2452, %v2620
        %v2711 = vsub.f32 %v2454, %v2620
        %v2712 = vsub.f32 %v2456, %v2621
        %v2713 = vsub.f32 %v2458, %v2621
        %v2714 = vsub.f32 %v2462, %v2622
        %v2715 = vsub.f32 %v2464, %v2622
        %v2716 = vsub.f32 %v2466, %v2623
        %v2717 = vsub.f32 %v2468, %v2623
        %v2718 = vsub.f32 %v2472, %v2624
        %v2719 = vsub.f32 %v2474, %v2624
        %v2720 = vsub.f32 %v2476, %v2625
        %v2721 = vsub.f32 %v2478, %v2625
        %v2722 = vadd.f32 %v2674, 1e-05
        %v2723 = vadd.f32 %v2675, 1e-05
        %v2724 = vadd.f32 %v2676, 1e-05
        %v2725 = vadd.f32 %v2677, 1e-05
        %v2726 = vadd.f32 %v2678, 1e-05
        %v2727 = vadd.f32 %v2679, 1e-05
        %v2728 = vadd.f32 %v2680, 1e-05
        %v2729 = vadd.f32 %v2681, 1e-05
        %v2730 = vadd.f32 %v2682, 1e-05
        %v2731 = vadd.f32 %v2683, 1e-05
        %v2732 = vadd.f32 %v2684, 1e-05
        %v2733 = vadd.f32 %v2685, 1e-05
        %v2734 = vadd.f32 %v2686, 1e-05
        %v2735 = vadd.f32 %v2687, 1e-05
        %v2736 = vadd.f32 %v2688, 1e-05
        %v2737 = vadd.f32 %v2689, 1e-05
        %v2738 = vrsqrt.pop %v2722
        %v2739 = vrsqrt.pop %v2723
        %v2740 = vrsqrt.pop %v2724
        %v2741 = vrsqrt.pop %v2725
        %v2742 = vrsqrt.pop %v2726
        %v2743 = vrsqrt.pop %v2727
        %v2744 = vrsqrt.pop %v2728
        %v2745 = vrsqrt.pop %v2729
        %v2746 = vrsqrt.pop %v2730
        %v2747 = vrsqrt.pop %v2731
        %v2748 = vrsqrt.pop %v2732
        %v2749 = vrsqrt.pop %v2733
        %v2750 = vrsqrt.pop %v2734
        %v2751 = vrsqrt.pop %v2735
        %v2752 = vrsqrt.pop %v2736
        %v2753 = vrsqrt.pop %v2737
        %v2754 = vmul.f32 %v2690, %v2738
        %v2755 = vmul.f32 %v2691, %v2738
        %v2756 = vmul.f32 %v2692, %v2739
        %v2757 = vmul.f32 %v2693, %v2739
        %v2758 = vmul.f32 %v2694, %v2740
        %v2759 = vmul.f32 %v2695, %v2740
        %v2760 = vmul.f32 %v2696, %v2741
        %v2761 = vmul.f32 %v2697, %v2741
        %v2762 = vmul.f32 %v2698, %v2742
        %v2763 = vmul.f32 %v2699, %v2742
        %v2764 = vmul.f32 %v2700, %v2743
        %v2765 = vmul.f32 %v2701, %v2743
        %v2766 = vmul.f32 %v2702, %v2744
        %v2767 = vmul.f32 %v2703, %v2744
        %v2768 = vmul.f32 %v2704, %v2745
        %v2769 = vmul.f32 %v2705, %v2745
        %v2770 = vmul.f32 %v2706, %v2746
        %v2771 = vmul.f32 %v2707, %v2746
        %v2772 = vmul.f32 %v2708, %v2747
        %v2773 = vmul.f32 %v2709, %v2747
        %v2774 = vmul.f32 %v2710, %v2748
        %v2775 = vmul.f32 %v2711, %v2748
        %v2776 = vmul.f32 %v2712, %v2749
        %v2777 = vmul.f32 %v2713, %v2749
        %v2778 = vmul.f32 %v2714, %v2750
        %v2779 = vmul.f32 %v2715, %v2750
        %v2780 = vmul.f32 %v2716, %v2751
        %v2781 = vmul.f32 %v2717, %v2751
        %v2782 = vmul.f32 %v2718, %v2752
        %v2783 = vmul.f32 %v2719, %v2752
        %v2784 = vmul.f32 %v2720, %v2753
        %v2785 = vmul.f32 %v2721, %v2753
        %v2787 = vlaneseq
        %v2788 = vshrl.u32 %v2787, 7
        %v2789 = vsub.s32 0, %v2788
        %v2790 = vrot.slane %v2480, %v2789
        %v2791 = vlaneseq
        %v2792 = vshrl.u32 %v2791, 7
        %v2793 = vsub.s32 1, %v2792
        %v2794 = vrot.slane %v2480, %v2793
        %v2797 = vmul.f32 %v2754, %v2790
        %v2798 = vmul.f32 %v2755, %v2794
        %v2799 = vmul.f32 %v2756, %v2790
        %v2800 = vmul.f32 %v2757, %v2794
        %v2801 = vmul.f32 %v2758, %v2790
        %v2802 = vmul.f32 %v2759, %v2794
        %v2803 = vmul.f32 %v2760, %v2790
        %v2804 = vmul.f32 %v2761, %v2794
        %v2805 = vmul.f32 %v2762, %v2790
        %v2806 = vmul.f32 %v2763, %v2794
        %v2807 = vmul.f32 %v2764, %v2790
        %v2808 = vmul.f32 %v2765, %v2794
        %v2809 = vmul.f32 %v2766, %v2790
        %v2810 = vmul.f32 %v2767, %v2794
        %v2811 = vmul.f32 %v2768, %v2790
        %v2812 = vmul.f32 %v2769, %v2794
        %v2813 = vmul.f32 %v2770, %v2790
        %v2814 = vmul.f32 %v2771, %v2794
        %v2815 = vmul.f32 %v2772, %v2790
        %v2816 = vmul.f32 %v2773, %v2794
        %v2817 = vmul.f32 %v2774, %v2790
        %v2818 = vmul.f32 %v2775, %v2794
        %v2819 = vmul.f32 %v2776, %v2790
        %v2820 = vmul.f32 %v2777, %v2794
        %v2821 = vmul.f32 %v2778, %v2790
        %v2822 = vmul.f32 %v2779, %v2794
        %v2823 = vmul.f32 %v2780, %v2790
        %v2824 = vmul.f32 %v2781, %v2794
        %v2825 = vmul.f32 %v2782, %v2790
        %v2826 = vmul.f32 %v2783, %v2794
        %v2827 = vmul.f32 %v2784, %v2790
        %v2828 = vmul.f32 %v2785, %v2794
        %v2830 = vlaneseq
        %v2831 = vshrl.u32 %v2830, 7
        %v2832 = vsub.s32 0, %v2831
        %v2833 = vrot.slane %v2481, %v2832
        %v2834 = vlaneseq
        %v2835 = vshrl.u32 %v2834, 7
        %v2836 = vsub.s32 1, %v2835
        %v2837 = vrot.slane %v2481, %v2836
        %v2840 = vadd.f32 %v2797, %v2833
        %v2841 = vadd.f32 %v2798, %v2837
        %v2842 = vadd.f32 %v2799, %v2833
        %v2843 = vadd.f32 %v2800, %v2837
        %v2844 = vadd.f32 %v2801, %v2833
        %v2845 = vadd.f32 %v2802, %v2837
        %v2846 = vadd.f32 %v2803, %v2833
        %v2847 = vadd.f32 %v2804, %v2837
        %v2848 = vadd.f32 %v2805, %v2833
        %v2849 = vadd.f32 %v2806, %v2837
        %v2850 = vadd.f32 %v2807, %v2833
        %v2851 = vadd.f32 %v2808, %v2837
        %v2852 = vadd.f32 %v2809, %v2833
        %v2853 = vadd.f32 %v2810, %v2837
        %v2854 = vadd.f32 %v2811, %v2833
        %v2855 = vadd.f32 %v2812, %v2837
        %v2856 = vadd.f32 %v2813, %v2833
        %v2857 = vadd.f32 %v2814, %v2837
        %v2858 = vadd.f32 %v2815, %v2833
        %v2859 = vadd.f32 %v2816, %v2837
        %v2860 = vadd.f32 %v2817, %v2833
        %v2861 = vadd.f32 %v2818, %v2837
        %v2862 = vadd.f32 %v2819, %v2833
        %v2863 = vadd.f32 %v2820, %v2837
        %v2864 = vadd.f32 %v2821, %v2833
        %v2865 = vadd.f32 %v2822, %v2837
        %v2866 = vadd.f32 %v2823, %v2833
        %v2867 = vadd.f32 %v2824, %v2837
        %v2868 = vadd.f32 %v2825, %v2833
        %v2869 = vadd.f32 %v2826, %v2837
        %v2870 = vadd.f32 %v2827, %v2833
        %v2871 = vadd.f32 %v2828, %v2837
        %2872 = vst [vmem:[%s473] sm:$0xff] %v2840
        %2873 = vst [vmem:[%s473 + $0x8] sm:$0xff] %v2841
        %2874 = vst [vmem:[%s473 + $0x10] sm:$0xff] %v2842
        %2875 = vst [vmem:[%s473 + $0x18] sm:$0xff] %v2843
        %2876 = vst [vmem:[%s473 + $0x20] sm:$0xff] %v2844
        %2877 = vst [vmem:[%s473 + $0x28] sm:$0xff] %v2845
        %2878 = vst [vmem:[%s473 + $0x30] sm:$0xff] %v2846
        %2879 = vst [vmem:[%s473 + $0x38] sm:$0xff] %v2847
        %2880 = vst [vmem:[%s473 + $0x40] sm:$0xff] %v2848
        %2881 = vst [vmem:[%s473 + $0x48] sm:$0xff] %v2849
        %2882 = vst [vmem:[%s473 + $0x50] sm:$0xff] %v2850
        %2883 = vst [vmem:[%s473 + $0x58] sm:$0xff] %v2851
        %2884 = vst [vmem:[%s473 + $0x60] sm:$0xff] %v2852
        %2885 = vst [vmem:[%s473 + $0x68] sm:$0xff] %v2853
        %2886 = vst [vmem:[%s473 + $0x70] sm:$0xff] %v2854
        %2887 = vst [vmem:[%s473 + $0x78] sm:$0xff] %v2855
        %2888 = vst [vmem:[%s473 + $0x80] sm:$0xff] %v2856
        %2889 = vst [vmem:[%s473 + $0x88] sm:$0xff] %v2857
        %2890 = vst [vmem:[%s473 + $0x90] sm:$0xff] %v2858
        %2891 = vst [vmem:[%s473 + $0x98] sm:$0xff] %v2859
        %2892 = vst [vmem:[%s473 + $0xa0] sm:$0xff] %v2860
        %2893 = vst [vmem:[%s473 + $0xa8] sm:$0xff] %v2861
        %2894 = vst [vmem:[%s473 + $0xb0] sm:$0xff] %v2862
        %2895 = vst [vmem:[%s473 + $0xb8] sm:$0xff] %v2863
        %2896 = vst [vmem:[%s473 + $0xc0] sm:$0xff] %v2864
        %2897 = vst [vmem:[%s473 + $0xc8] sm:$0xff] %v2865
        %2898 = vst [vmem:[%s473 + $0xd0] sm:$0xff] %v2866
        %2899 = vst [vmem:[%s473 + $0xd8] sm:$0xff] %v2867
        %2900 = vst [vmem:[%s473 + $0xe0] sm:$0xff] %v2868
        %2901 = vst [vmem:[%s473 + $0xe8] sm:$0xff] %v2869
        %2902 = vst [vmem:[%s473 + $0xf0] sm:$0xff] %v2870
        %2903 = vst [vmem:[%s473 + $0xf8] sm:$0xff] %v2871
        %s2904 = sand.u32 %s275, 1
        %s2905 = scalar_lea.sflag [#allocation4], %s2904
        %s2906 = sand.u32 %s275, 1
        %s2907 = smul.addr %s2906, 256
        %s2908 = scalar_lea.vmem [#allocation13], %s2907
        // Predicated region
        $region89: #{tpu_custom_call.1} parent=63 // pred_check
          %p2909 = pneg %p285
        $region90: #{tpu_custom_call.1} parent=63 // pred_check_branch
          %2911 = sbr.rel (%p2909) target = $region92
        $region91: #{tpu_custom_call.1} parent=63 // pred_region
          %s2912 = smul.u32 16, %s31
          %s2914 = ssub.s32 4096, 4096
          %2915 = vsyncadd %s2905, %s2914
          %s2916 = smul.addr %s2912, 2
          %s2917 = smul.addr %s2916, 128
          %s2918 = scalar_lea.hbm %s11, %s2917
          %s2919 = sshll.u32 %s2908, 4
          %s2920 = int_to_ptr.vmem [resolvable:$true] %s2919
          %2925 = dma.vmem_to_hbm [thread:$0]  %s2920, 4096, %s2918, %s2905, 256, 256, 16
        $region92: #{tpu_custom_call.1} parent=63 // pred_fallthru
          _
      $region64: #{tpu_custom_call.1} parent=5 // pred_fallthru
        _
      %p2926 = scmp.le.s32.totalorder 2, %s26
      // Predicated region
      $region93: #{tpu_custom_call.1} parent=5 // pred_check
        %p2927 = pneg %p2926
      $region94: #{tpu_custom_call.1} parent=5 // pred_check_branch
        %2929 = sbr.rel (%p2927) target = $region96
      $region95: #{tpu_custom_call.1} parent=5 // pred_region
        %s2930 = ssub.s32 %s26, 2
        // Predicated region
        $region97: #{tpu_custom_call.1} parent=95 // pred_check
          %p2931 = pneg %p291
        $region98: #{tpu_custom_call.1} parent=95 // pred_check_branch
          %2933 = sbr.rel (%p2931) target = $region100
        $region99: #{tpu_custom_call.1} parent=95 // pred_region
          %s2934 = sand.u32 %s276, 1
          %s2935 = scalar_lea.sflag [#allocation4], %s2934
          %s2936 = sand.u32 %s276, 1
          %s2937 = smul.addr %s2936, 256
          %s2938 = scalar_lea.vmem [#allocation13], %s2937
          %2939 = dma.done %s2935, 4096
        $region100: #{tpu_custom_call.1} parent=95 // pred_fallthru
          _
      $region96: #{tpu_custom_call.1} parent=5 // pred_fallthru
        _
    $region6: #{tpu_custom_call.1} parent=1 // loop_footer
      %s30 = sadd.s32 1, %s26
    $region7: #{tpu_custom_call.1} parent=1 // loop_footer_branch
      %25 = sbr.rel target = $region3
    $region8: #{tpu_custom_call.1} parent=1 // loop_exit
      _
    %2940 = vsyncpa [#allocation3], 1
    %s2941 = scalar_lea.sflag [#allocation3], 1
    %2942 = vsyncpa %s2941, 1
    %2943 = vsyncpa [#allocation6], 1
    %2944 = vsyncpa [#allocation9], 1
    %2945 = vsyncpa [#allocation12], 1
    %2946 = vsyncpa [#allocation4], 1
    %s2947 = scalar_lea.sflag [#allocation4], 1
    %2948 = vsyncpa %s2947, 1

</llo_original>
